<compile_context>
chip_gen: v7x
topology: tpu7x:2x2x1
jax: 0.10.0
libtpu: 0.0.40
codegen_flags: <defaults>
</compile_context>

<pallas_src>
import functools

import jax
import jax.numpy as jnp
from jax.experimental import pallas as pl
from jax.experimental.pallas import tpu as pltpu


_VMEM_LIMIT = 32 * 1024 * 1024   # safe on v5e/v6e (128 MiB) and v7x (64 MiB physical / 32 scoped)


def _round_up(x, m):
    return (x + m - 1) // m * m


# ------------------------------- Pallas kernels -------------------------------

def _matmul_bn_act_kernel(a_ref, w_ref, s_ref, b_ref, o_ref, *, relu):
    """One (tm, K) x (K, C) tile of an im2col convolution with fused eval-mode BN (+ ReLU).

    a/w are bf16 (MXU native); accumulation is forced to f32 via preferred_element_type;
    the scale/bias/ReLU epilogue stays in f32 and the result is cast only at the store.
    """
    acc = jnp.dot(a_ref[...], w_ref[...], preferred_element_type=jnp.float32)
    y = acc * s_ref[...] + b_ref[...]
    if relu:
        y = jnp.maximum(y, 0.0)
    o_ref[...] = y.astype(o_ref.dtype)


def _maxpool3x3_kernel(x_ref, o_ref):
    """Stride-1 3x3 max over a pre-padded image block (one batch element per grid step)."""
    x = x_ref[...]                           # (1, H+2, W+2, C)
    H, W = o_ref.shape[1], o_ref.shape[2]
    m = x[:, 0:H, 0:W, :]
    for ky in range(3):
        for kx in range(3):
            if ky == 0 and kx == 0:
                continue
            m = jnp.maximum(m, x[:, ky:ky + H, kx:kx + W, :])
    o_ref[...] = m.astype(o_ref.dtype)


# ---------------------------- pallas_call wrappers -----------------------------

def matmul_bn_act(a, w, scale, bias, *, relu=True, out_dtype=jnp.bfloat16, tm=256):
    """out[m, c] = act((a @ w)[m, c] * scale[c] + bias[c]), tiled over M with a parallel grid."""
    M, K = a.shape
    Kw, C = w.shape
    assert K == Kw
    tm = min(tm, _round_up(M, 8))            # never a tile larger than the (padded) problem
    Mp = _round_up(M, tm)
    if Mp != M:
        a = jnp.pad(a, ((0, Mp - M), (0, 0)))

    out = pl.pallas_call(
        functools.partial(_matmul_bn_act_kernel, relu=relu),
        grid=(Mp // tm,),
        in_specs=[
            pl.BlockSpec((tm, K), lambda i: (i, 0)),   # activation tile, streamed over M
            pl.BlockSpec((K, C), lambda i: (0, 0)),    # fused conv weight: VMEM-resident
            pl.BlockSpec((1, C), lambda i: (0, 0)),    # fused BN scale
            pl.BlockSpec((1, C), lambda i: (0, 0)),    # fused BN bias
        ],
        out_specs=pl.BlockSpec((tm, C), lambda i: (i, 0)),
        out_shape=jax.ShapeDtypeStruct((Mp, C), out_dtype),
        compiler_params=pltpu.CompilerParams(
            dimension_semantics=("parallel",),         # shard M tiles across TCs (v7x megacore)
            vmem_limit_bytes=_VMEM_LIMIT,
        ),
    )(
        a.astype(jnp.bfloat16),
        w.astype(jnp.bfloat16),
        scale.reshape(1, C).astype(jnp.float32),
        bias.reshape(1, C).astype(jnp.float32),
    )
    return out[:M] if Mp != M else out


def maxpool_3x3_s2_p1(x, out_dtype=jnp.float32):
    """PyTorch MaxPool2d(kernel_size=3, stride=2, padding=1) on NHWC input."""
    N, H, W, C = x.shape
    neg = jnp.finfo(x.dtype).min             # acts as -inf padding (input is post-ReLU anyway)
    xp = jnp.pad(x, ((0, 0), (1, 1), (1, 1), (0, 0)), constant_values=neg)
    pooled_s1 = pl.pallas_call(
        _maxpool3x3_kernel,
        grid=(N,),
        in_specs=[pl.BlockSpec((1, H + 2, W + 2, C), lambda n: (n, 0, 0, 0))],
        out_specs=pl.BlockSpec((1, H, W, C), lambda n: (n, 0, 0, 0)),
        out_shape=jax.ShapeDtypeStruct((N, H, W, C), out_dtype),
        compiler_params=pltpu.CompilerParams(
            dimension_semantics=("parallel",),
            vmem_limit_bytes=_VMEM_LIMIT,
        ),
    )(xp)
    # stride-2 subsample of the stride-1 pooled map == MaxPool2d(3, 2, 1)
    return pooled_s1[:, ::2, ::2, :]


# ------------------------------ JAX glue: im2col -------------------------------

def _im2col_3x3(x, stride):
    """NHWC -> (N, Ho, Wo, 9*C) patches for a 3x3 conv with padding=1, tap order (ky, kx, c)."""
    N, H, W, C = x.shape
    xp = jnp.pad(x, ((0, 0), (1, 1), (1, 1), (0, 0)))
    Ho = (H + 2 - 3) // stride + 1
    Wo = (W + 2 - 3) // stride + 1
    taps = []
    for ky in range(3):
        for kx in range(3):
            taps.append(xp[:, ky:ky + stride * (Ho - 1) + 1:stride,
                            kx:kx + stride * (Wo - 1) + 1:stride, :])
    return jnp.concatenate(taps, axis=-1), Ho, Wo


def conv3x3_bn_relu(x, wsb, stride):
    """Fused Conv2d(3x3, pad=1, bias=False) + eval-mode BN + ReLU.  x: NHWC bf16."""
    w, s, b = wsb
    N = x.shape[0]
    patches, Ho, Wo = _im2col_3x3(x, stride)
    y = matmul_bn_act(patches.reshape(N * Ho * Wo, -1), w, s, b, relu=True)
    return y.reshape(N, Ho, Wo, w.shape[1])


# --------------------------------- parameters ----------------------------------

def _fused_conv_bn(key, cin, cout, k=3):
    """Deterministic Conv2d(bias=False) weight + eval-mode BN folded into (Wmat, scale, bias)."""
    kw, kg, kb, km, kv = jax.random.split(key, 5)
    w = jax.random.normal(kw, (cout, cin, k, k), jnp.float32) * jnp.sqrt(2.0 / (cin * k * k))
    gamma = 1.0 + 0.1 * jax.random.normal(kg, (cout,), jnp.float32)
    beta = 0.1 * jax.random.normal(kb, (cout,), jnp.float32)
    mean = 0.1 * jax.random.normal(km, (cout,), jnp.float32)
    var = jnp.abs(jax.random.normal(kv, (cout,), jnp.float32)) + 0.5
    scale = gamma * jax.lax.rsqrt(var + 1e-5)
    bias = beta - mean * scale
    # (Cout,Cin,KH,KW) -> (KH,KW,Cin,Cout) -> (KH*KW*Cin, Cout): matches im2col (ky,kx,c) order.
    wmat = jnp.transpose(w, (2, 3, 1, 0)).reshape(k * k * cin, cout)
    return wmat.astype(jnp.bfloat16), scale, bias


def make_params(key, in_chans=3, stem_width=32):
    k1, k2, k3 = jax.random.split(key, 3)
    return {
        "stem1": _fused_conv_bn(k1, in_chans, stem_width),        # 3 -> 32, stride 2
        "stem2": _fused_conv_bn(k2, stem_width, stem_width),      # 32 -> 32, stride 1
        # conv1[6] is bias-free and immediately followed by bn1 + act1, so the whole thing
        # fuses into one conv+BN+ReLU matmul (one Pallas call instead of three ops).
        "stem3": _fused_conv_bn(k3, stem_width, 2 * stem_width),  # 32 -> 64, stride 1  (+ bn1/act1)
    }


# ---------------------------------- forward ------------------------------------

def resnet50vd_small_forward(x_nchw, params):
    """ResNet50vd_samll(cout=64, idx=0).forward: deep stem -> bn1 -> ReLU -> MaxPool2d(3,2,1).

    Takes / returns NCHW (PyTorch layout); internally NHWC with bf16 activations.
    """
    x = jnp.transpose(x_nchw, (0, 2, 3, 1)).astype(jnp.bfloat16)   # NCHW -> NHWC, bf16
    x = conv3x3_bn_relu(x, params["stem1"], stride=2)              # (N, H/2, W/2, 32)
    x = conv3x3_bn_relu(x, params["stem2"], stride=1)              # (N, H/2, W/2, 32)
    x = conv3x3_bn_relu(x, params["stem3"], stride=1)              # (N, H/2, W/2, 64)  conv1[6]+bn1+act1
    x = maxpool_3x3_s2_p1(x, out_dtype=jnp.float32)                # (N, H/4, W/4, 64)
    # TODO(synk): layer1..layer4 (Bottleneck stages) are only reachable for idx in 1..4 and are
    # never executed by the default ResNet50vd_samll(cout=64, idx=0) forward, so they are not built.
    return jnp.transpose(x, (0, 3, 1, 2))                          # NHWC -> NCHW


# -------------------------- pure-JAX reference (check) --------------------------

def _reference_forward(x_nchw, params):
    x = jnp.transpose(x_nchw, (0, 2, 3, 1)).astype(jnp.float32)
    for name, stride in (("stem1", 2), ("stem2", 1), ("stem3", 1)):
        wmat, scale, bias = params[name]
        cin, cout = wmat.shape[0] // 9, wmat.shape[1]
        w = wmat.astype(jnp.float32).reshape(3, 3, cin, cout)      # HWIO
        x = jax.lax.conv_general_dilated(
            x, w, window_strides=(stride, stride), padding=((1, 1), (1, 1)),
            dimension_numbers=("NHWC", "HWIO", "NHWC"))
        x = jnp.maximum(x * scale + bias, 0.0)
    x = jax.lax.reduce_window(
        x, -jnp.inf, jax.lax.max,
        window_dimensions=(1, 3, 3, 1), window_strides=(1, 2, 2, 1),
        padding=((0, 0), (1, 1), (1, 1), (0, 0)))
    return jnp.transpose(x, (0, 3, 1, 2))


# ------------------------------------ main --------------------------------------

if __name__ == "__main__":
    key = jax.random.PRNGKey(0)
    kx, kp = jax.random.split(key)

    x = jax.random.normal(kx, (2, 3, 32, 32), jnp.float32)   # NCHW, like the PyTorch module
    params = make_params(kp)

    fwd = jax.jit(resnet50vd_small_forward)
    out = jax.block_until_ready(fwd(x, params))

    assert out.shape == (2, 64, 8, 8), out.shape
    assert bool(jnp.all(jnp.isfinite(out)))

    # correctness vs. a pure-JAX/XLA reference (loose tol: bf16 activations vs f32 reference)
    ref = _reference_forward(x, params)
    rel_err = float(jnp.linalg.norm(out - ref) / (jnp.linalg.norm(ref) + 1e-8))
    assert rel_err < 0.05, f"relative L2 error too high: {rel_err}"

    print("KERNEL_OK")
</pallas_src>

<mosaic_0001>
module attributes {stable_mosaic.version = 11 : i64} {
  func.func @_matmul_bn_act_kernel(%arg0: i32, %arg1: memref<256x27xbf16, #tpu.memory_space<vmem>>, %arg2: memref<27x32xbf16, #tpu.memory_space<vmem>>, %arg3: memref<1x32xf32, #tpu.memory_space<vmem>>, %arg4: memref<1x32xf32, #tpu.memory_space<vmem>>, %arg5: memref<256x32xbf16, #tpu.memory_space<vmem>>) attributes {dimension_semantics = [#tpu.dimension_semantics<parallel>], iteration_bounds = array<i64: 2>, scalar_prefetch = 0 : i64, scratch_operands = 0 : i64, tpu.core_type = #tpu.core_type<tc>, window_params = [{transform_indices = @transform_0, window_bounds = array<i64: 256, 27>}, {pipeline_mode = #tpu.pipeline_mode<synchronous>, transform_indices = @transform_1, window_bounds = array<i64: 27, 32>}, {pipeline_mode = #tpu.pipeline_mode<synchronous>, transform_indices = @transform_2, window_bounds = array<i64: 1, 32>}, {pipeline_mode = #tpu.pipeline_mode<synchronous>, transform_indices = @transform_3, window_bounds = array<i64: 1, 32>}, {transform_indices = @transform_4, window_bounds = array<i64: 256, 32>}]} {
    %c0 = arith.constant 0 : index
    %c0_0 = arith.constant 0 : index
    %0 = vector.load %arg1[%c0, %c0_0] : memref<256x27xbf16, #tpu.memory_space<vmem>>, vector<256x27xbf16>
    %c0_1 = arith.constant 0 : index
    %c0_2 = arith.constant 0 : index
    %1 = vector.load %arg2[%c0_1, %c0_2] : memref<27x32xbf16, #tpu.memory_space<vmem>>, vector<27x32xbf16>
    %cst = arith.constant dense<0.000000e+00> : vector<256x32xf32>
    %2 = tpu.matmul %0, %1, %cst {dimension_numbers = #tpu.dot_dimension_numbers<[1], [0], [0], [1], [0, 0, 1, 1], [], []>} : vector<256x27xbf16>, vector<27x32xbf16>, vector<256x32xf32> -> vector<256x32xf32>
    %c0_3 = arith.constant 0 : index
    %c0_4 = arith.constant 0 : index
    %3 = vector.load %arg3[%c0_3, %c0_4] : memref<1x32xf32, #tpu.memory_space<vmem>>, vector<1x32xf32>
    %4 = vector.broadcast %3 : vector<1x32xf32> to vector<256x32xf32>
    %5 = arith.mulf %2, %4 : vector<256x32xf32>
    %c0_5 = arith.constant 0 : index
    %c0_6 = arith.constant 0 : index
    %6 = vector.load %arg4[%c0_5, %c0_6] : memref<1x32xf32, #tpu.memory_space<vmem>>, vector<1x32xf32>
    %7 = vector.broadcast %6 : vector<1x32xf32> to vector<256x32xf32>
    %8 = arith.addf %5, %7 : vector<256x32xf32>
    %cst_7 = arith.constant 0.000000e+00 : f32
    %9 = vector.broadcast %cst_7 : f32 to vector<256x32xf32>
    %10 = arith.maximumf %8, %9 : vector<256x32xf32>
    %11 = arith.truncf %10 : vector<256x32xf32> to vector<256x32xbf16>
    %c0_8 = arith.constant 0 : index
    %c0_9 = arith.constant 0 : index
    %12 = vector.load %arg5[%c0_8, %c0_9] : memref<256x32xbf16, #tpu.memory_space<vmem>>, vector<256x32xbf16>
    tpu.vector_store %arg5[%c0_8, %c0_9], %11 {strides = array<i32>} : memref<256x32xbf16, #tpu.memory_space<vmem>>, vector<256x32xbf16>,
    return
  }
  func.func @transform_0(%arg0: i32) -> (i32, i32) {
    %c0_i32 = arith.constant 0 : i32
    %c0_i32_0 = arith.constant 0 : i32
    return %arg0, %c0_i32 : i32, i32
  }
  func.func @transform_1(%arg0: i32) -> (i32, i32) {
    %c0_i32 = arith.constant 0 : i32
    %c0_i32_0 = arith.constant 0 : i32
    %c0_i32_1 = arith.constant 0 : i32
    return %c0_i32, %c0_i32_0 : i32, i32
  }
  func.func @transform_2(%arg0: i32) -> (i32, i32) {
    %c0_i32 = arith.constant 0 : i32
    %c0_i32_0 = arith.constant 0 : i32
    %c0_i32_1 = arith.constant 0 : i32
    return %c0_i32, %c0_i32_0 : i32, i32
  }
  func.func @transform_3(%arg0: i32) -> (i32, i32) {
    %c0_i32 = arith.constant 0 : i32
    %c0_i32_0 = arith.constant 0 : i32
    %c0_i32_1 = arith.constant 0 : i32
    return %c0_i32, %c0_i32_0 : i32, i32
  }
  func.func @transform_4(%arg0: i32) -> (i32, i32) {
    %c0_i32 = arith.constant 0 : i32
    %c0_i32_0 = arith.constant 0 : i32
    return %arg0, %c0_i32 : i32, i32
  }
}

module attributes {stable_mosaic.version = 11 : i64} {
  func.func @_matmul_bn_act_kernel(%arg0: i32, %arg1: memref<256x288xbf16, #tpu.memory_space<vmem>>, %arg2: memref<288x32xbf16, #tpu.memory_space<vmem>>, %arg3: memref<1x32xf32, #tpu.memory_space<vmem>>, %arg4: memref<1x32xf32, #tpu.memory_space<vmem>>, %arg5: memref<256x32xbf16, #tpu.memory_space<vmem>>) attributes {dimension_semantics = [#tpu.dimension_semantics<parallel>], iteration_bounds = array<i64: 2>, scalar_prefetch = 0 : i64, scratch_operands = 0 : i64, tpu.core_type = #tpu.core_type<tc>, window_params = [{transform_indices = @transform_0, window_bounds = array<i64: 256, 288>}, {pipeline_mode = #tpu.pipeline_mode<synchronous>, transform_indices = @transform_1, window_bounds = array<i64: 288, 32>}, {pipeline_mode = #tpu.pipeline_mode<synchronous>, transform_indices = @transform_2, window_bounds = array<i64: 1, 32>}, {pipeline_mode = #tpu.pipeline_mode<synchronous>, transform_indices = @transform_3, window_bounds = array<i64: 1, 32>}, {transform_indices = @transform_4, window_bounds = array<i64: 256, 32>}]} {
    %c0 = arith.constant 0 : index
    %c0_0 = arith.constant 0 : index
    %0 = vector.load %arg1[%c0, %c0_0] : memref<256x288xbf16, #tpu.memory_space<vmem>>, vector<256x288xbf16>
    %c0_1 = arith.constant 0 : index
    %c0_2 = arith.constant 0 : index
    %1 = vector.load %arg2[%c0_1, %c0_2] : memref<288x32xbf16, #tpu.memory_space<vmem>>, vector<288x32xbf16>
    %cst = arith.constant dense<0.000000e+00> : vector<256x32xf32>
    %2 = tpu.matmul %0, %1, %cst {dimension_numbers = #tpu.dot_dimension_numbers<[1], [0], [0], [1], [0, 0, 1, 1], [], []>} : vector<256x288xbf16>, vector<288x32xbf16>, vector<256x32xf32> -> vector<256x32xf32>
    %c0_3 = arith.constant 0 : index
    %c0_4 = arith.constant 0 : index
    %3 = vector.load %arg3[%c0_3, %c0_4] : memref<1x32xf32, #tpu.memory_space<vmem>>, vector<1x32xf32>
    %4 = vector.broadcast %3 : vector<1x32xf32> to vector<256x32xf32>
    %5 = arith.mulf %2, %4 : vector<256x32xf32>
    %c0_5 = arith.constant 0 : index
    %c0_6 = arith.constant 0 : index
    %6 = vector.load %arg4[%c0_5, %c0_6] : memref<1x32xf32, #tpu.memory_space<vmem>>, vector<1x32xf32>
    %7 = vector.broadcast %6 : vector<1x32xf32> to vector<256x32xf32>
    %8 = arith.addf %5, %7 : vector<256x32xf32>
    %cst_7 = arith.constant 0.000000e+00 : f32
    %9 = vector.broadcast %cst_7 : f32 to vector<256x32xf32>
    %10 = arith.maximumf %8, %9 : vector<256x32xf32>
    %11 = arith.truncf %10 : vector<256x32xf32> to vector<256x32xbf16>
    %c0_8 = arith.constant 0 : index
    %c0_9 = arith.constant 0 : index
    %12 = vector.load %arg5[%c0_8, %c0_9] : memref<256x32xbf16, #tpu.memory_space<vmem>>, vector<256x32xbf16>
    tpu.vector_store %arg5[%c0_8, %c0_9], %11 {strides = array<i32>} : memref<256x32xbf16, #tpu.memory_space<vmem>>, vector<256x32xbf16>,
    return
  }
  func.func @transform_0(%arg0: i32) -> (i32, i32) {
    %c0_i32 = arith.constant 0 : i32
    %c0_i32_0 = arith.constant 0 : i32
    return %arg0, %c0_i32 : i32, i32
  }
  func.func @transform_1(%arg0: i32) -> (i32, i32) {
    %c0_i32 = arith.constant 0 : i32
    %c0_i32_0 = arith.constant 0 : i32
    %c0_i32_1 = arith.constant 0 : i32
    return %c0_i32, %c0_i32_0 : i32, i32
  }
  func.func @transform_2(%arg0: i32) -> (i32, i32) {
    %c0_i32 = arith.constant 0 : i32
    %c0_i32_0 = arith.constant 0 : i32
    %c0_i32_1 = arith.constant 0 : i32
    return %c0_i32, %c0_i32_0 : i32, i32
  }
  func.func @transform_3(%arg0: i32) -> (i32, i32) {
    %c0_i32 = arith.constant 0 : i32
    %c0_i32_0 = arith.constant 0 : i32
    %c0_i32_1 = arith.constant 0 : i32
    return %c0_i32, %c0_i32_0 : i32, i32
  }
  func.func @transform_4(%arg0: i32) -> (i32, i32) {
    %c0_i32 = arith.constant 0 : i32
    %c0_i32_0 = arith.constant 0 : i32
    return %arg0, %c0_i32 : i32, i32
  }
}

module attributes {stable_mosaic.version = 11 : i64} {
  func.func @_matmul_bn_act_kernel(%arg0: i32, %arg1: memref<256x288xbf16, #tpu.memory_space<vmem>>, %arg2: memref<288x64xbf16, #tpu.memory_space<vmem>>, %arg3: memref<1x64xf32, #tpu.memory_space<vmem>>, %arg4: memref<1x64xf32, #tpu.memory_space<vmem>>, %arg5: memref<256x64xbf16, #tpu.memory_space<vmem>>) attributes {dimension_semantics = [#tpu.dimension_semantics<parallel>], iteration_bounds = array<i64: 2>, scalar_prefetch = 0 : i64, scratch_operands = 0 : i64, tpu.core_type = #tpu.core_type<tc>, window_params = [{transform_indices = @transform_0, window_bounds = array<i64: 256, 288>}, {pipeline_mode = #tpu.pipeline_mode<synchronous>, transform_indices = @transform_1, window_bounds = array<i64: 288, 64>}, {pipeline_mode = #tpu.pipeline_mode<synchronous>, transform_indices = @transform_2, window_bounds = array<i64: 1, 64>}, {pipeline_mode = #tpu.pipeline_mode<synchronous>, transform_indices = @transform_3, window_bounds = array<i64: 1, 64>}, {transform_indices = @transform_4, window_bounds = array<i64: 256, 64>}]} {
    %c0 = arith.constant 0 : index
    %c0_0 = arith.constant 0 : index
    %0 = vector.load %arg1[%c0, %c0_0] : memref<256x288xbf16, #tpu.memory_space<vmem>>, vector<256x288xbf16>
    %c0_1 = arith.constant 0 : index
    %c0_2 = arith.constant 0 : index
    %1 = vector.load %arg2[%c0_1, %c0_2] : memref<288x64xbf16, #tpu.memory_space<vmem>>, vector<288x64xbf16>
    %cst = arith.constant dense<0.000000e+00> : vector<256x64xf32>
    %2 = tpu.matmul %0, %1, %cst {dimension_numbers = #tpu.dot_dimension_numbers<[1], [0], [0], [1], [0, 0, 1, 1], [], []>} : vector<256x288xbf16>, vector<288x64xbf16>, vector<256x64xf32> -> vector<256x64xf32>
    %c0_3 = arith.constant 0 : index
    %c0_4 = arith.constant 0 : index
    %3 = vector.load %arg3[%c0_3, %c0_4] : memref<1x64xf32, #tpu.memory_space<vmem>>, vector<1x64xf32>
    %4 = vector.broadcast %3 : vector<1x64xf32> to vector<256x64xf32>
    %5 = arith.mulf %2, %4 : vector<256x64xf32>
    %c0_5 = arith.constant 0 : index
    %c0_6 = arith.constant 0 : index
    %6 = vector.load %arg4[%c0_5, %c0_6] : memref<1x64xf32, #tpu.memory_space<vmem>>, vector<1x64xf32>
    %7 = vector.broadcast %6 : vector<1x64xf32> to vector<256x64xf32>
    %8 = arith.addf %5, %7 : vector<256x64xf32>
    %cst_7 = arith.constant 0.000000e+00 : f32
    %9 = vector.broadcast %cst_7 : f32 to vector<256x64xf32>
    %10 = arith.maximumf %8, %9 : vector<256x64xf32>
    %11 = arith.truncf %10 : vector<256x64xf32> to vector<256x64xbf16>
    %c0_8 = arith.constant 0 : index
    %c0_9 = arith.constant 0 : index
    %12 = vector.load %arg5[%c0_8, %c0_9] : memref<256x64xbf16, #tpu.memory_space<vmem>>, vector<256x64xbf16>
    tpu.vector_store %arg5[%c0_8, %c0_9], %11 {strides = array<i32>} : memref<256x64xbf16, #tpu.memory_space<vmem>>, vector<256x64xbf16>,
    return
  }
  func.func @transform_0(%arg0: i32) -> (i32, i32) {
    %c0_i32 = arith.constant 0 : i32
    %c0_i32_0 = arith.constant 0 : i32
    return %arg0, %c0_i32 : i32, i32
  }
  func.func @transform_1(%arg0: i32) -> (i32, i32) {
    %c0_i32 = arith.constant 0 : i32
    %c0_i32_0 = arith.constant 0 : i32
    %c0_i32_1 = arith.constant 0 : i32
    return %c0_i32, %c0_i32_0 : i32, i32
  }
  func.func @transform_2(%arg0: i32) -> (i32, i32) {
    %c0_i32 = arith.constant 0 : i32
    %c0_i32_0 = arith.constant 0 : i32
    %c0_i32_1 = arith.constant 0 : i32
    return %c0_i32, %c0_i32_0 : i32, i32
  }
  func.func @transform_3(%arg0: i32) -> (i32, i32) {
    %c0_i32 = arith.constant 0 : i32
    %c0_i32_0 = arith.constant 0 : i32
    %c0_i32_1 = arith.constant 0 : i32
    return %c0_i32, %c0_i32_0 : i32, i32
  }
  func.func @transform_4(%arg0: i32) -> (i32, i32) {
    %c0_i32 = arith.constant 0 : i32
    %c0_i32_0 = arith.constant 0 : i32
    return %arg0, %c0_i32 : i32, i32
  }
}

module attributes {stable_mosaic.version = 11 : i64} {
  func.func @_maxpool3x3_kernel(%arg0: i32, %arg1: memref<1x18x18x64xbf16, #tpu.memory_space<vmem>>, %arg2: memref<1x16x16x64xf32, #tpu.memory_space<vmem>>) attributes {dimension_semantics = [#tpu.dimension_semantics<parallel>], iteration_bounds = array<i64: 2>, scalar_prefetch = 0 : i64, scratch_operands = 0 : i64, tpu.core_type = #tpu.core_type<tc>, window_params = [{transform_indices = @transform_0, window_bounds = array<i64: 1, 18, 18, 64>}, {transform_indices = @transform_1, window_bounds = array<i64: 1, 16, 16, 64>}]} {
    %c0 = arith.constant 0 : index
    %c0_0 = arith.constant 0 : index
    %c0_1 = arith.constant 0 : index
    %c0_2 = arith.constant 0 : index
    %0 = vector.load %arg1[%c0, %c0_0, %c0_1, %c0_2] : memref<1x18x18x64xbf16, #tpu.memory_space<vmem>>, vector<1x18x18x64xbf16>
    %1 = vector.extract_strided_slice %0 {offsets = [0, 0, 0, 0], sizes = [1, 16, 16, 64], strides = [1, 1, 1, 1]} : vector<1x18x18x64xbf16> to vector<1x16x16x64xbf16>
    %2 = vector.extract_strided_slice %0 {offsets = [0, 0, 1, 0], sizes = [1, 16, 16, 64], strides = [1, 1, 1, 1]} : vector<1x18x18x64xbf16> to vector<1x16x16x64xbf16>
    %3 = arith.maximumf %1, %2 : vector<1x16x16x64xbf16>
    %4 = vector.extract_strided_slice %0 {offsets = [0, 0, 2, 0], sizes = [1, 16, 16, 64], strides = [1, 1, 1, 1]} : vector<1x18x18x64xbf16> to vector<1x16x16x64xbf16>
    %5 = arith.maximumf %3, %4 : vector<1x16x16x64xbf16>
    %6 = vector.extract_strided_slice %0 {offsets = [0, 1, 0, 0], sizes = [1, 16, 16, 64], strides = [1, 1, 1, 1]} : vector<1x18x18x64xbf16> to vector<1x16x16x64xbf16>
    %7 = arith.maximumf %5, %6 : vector<1x16x16x64xbf16>
    %8 = vector.extract_strided_slice %0 {offsets = [0, 1, 1, 0], sizes = [1, 16, 16, 64], strides = [1, 1, 1, 1]} : vector<1x18x18x64xbf16> to vector<1x16x16x64xbf16>
    %9 = arith.maximumf %7, %8 : vector<1x16x16x64xbf16>
    %10 = vector.extract_strided_slice %0 {offsets = [0, 1, 2, 0], sizes = [1, 16, 16, 64], strides = [1, 1, 1, 1]} : vector<1x18x18x64xbf16> to vector<1x16x16x64xbf16>
    %11 = arith.maximumf %9, %10 : vector<1x16x16x64xbf16>
    %12 = vector.extract_strided_slice %0 {offsets = [0, 2, 0, 0], sizes = [1, 16, 16, 64], strides = [1, 1, 1, 1]} : vector<1x18x18x64xbf16> to vector<1x16x16x64xbf16>
    %13 = arith.maximumf %11, %12 : vector<1x16x16x64xbf16>
    %14 = vector.extract_strided_slice %0 {offsets = [0, 2, 1, 0], sizes = [1, 16, 16, 64], strides = [1, 1, 1, 1]} : vector<1x18x18x64xbf16> to vector<1x16x16x64xbf16>
    %15 = arith.maximumf %13, %14 : vector<1x16x16x64xbf16>
    %16 = vector.extract_strided_slice %0 {offsets = [0, 2, 2, 0], sizes = [1, 16, 16, 64], strides = [1, 1, 1, 1]} : vector<1x18x18x64xbf16> to vector<1x16x16x64xbf16>
    %17 = arith.maximumf %15, %16 : vector<1x16x16x64xbf16>
    %18 = arith.extf %17 : vector<1x16x16x64xbf16> to vector<1x16x16x64xf32>
    %c0_3 = arith.constant 0 : index
    %c0_4 = arith.constant 0 : index
    %c0_5 = arith.constant 0 : index
    %c0_6 = arith.constant 0 : index
    %19 = vector.load %arg2[%c0_3, %c0_4, %c0_5, %c0_6] : memref<1x16x16x64xf32, #tpu.memory_space<vmem>>, vector<1x16x16x64xf32>
    tpu.vector_store %arg2[%c0_3, %c0_4, %c0_5, %c0_6], %18 {strides = array<i32>} : memref<1x16x16x64xf32, #tpu.memory_space<vmem>>, vector<1x16x16x64xf32>,
    return
  }
  func.func @transform_0(%arg0: i32) -> (i32, i32, i32, i32) {
    %c0_i32 = arith.constant 0 : i32
    %c0_i32_0 = arith.constant 0 : i32
    %c0_i32_1 = arith.constant 0 : i32
    %c0_i32_2 = arith.constant 0 : i32
    return %arg0, %c0_i32, %c0_i32_0, %c0_i32_1 : i32, i32, i32, i32
  }
  func.func @transform_1(%arg0: i32) -> (i32, i32, i32, i32) {
    %c0_i32 = arith.constant 0 : i32
    %c0_i32_0 = arith.constant 0 : i32
    %c0_i32_1 = arith.constant 0 : i32
    %c0_i32_2 = arith.constant 0 : i32
    return %arg0, %c0_i32, %c0_i32_0, %c0_i32_1 : i32, i32, i32, i32
  }
}

</mosaic_0001>

<llo_original>
// kernel: resnet50vd_small_forward.4
$region0: #{resnet50vd_small_forward.4}
  #allocation0 [shape = 'u32[]', space=smem, size = 0x4, offset = 0x4, fixed_abs, tag = 'smem constant byte address 0x4 - core index']
  #allocation1 [shape = 'u32[144,128]{1,0:T(1,128)}', space=vmem, size = 0x12000, scoped, tag = 'internal scratch']
  %s0 = inlined_call_operand.vmem [shape: bf16[512,27], index: 0, kind: input, shape index: {}]
  %s1 = inlined_call_operand.vmem [shape: bf16[27,32], index: 1, kind: input, shape index: {}]
  %s2 = inlined_call_operand.vmem [shape: f32[1,32], index: 2, kind: input, shape index: {}]
  %s3 = inlined_call_operand.vmem [shape: f32[1,32], index: 3, kind: input, shape index: {}]
  %s4 = inlined_call_operand.vmem [shape: bf16[512,32], index: 4, kind: output, shape index: {}]
  %s5 = sld [smem:[#allocation0]]
  $region49: #{resnet50vd_small_forward.4} parent=0
    _
  %s7 = ssub.s32 1, %s5
  %s8 = scalar_select 0, %s7, %s5
  loop: start=0, step=1, limit=4
  $region2: #{resnet50vd_small_forward.4} parent=0 // loop_pre_header
    _
  $region3: #{resnet50vd_small_forward.4} parent=0 // loop_header
    %s10 = sphi 0, %s14
    %p11 = scmp.ge.s32.totalorder %s10, 4
    %s20 = sphi 0, %s22
    %s23 = sphi 0, %s20
    %s24 = sphi 0, %s23
    %s40 = sphi 0, %s24
    %s44 = sphi 0, %s44
    %s46 = sphi 0, %s44
    %s47 = sphi 0, %s46
    %s61 = sphi 0, %s47
    %s65 = sphi 0, %s65
    %s67 = sphi 0, %s65
    %s68 = sphi 0, %s67
    %s82 = sphi 0, %s68
    %s86 = sphi 0, %s86
    %s88 = sphi 0, %s86
    %s89 = sphi 0, %s88
    %s103 = sphi 0, %s89
    %s109 = sphi 0, %s111
    %s112 = sphi 0, %s109
    %s113 = sphi 0, %s112
    %s129 = sphi 0, %s113
  $region4: #{resnet50vd_small_forward.4} parent=0 // loop_header_branch
    %13 = sbr.rel (%p11) target = $region8
  $region5: #{resnet50vd_small_forward.4} parent=0 // loop_body
    %s15 = ssub.s32 %s10, 1
    %s16 = ssub.s32 %s10, 2
    %s17 = sadd.s32 %s10, 1
    %s18 = ssub.s32 %s10, %s17
    %p19 = scmp.eq.s32.totalorder %s18, 0
    %s21 = sadd.s32 %s20, 1
    %s22 = scalar_select %p19, %s20, %s21
    %p25 = pneg %p19
    %p26 = scmp.eq.s32.totalorder %s10, 1
    %p27 = por %p25, %p26
    %p28 = scmp.ne.s32.totalorder %s20, %s23
    %p29 = scmp.eq.s32.totalorder %s10, 0
    %p30 = por %p28, %p29
    %p31 = scmp.ne.s32.totalorder %s20, %s23
    %p32 = scmp.eq.s32.totalorder %s15, 1
    %p33 = por %p31, %p32
    %p34 = scmp.ne.s32.totalorder %s23, %s24
    %p35 = scmp.eq.s32.totalorder %s15, 0
    %p36 = por %p34, %p35
    %p37 = scmp.ne.s32.totalorder %s23, %s24
    %p38 = scmp.eq.s32.totalorder %s16, 1
    %p39 = por %p37, %p38
    %p41 = scmp.ne.s32.totalorder %s24, %s40
    %p42 = scmp.eq.s32.totalorder %s16, 0
    %p43 = por %p41, %p42
    %s45 = sadd.s32 %s44, 1
    %p48 = scmp.eq.s32.totalorder %s10, 1
    %p49 = scmp.ne.s32.totalorder %s44, %s46
    %p50 = scmp.eq.s32.totalorder %s10, 0
    %p51 = por %p49, %p50
    %p52 = scmp.ne.s32.totalorder %s44, %s46
    %p53 = scmp.eq.s32.totalorder %s15, 1
    %p54 = por %p52, %p53
    %p55 = scmp.ne.s32.totalorder %s46, %s47
    %p56 = scmp.eq.s32.totalorder %s15, 0
    %p57 = por %p55, %p56
    %p58 = scmp.ne.s32.totalorder %s46, %s47
    %p59 = scmp.eq.s32.totalorder %s16, 1
    %p60 = por %p58, %p59
    %p62 = scmp.ne.s32.totalorder %s47, %s61
    %p63 = scmp.eq.s32.totalorder %s16, 0
    %p64 = por %p62, %p63
    %s66 = sadd.s32 %s65, 1
    %p69 = scmp.eq.s32.totalorder %s10, 1
    %p70 = scmp.ne.s32.totalorder %s65, %s67
    %p71 = scmp.eq.s32.totalorder %s10, 0
    %p72 = por %p70, %p71
    %p73 = scmp.ne.s32.totalorder %s65, %s67
    %p74 = scmp.eq.s32.totalorder %s15, 1
    %p75 = por %p73, %p74
    %p76 = scmp.ne.s32.totalorder %s67, %s68
    %p77 = scmp.eq.s32.totalorder %s15, 0
    %p78 = por %p76, %p77
    %p79 = scmp.ne.s32.totalorder %s67, %s68
    %p80 = scmp.eq.s32.totalorder %s16, 1
    %p81 = por %p79, %p80
    %p83 = scmp.ne.s32.totalorder %s68, %s82
    %p84 = scmp.eq.s32.totalorder %s16, 0
    %p85 = por %p83, %p84
    %s87 = sadd.s32 %s86, 1
    %p90 = scmp.eq.s32.totalorder %s10, 1
    %p91 = scmp.ne.s32.totalorder %s86, %s88
    %p92 = scmp.eq.s32.totalorder %s10, 0
    %p93 = por %p91, %p92
    %p94 = scmp.ne.s32.totalorder %s86, %s88
    %p95 = scmp.eq.s32.totalorder %s15, 1
    %p96 = por %p94, %p95
    %p97 = scmp.ne.s32.totalorder %s88, %s89
    %p98 = scmp.eq.s32.totalorder %s15, 0
    %p99 = por %p97, %p98
    %p100 = scmp.ne.s32.totalorder %s88, %s89
    %p101 = scmp.eq.s32.totalorder %s16, 1
    %p102 = por %p100, %p101
    %p104 = scmp.ne.s32.totalorder %s89, %s103
    %p105 = scmp.eq.s32.totalorder %s16, 0
    %p106 = por %p104, %p105
    %s107 = ssub.s32 %s10, %s17
    %p108 = scmp.eq.s32.totalorder %s107, 0
    %s110 = sadd.s32 %s109, 1
    %s111 = scalar_select %p108, %s109, %s110
    %p114 = pneg %p108
    %p115 = scmp.eq.s32.totalorder %s10, 1
    %p116 = por %p114, %p115
    %p117 = scmp.ne.s32.totalorder %s109, %s112
    %p118 = scmp.eq.s32.totalorder %s10, 0
    %p119 = por %p117, %p118
    %p120 = scmp.ne.s32.totalorder %s109, %s112
    %p121 = scmp.eq.s32.totalorder %s15, 1
    %p122 = por %p120, %p121
    %p123 = scmp.ne.s32.totalorder %s112, %s113
    %p124 = scmp.eq.s32.totalorder %s15, 0
    %p125 = por %p123, %p124
    %p126 = scmp.ne.s32.totalorder %s112, %s113
    %p127 = scmp.eq.s32.totalorder %s16, 1
    %p128 = por %p126, %p127
    %p130 = scmp.ne.s32.totalorder %s113, %s129
    %p131 = scmp.eq.s32.totalorder %s16, 0
    %p132 = por %p130, %p131
    %p133 = scmp.le.s32.totalorder 1, %s10
    %p134 = scmp.lt.s32.totalorder %s10, 3
    %p135 = pnand %p133, %p134
    %p136 = pneg %p135
    // Predicated region
    $region9: #{resnet50vd_small_forward.4} parent=5 // pred_check
      _
    $region10: #{resnet50vd_small_forward.4} parent=5 // pred_check_branch
      %138 = sbr.rel (%p135) target = $region12
    $region11: #{resnet50vd_small_forward.4} parent=5 // pred_region
      %s139 = ssub.s32 %s10, 1
      // Predicated region
      $region13: #{resnet50vd_small_forward.4} parent=11 // pred_check
        %p140 = pneg %p57
      $region14: #{resnet50vd_small_forward.4} parent=11 // pred_check_branch
        %142 = sbr.rel (%p140) target = $region16
      $region15: #{resnet50vd_small_forward.4} parent=11 // pred_region
        _
      $region16: #{resnet50vd_small_forward.4} parent=11 // pred_fallthru
        _
      // Predicated region
      $region17: #{resnet50vd_small_forward.4} parent=11 // pred_check
        %p143 = pneg %p78
      $region18: #{resnet50vd_small_forward.4} parent=11 // pred_check_branch
        %145 = sbr.rel (%p143) target = $region20
      $region19: #{resnet50vd_small_forward.4} parent=11 // pred_region
        _
      $region20: #{resnet50vd_small_forward.4} parent=11 // pred_fallthru
        _
      // Predicated region
      $region21: #{resnet50vd_small_forward.4} parent=11 // pred_check
        %p146 = pneg %p99
      $region22: #{resnet50vd_small_forward.4} parent=11 // pred_check_branch
        %148 = sbr.rel (%p146) target = $region24
      $region23: #{resnet50vd_small_forward.4} parent=11 // pred_region
        _
      $region24: #{resnet50vd_small_forward.4} parent=11 // pred_fallthru
        _
    $region12: #{resnet50vd_small_forward.4} parent=5 // pred_fallthru
      _
    %p149 = scmp.lt.s32.totalorder %s10, 2
    // Predicated region
    $region25: #{resnet50vd_small_forward.4} parent=5 // pred_check
      %p150 = pneg %p149
    $region26: #{resnet50vd_small_forward.4} parent=5 // pred_check_branch
      %152 = sbr.rel (%p150) target = $region28
    $region27: #{resnet50vd_small_forward.4} parent=5 // pred_region
      // Predicated region
      $region29: #{resnet50vd_small_forward.4} parent=27 // pred_check
        %p153 = pneg %p30
      $region30: #{resnet50vd_small_forward.4} parent=27 // pred_check_branch
        %155 = sbr.rel (%p153) target = $region32
      $region31: #{resnet50vd_small_forward.4} parent=27 // pred_region
        %s156 = smul.u32 32, %s10
        %p157 = scmp.lt.s32.totalorder %s156, 63
        %s158 = scalar_select %p157, %s156, 63
        %s159 = smul.addr %s158, 4
        %s160 = scalar_lea.vmem %s0, %s159
        %s161 = smul.u32 32, %s10
      $region32: #{resnet50vd_small_forward.4} parent=27 // pred_fallthru
        _
    $region28: #{resnet50vd_small_forward.4} parent=5 // pred_fallthru
      _
    %p162 = scmp.le.s32.totalorder 1, %s10
    %p163 = scmp.lt.s32.totalorder %s10, 3
    %p164 = pnand %p162, %p163
    %p165 = pneg %p164
    // Predicated region
    $region33: #{resnet50vd_small_forward.4} parent=5 // pred_check
      _
    $region34: #{resnet50vd_small_forward.4} parent=5 // pred_check_branch
      %167 = sbr.rel (%p164) target = $region36
    $region35: #{resnet50vd_small_forward.4} parent=5 // pred_region
      %s168 = ssub.s32 %s10, 1
      %s169 = smul.u32 32, %s15
      %p170 = scmp.lt.s32.totalorder %s169, 63
      %s171 = scalar_select %p170, %s169, 63
      %s172 = smul.addr %s171, 4
      %s173 = scalar_lea.vmem %s0, %s172
      %p174 = pneg %p36
      %p175 = pneg %p33
      %p176 = pneg %p57
      %p177 = pneg %p54
      %p178 = pneg %p78
      %p179 = pneg %p75
      %p180 = pneg %p99
      %p181 = pneg %p96
      %p182 = pneg %p125
      %p183 = pneg %p122
      %s184 = smul.u32 32, %s15
      %p185 = scmp.lt.s32.totalorder %s184, 63
      %s186 = scalar_select %p185, %s184, 63
      %s187 = smul.addr %s186, 4
      %s188 = scalar_lea.vmem %s4, %s187
      %s189 = smul.u32 32, %s15
      %p190 = scmp.lt.s32.totalorder %s189, 63
      %s191 = scalar_select %p190, %s189, 63
      %s192 = smul.addr %s191, 4
      %s193 = scalar_lea.vmem %s0, %s192
      %s194 = smul.u32 32, %s15
      %s195 = smul.u32 32, %s15
      %p196 = scmp.lt.s32.totalorder %s195, 63
      %s197 = scalar_select %p196, %s195, 63
      %s198 = smul.addr %s197, 4
      %s199 = scalar_lea.vmem %s4, %s198
      %s200 = smul.u32 32, %s15
      %v202 = vld [vmem:[%s193] sm:$0xf]
      %v203 = vld [vmem:[%s193 + $0x4] sm:$0xf]
      %v204 = vld [vmem:[%s193 + $0x8] sm:$0xf]
      %v205 = vld [vmem:[%s193 + $0xc] sm:$0xf]
      %v206 = vld [vmem:[%s193 + $0x10] sm:$0xf]
      %v207 = vld [vmem:[%s193 + $0x14] sm:$0xf]
      %v208 = vld [vmem:[%s193 + $0x18] sm:$0xf]
      %v209 = vld [vmem:[%s193 + $0x1c] sm:$0xf]
      %v210 = vld [vmem:[%s193 + $0x20] sm:$0xf]
      %v211 = vld [vmem:[%s193 + $0x24] sm:$0xf]
      %v212 = vld [vmem:[%s193 + $0x28] sm:$0xf]
      %v213 = vld [vmem:[%s193 + $0x2c] sm:$0xf]
      %v214 = vld [vmem:[%s193 + $0x30] sm:$0xf]
      %v215 = vld [vmem:[%s193 + $0x34] sm:$0xf]
      %v216 = vld [vmem:[%s193 + $0x38] sm:$0xf]
      %v217 = vld [vmem:[%s193 + $0x3c] sm:$0xf]
      %v218 = vld [vmem:[%s193 + $0x40] sm:$0xf]
      %v219 = vld [vmem:[%s193 + $0x44] sm:$0xf]
      %v220 = vld [vmem:[%s193 + $0x48] sm:$0xf]
      %v221 = vld [vmem:[%s193 + $0x4c] sm:$0xf]
      %v222 = vld [vmem:[%s193 + $0x50] sm:$0xf]
      %v223 = vld [vmem:[%s193 + $0x54] sm:$0xf]
      %v224 = vld [vmem:[%s193 + $0x58] sm:$0xf]
      %v225 = vld [vmem:[%s193 + $0x5c] sm:$0xf]
      %v226 = vld [vmem:[%s193 + $0x60] sm:$0xf]
      %v227 = vld [vmem:[%s193 + $0x64] sm:$0xf]
      %v228 = vld [vmem:[%s193 + $0x68] sm:$0xf]
      %v229 = vld [vmem:[%s193 + $0x6c] sm:$0xf]
      %v230 = vld [vmem:[%s193 + $0x70] sm:$0xf]
      %v231 = vld [vmem:[%s193 + $0x74] sm:$0xf]
      %v232 = vld [vmem:[%s193 + $0x78] sm:$0xf]
      %v233 = vld [vmem:[%s193 + $0x7c] sm:$0xf]
      %v234 = vld [vmem:[%s1] sm:$0xf]
      %v235 = vld [vmem:[%s1 + $0x4] sm:$0xf]
      %v236 = vld [vmem:[%s1 + $0x8] sm:$0xf]
      %v237 = vld [vmem:[%s1 + $0xc] sm:$0x3]
      %v270 = vunpack.c.l.b16 %v202
      %v271 = vunpack.c.l.b16 %v203
      %v272 = vunpack.c.l.b16 %v204
      %v273 = vunpack.c.l.b16 %v205
      %v274 = vunpack.c.l.b16 %v206
      %v275 = vunpack.c.l.b16 %v207
      %v276 = vunpack.c.l.b16 %v208
      %v277 = vunpack.c.l.b16 %v209
      %v278 = vunpack.c.l.b16 %v210
      %v279 = vunpack.c.l.b16 %v211
      %v280 = vunpack.c.l.b16 %v212
      %v281 = vunpack.c.l.b16 %v213
      %v282 = vunpack.c.l.b16 %v214
      %v283 = vunpack.c.l.b16 %v215
      %v284 = vunpack.c.l.b16 %v216
      %v285 = vunpack.c.l.b16 %v217
      %v286 = vunpack.c.l.b16 %v218
      %v287 = vunpack.c.l.b16 %v219
      %v288 = vunpack.c.l.b16 %v220
      %v289 = vunpack.c.l.b16 %v221
      %v290 = vunpack.c.l.b16 %v222
      %v291 = vunpack.c.l.b16 %v223
      %v292 = vunpack.c.l.b16 %v224
      %v293 = vunpack.c.l.b16 %v225
      %v294 = vunpack.c.l.b16 %v226
      %v295 = vunpack.c.l.b16 %v227
      %v296 = vunpack.c.l.b16 %v228
      %v297 = vunpack.c.l.b16 %v229
      %v298 = vunpack.c.l.b16 %v230
      %v299 = vunpack.c.l.b16 %v231
      %v300 = vunpack.c.l.b16 %v232
      %v301 = vunpack.c.l.b16 %v233
      %v302 = vpack.c.b16 %v271, %v270
      %v303 = vpack.c.b16 %v273, %v272
      %v304 = vpack.c.b16 %v275, %v274
      %v305 = vpack.c.b16 %v277, %v276
      %v306 = vpack.c.b16 %v279, %v278
      %v307 = vpack.c.b16 %v281, %v280
      %v308 = vpack.c.b16 %v283, %v282
      %v309 = vpack.c.b16 %v285, %v284
      %v310 = vpack.c.b16 %v287, %v286
      %v311 = vpack.c.b16 %v289, %v288
      %v312 = vpack.c.b16 %v291, %v290
      %v313 = vpack.c.b16 %v293, %v292
      %v314 = vpack.c.b16 %v295, %v294
      %v315 = vpack.c.b16 %v297, %v296
      %v316 = vpack.c.b16 %v299, %v298
      %v317 = vpack.c.b16 %v301, %v300
      %v322 = vunpack.c.l.b16 %v234
      %v323 = vunpack.c.l.b16 %v235
      %v324 = vunpack.c.l.b16 %v236
      %v325 = vunpack.c.l.b16 %v237
      %v326 = vpack.c.b16 %v323, %v322
      %v327 = vpack.c.b16 %v325, %v324
      %vm329 = vcmask 220160
      %v331 = vsel %vm329, %v302, 0
      %v334 = vsel %vm329, %v303, 0
      %v337 = vsel %vm329, %v304, 0
      %v340 = vsel %vm329, %v305, 0
      %v343 = vsel %vm329, %v306, 0
      %v346 = vsel %vm329, %v307, 0
      %v349 = vsel %vm329, %v308, 0
      %v352 = vsel %vm329, %v309, 0
      %v355 = vsel %vm329, %v310, 0
      %v358 = vsel %vm329, %v311, 0
      %v361 = vsel %vm329, %v312, 0
      %v364 = vsel %vm329, %v313, 0
      %v367 = vsel %vm329, %v314, 0
      %v370 = vsel %vm329, %v315, 0
      %v373 = vsel %vm329, %v316, 0
      %v376 = vsel %vm329, %v317, 0
      %vm378 = vcmask 1044480
      %vm379 = vcmask 1045504
      %v380 = vsel %vm378, 4294967295, 65535
      %v381 = vsel %vm379, %v380, 0
      %v383 = vand.u32 %v327, %v381
      %385 = vmatprep.subr.bf16.mxu0 0
      %386 = vmatpush1.bf16.msra.mxu0 %v326
      %387 = vmatprep.subr.bf16.mxu0 0
      %388 = vmatpush1.bf16.msra.mxu0 %v383
      %389 = vmatprep.subr.bf16.mxu0 0
      %390 = vmatpush1.bf16.msra.mxu0 0
      %391 = vmatprep.subr.bf16.mxu0 0
      %392 = vmatpush1.bf16.msra.mxu0 0
      %393 = vmatprep.subr.bf16.mxu0 0
      %394 = vmatpush1.bf16.msra.mxu0 0
      %395 = vmatprep.subr.bf16.mxu0 0
      %396 = vmatpush1.bf16.msra.mxu0 0
      %397 = vmatprep.subr.bf16.mxu0 0
      %398 = vmatpush1.bf16.msra.mxu0 0
      %399 = vmatprep.subr.bf16.mxu0 0
      %400 = vmatpush1.bf16.msra.mxu0 0
      %401 = vmatprep.subr.bf16.mxu0 0
      %402 = vmatpush1.bf16.msra.mxu0 0
      %403 = vmatprep.subr.bf16.mxu0 0
      %404 = vmatpush1.bf16.msra.mxu0 0
      %405 = vmatprep.subr.bf16.mxu0 0
      %406 = vmatpush1.bf16.msra.mxu0 0
      %407 = vmatprep.subr.bf16.mxu0 0
      %408 = vmatpush1.bf16.msra.mxu0 0
      %409 = vmatprep.subr.bf16.mxu0 0
      %410 = vmatpush1.bf16.msra.mxu0 0
      %411 = vmatprep.subr.bf16.mxu0 0
      %412 = vmatpush1.bf16.msra.mxu0 0
      %413 = vmatprep.subr.bf16.mxu0 0
      %414 = vmatpush1.bf16.msra.mxu0 0
      %415 = vmatprep.subr.bf16.mxu0 0
      %416 = vmatpush1.bf16.msra.mxu0 0
      %417 = vmatprep.mubr.bf16.mxu0 0
      %418 = vmatmul.mubr.bf16.gmra.mrb[0].mxu0 %v331
      %v419 = vpop.f32.mrb[0].mxu0
      %v420 = vadd.f32 0.0, %v419
      %v421 = vpop.f32.mrb[0].mxu0
      %v422 = vpop.f32.mrb[0].mxu0
      %v423 = vadd.f32 0.0, %v422
      %v424 = vpop.f32.mrb[0].mxu0
      %425 = vmatprep.mubr.bf16.mxu0 0
      %426 = vmatmul.mubr.bf16.gmra.mrb[0].mxu0 %v334
      %v427 = vpop.f32.mrb[0].mxu0
      %v428 = vadd.f32 0.0, %v427
      %v429 = vpop.f32.mrb[0].mxu0
      %v430 = vpop.f32.mrb[0].mxu0
      %v431 = vadd.f32 0.0, %v430
      %v432 = vpop.f32.mrb[0].mxu0
      %433 = vmatprep.mubr.bf16.mxu0 0
      %434 = vmatmul.mubr.bf16.gmra.mrb[0].mxu0 %v337
      %v435 = vpop.f32.mrb[0].mxu0
      %v436 = vadd.f32 0.0, %v435
      %v437 = vpop.f32.mrb[0].mxu0
      %v438 = vpop.f32.mrb[0].mxu0
      %v439 = vadd.f32 0.0, %v438
      %v440 = vpop.f32.mrb[0].mxu0
      %441 = vmatprep.mubr.bf16.mxu0 0
      %442 = vmatmul.mubr.bf16.gmra.mrb[0].mxu0 %v340
      %v443 = vpop.f32.mrb[0].mxu0
      %v444 = vadd.f32 0.0, %v443
      %v445 = vpop.f32.mrb[0].mxu0
      %v446 = vpop.f32.mrb[0].mxu0
      %v447 = vadd.f32 0.0, %v446
      %v448 = vpop.f32.mrb[0].mxu0
      %449 = vmatprep.mubr.bf16.mxu0 0
      %450 = vmatmul.mubr.bf16.gmra.mrb[0].mxu0 %v343
      %v451 = vpop.f32.mrb[0].mxu0
      %v452 = vadd.f32 0.0, %v451
      %v453 = vpop.f32.mrb[0].mxu0
      %v454 = vpop.f32.mrb[0].mxu0
      %v455 = vadd.f32 0.0, %v454
      %v456 = vpop.f32.mrb[0].mxu0
      %457 = vmatprep.mubr.bf16.mxu0 0
      %458 = vmatmul.mubr.bf16.gmra.mrb[0].mxu0 %v346
      %v459 = vpop.f32.mrb[0].mxu0
      %v460 = vadd.f32 0.0, %v459
      %v461 = vpop.f32.mrb[0].mxu0
      %v462 = vpop.f32.mrb[0].mxu0
      %v463 = vadd.f32 0.0, %v462
      %v464 = vpop.f32.mrb[0].mxu0
      %465 = vmatprep.mubr.bf16.mxu0 0
      %466 = vmatmul.mubr.bf16.gmra.mrb[0].mxu0 %v349
      %v467 = vpop.f32.mrb[0].mxu0
      %v468 = vadd.f32 0.0, %v467
      %v469 = vpop.f32.mrb[0].mxu0
      %v470 = vpop.f32.mrb[0].mxu0
      %v471 = vadd.f32 0.0, %v470
      %v472 = vpop.f32.mrb[0].mxu0
      %473 = vmatprep.mubr.bf16.mxu0 0
      %474 = vmatmul.mubr.bf16.gmra.mrb[0].mxu0 %v352
      %v475 = vpop.f32.mrb[0].mxu0
      %v476 = vadd.f32 0.0, %v475
      %v477 = vpop.f32.mrb[0].mxu0
      %v478 = vpop.f32.mrb[0].mxu0
      %v479 = vadd.f32 0.0, %v478
      %v480 = vpop.f32.mrb[0].mxu0
      %481 = vmatprep.mubr.bf16.mxu0 0
      %482 = vmatmul.mubr.bf16.gmra.mrb[0].mxu0 %v355
      %v483 = vpop.f32.mrb[0].mxu0
      %v484 = vadd.f32 0.0, %v483
      %v485 = vpop.f32.mrb[0].mxu0
      %v486 = vpop.f32.mrb[0].mxu0
      %v487 = vadd.f32 0.0, %v486
      %v488 = vpop.f32.mrb[0].mxu0
      %489 = vmatprep.mubr.bf16.mxu0 0
      %490 = vmatmul.mubr.bf16.gmra.mrb[0].mxu0 %v358
      %v491 = vpop.f32.mrb[0].mxu0
      %v492 = vadd.f32 0.0, %v491
      %v493 = vpop.f32.mrb[0].mxu0
      %v494 = vpop.f32.mrb[0].mxu0
      %v495 = vadd.f32 0.0, %v494
      %v496 = vpop.f32.mrb[0].mxu0
      %497 = vmatprep.mubr.bf16.mxu0 0
      %498 = vmatmul.mubr.bf16.gmra.mrb[0].mxu0 %v361
      %v499 = vpop.f32.mrb[0].mxu0
      %v500 = vadd.f32 0.0, %v499
      %v501 = vpop.f32.mrb[0].mxu0
      %v502 = vpop.f32.mrb[0].mxu0
      %v503 = vadd.f32 0.0, %v502
      %v504 = vpop.f32.mrb[0].mxu0
      %505 = vmatprep.mubr.bf16.mxu0 0
      %506 = vmatmul.mubr.bf16.gmra.mrb[0].mxu0 %v364
      %v507 = vpop.f32.mrb[0].mxu0
      %v508 = vadd.f32 0.0, %v507
      %v509 = vpop.f32.mrb[0].mxu0
      %v510 = vpop.f32.mrb[0].mxu0
      %v511 = vadd.f32 0.0, %v510
      %v512 = vpop.f32.mrb[0].mxu0
      %513 = vmatprep.mubr.bf16.mxu0 0
      %514 = vmatmul.mubr.bf16.gmra.mrb[0].mxu0 %v367
      %v515 = vpop.f32.mrb[0].mxu0
      %v516 = vadd.f32 0.0, %v515
      %v517 = vpop.f32.mrb[0].mxu0
      %v518 = vpop.f32.mrb[0].mxu0
      %v519 = vadd.f32 0.0, %v518
      %v520 = vpop.f32.mrb[0].mxu0
      %521 = vmatprep.mubr.bf16.mxu0 0
      %522 = vmatmul.mubr.bf16.gmra.mrb[0].mxu0 %v370
      %v523 = vpop.f32.mrb[0].mxu0
      %v524 = vadd.f32 0.0, %v523
      %v525 = vpop.f32.mrb[0].mxu0
      %v526 = vpop.f32.mrb[0].mxu0
      %v527 = vadd.f32 0.0, %v526
      %v528 = vpop.f32.mrb[0].mxu0
      %529 = vmatprep.mubr.bf16.mxu0 0
      %530 = vmatmul.mubr.bf16.gmra.mrb[0].mxu0 %v373
      %v531 = vpop.f32.mrb[0].mxu0
      %v532 = vadd.f32 0.0, %v531
      %v533 = vpop.f32.mrb[0].mxu0
      %v534 = vpop.f32.mrb[0].mxu0
      %v535 = vadd.f32 0.0, %v534
      %v536 = vpop.f32.mrb[0].mxu0
      %537 = vmatprep.mubr.bf16.mxu0 0
      %538 = vmatmul.mubr.bf16.gmra.mrb[0].mxu0 %v376
      %v539 = vpop.f32.mrb[0].mxu0
      %v540 = vadd.f32 0.0, %v539
      %v541 = vpop.f32.mrb[0].mxu0
      %v542 = vpop.f32.mrb[0].mxu0
      %v543 = vadd.f32 0.0, %v542
      %v544 = vpop.f32.mrb[0].mxu0
      %545 = vdwg.mxu0
      %v546 = vld [vmem:[%s2] sm:$0x1]
      %v548 = vlaneseq
      %v549 = vshrl.u32 %v548, 7
      %v550 = vsub.s32 0, %v549
      %v551 = vrot.slane %v546, %v550
      %v553 = vmul.f32 %v420, %v551
      %v554 = vmul.f32 %v423, %v551
      %v555 = vmul.f32 %v428, %v551
      %v556 = vmul.f32 %v431, %v551
      %v557 = vmul.f32 %v436, %v551
      %v558 = vmul.f32 %v439, %v551
      %v559 = vmul.f32 %v444, %v551
      %v560 = vmul.f32 %v447, %v551
      %v561 = vmul.f32 %v452, %v551
      %v562 = vmul.f32 %v455, %v551
      %v563 = vmul.f32 %v460, %v551
      %v564 = vmul.f32 %v463, %v551
      %v565 = vmul.f32 %v468, %v551
      %v566 = vmul.f32 %v471, %v551
      %v567 = vmul.f32 %v476, %v551
      %v568 = vmul.f32 %v479, %v551
      %v569 = vmul.f32 %v484, %v551
      %v570 = vmul.f32 %v487, %v551
      %v571 = vmul.f32 %v492, %v551
      %v572 = vmul.f32 %v495, %v551
      %v573 = vmul.f32 %v500, %v551
      %v574 = vmul.f32 %v503, %v551
      %v575 = vmul.f32 %v508, %v551
      %v576 = vmul.f32 %v511, %v551
      %v577 = vmul.f32 %v516, %v551
      %v578 = vmul.f32 %v519, %v551
      %v579 = vmul.f32 %v524, %v551
      %v580 = vmul.f32 %v527, %v551
      %v581 = vmul.f32 %v532, %v551
      %v582 = vmul.f32 %v535, %v551
      %v583 = vmul.f32 %v540, %v551
      %v584 = vmul.f32 %v543, %v551
      %v585 = vld [vmem:[%s3] sm:$0x1]
      %v587 = vlaneseq
      %v588 = vshrl.u32 %v587, 7
      %v589 = vsub.s32 0, %v588
      %v590 = vrot.slane %v585, %v589
      %v592 = vadd.f32 %v553, %v590
      %v593 = vadd.f32 %v554, %v590
      %v594 = vadd.f32 %v555, %v590
      %v595 = vadd.f32 %v556, %v590
      %v596 = vadd.f32 %v557, %v590
      %v597 = vadd.f32 %v558, %v590
      %v598 = vadd.f32 %v559, %v590
      %v599 = vadd.f32 %v560, %v590
      %v600 = vadd.f32 %v561, %v590
      %v601 = vadd.f32 %v562, %v590
      %v602 = vadd.f32 %v563, %v590
      %v603 = vadd.f32 %v564, %v590
      %v604 = vadd.f32 %v565, %v590
      %v605 = vadd.f32 %v566, %v590
      %v606 = vadd.f32 %v567, %v590
      %v607 = vadd.f32 %v568, %v590
      %v608 = vadd.f32 %v569, %v590
      %v609 = vadd.f32 %v570, %v590
      %v610 = vadd.f32 %v571, %v590
      %v611 = vadd.f32 %v572, %v590
      %v612 = vadd.f32 %v573, %v590
      %v613 = vadd.f32 %v574, %v590
      %v614 = vadd.f32 %v575, %v590
      %v615 = vadd.f32 %v576, %v590
      %v616 = vadd.f32 %v577, %v590
      %v617 = vadd.f32 %v578, %v590
      %v618 = vadd.f32 %v579, %v590
      %v619 = vadd.f32 %v580, %v590
      %v620 = vadd.f32 %v581, %v590
      %v621 = vadd.f32 %v582, %v590
      %v622 = vadd.f32 %v583, %v590
      %v623 = vadd.f32 %v584, %v590
      %v624 = vmax.f32 %v592, 0.0
      %v625 = vmax.f32 %v593, 0.0
      %v626 = vmax.f32 %v594, 0.0
      %v627 = vmax.f32 %v595, 0.0
      %v628 = vmax.f32 %v596, 0.0
      %v629 = vmax.f32 %v597, 0.0
      %v630 = vmax.f32 %v598, 0.0
      %v631 = vmax.f32 %v599, 0.0
      %v632 = vmax.f32 %v600, 0.0
      %v633 = vmax.f32 %v601, 0.0
      %v634 = vmax.f32 %v602, 0.0
      %v635 = vmax.f32 %v603, 0.0
      %v636 = vmax.f32 %v604, 0.0
      %v637 = vmax.f32 %v605, 0.0
      %v638 = vmax.f32 %v606, 0.0
      %v639 = vmax.f32 %v607, 0.0
      %v640 = vmax.f32 %v608, 0.0
      %v641 = vmax.f32 %v609, 0.0
      %v642 = vmax.f32 %v610, 0.0
      %v643 = vmax.f32 %v611, 0.0
      %v644 = vmax.f32 %v612, 0.0
      %v645 = vmax.f32 %v613, 0.0
      %v646 = vmax.f32 %v614, 0.0
      %v647 = vmax.f32 %v615, 0.0
      %v648 = vmax.f32 %v616, 0.0
      %v649 = vmax.f32 %v617, 0.0
      %v650 = vmax.f32 %v618, 0.0
      %v651 = vmax.f32 %v619, 0.0
      %v652 = vmax.f32 %v620, 0.0
      %v653 = vmax.f32 %v621, 0.0
      %v654 = vmax.f32 %v622, 0.0
      %v655 = vmax.f32 %v623, 0.0
      %v656 = vpack.c.bf16 %v625, %v624
      %v657 = vpack.c.bf16 %v627, %v626
      %v658 = vpack.c.bf16 %v629, %v628
      %v659 = vpack.c.bf16 %v631, %v630
      %v660 = vpack.c.bf16 %v633, %v632
      %v661 = vpack.c.bf16 %v635, %v634
      %v662 = vpack.c.bf16 %v637, %v636
      %v663 = vpack.c.bf16 %v639, %v638
      %v664 = vpack.c.bf16 %v641, %v640
      %v665 = vpack.c.bf16 %v643, %v642
      %v666 = vpack.c.bf16 %v645, %v644
      %v667 = vpack.c.bf16 %v647, %v646
      %v668 = vpack.c.bf16 %v649, %v648
      %v669 = vpack.c.bf16 %v651, %v650
      %v670 = vpack.c.bf16 %v653, %v652
      %v671 = vpack.c.bf16 %v655, %v654
      %v688 = vunpack.c.l.b16 %v656
      %v689 = vunpack.c.h.b16 %v656
      %v690 = vunpack.c.l.b16 %v657
      %v691 = vunpack.c.h.b16 %v657
      %v692 = vunpack.c.l.b16 %v658
      %v693 = vunpack.c.h.b16 %v658
      %v694 = vunpack.c.l.b16 %v659
      %v695 = vunpack.c.h.b16 %v659
      %v696 = vunpack.c.l.b16 %v660
      %v697 = vunpack.c.h.b16 %v660
      %v698 = vunpack.c.l.b16 %v661
      %v699 = vunpack.c.h.b16 %v661
      %v700 = vunpack.c.l.b16 %v662
      %v701 = vunpack.c.h.b16 %v662
      %v702 = vunpack.c.l.b16 %v663
      %v703 = vunpack.c.h.b16 %v663
      %v704 = vunpack.c.l.b16 %v664
      %v705 = vunpack.c.h.b16 %v664
      %v706 = vunpack.c.l.b16 %v665
      %v707 = vunpack.c.h.b16 %v665
      %v708 = vunpack.c.l.b16 %v666
      %v709 = vunpack.c.h.b16 %v666
      %v710 = vunpack.c.l.b16 %v667
      %v711 = vunpack.c.h.b16 %v667
      %v712 = vunpack.c.l.b16 %v668
      %v713 = vunpack.c.h.b16 %v668
      %v714 = vunpack.c.l.b16 %v669
      %v715 = vunpack.c.h.b16 %v669
      %v716 = vunpack.c.l.b16 %v670
      %v717 = vunpack.c.h.b16 %v670
      %v718 = vunpack.c.l.b16 %v671
      %v719 = vunpack.c.h.b16 %v671
      %v720 = vpack.c.b16 %v688, %v688
      %v721 = vpack.c.b16 %v689, %v689
      %v722 = vpack.c.b16 %v690, %v690
      %v723 = vpack.c.b16 %v691, %v691
      %v724 = vpack.c.b16 %v692, %v692
      %v725 = vpack.c.b16 %v693, %v693
      %v726 = vpack.c.b16 %v694, %v694
      %v727 = vpack.c.b16 %v695, %v695
      %v728 = vpack.c.b16 %v696, %v696
      %v729 = vpack.c.b16 %v697, %v697
      %v730 = vpack.c.b16 %v698, %v698
      %v731 = vpack.c.b16 %v699, %v699
      %v732 = vpack.c.b16 %v700, %v700
      %v733 = vpack.c.b16 %v701, %v701
      %v734 = vpack.c.b16 %v702, %v702
      %v735 = vpack.c.b16 %v703, %v703
      %v736 = vpack.c.b16 %v704, %v704
      %v737 = vpack.c.b16 %v705, %v705
      %v738 = vpack.c.b16 %v706, %v706
      %v739 = vpack.c.b16 %v707, %v707
      %v740 = vpack.c.b16 %v708, %v708
      %v741 = vpack.c.b16 %v709, %v709
      %v742 = vpack.c.b16 %v710, %v710
      %v743 = vpack.c.b16 %v711, %v711
      %v744 = vpack.c.b16 %v712, %v712
      %v745 = vpack.c.b16 %v713, %v713
      %v746 = vpack.c.b16 %v714, %v714
      %v747 = vpack.c.b16 %v715, %v715
      %v748 = vpack.c.b16 %v716, %v716
      %v749 = vpack.c.b16 %v717, %v717
      %v750 = vpack.c.b16 %v718, %v718
      %v751 = vpack.c.b16 %v719, %v719
      %vm784 = vcmask 257024
      %785 = vst.msk [vmem:[%s199] sm:$0xf] %vm784, %v720
      %786 = vst.msk [vmem:[%s199 + $0x4] sm:$0xf] %vm784, %v721
      %787 = vst.msk [vmem:[%s199 + $0x8] sm:$0xf] %vm784, %v722
      %788 = vst.msk [vmem:[%s199 + $0xc] sm:$0xf] %vm784, %v723
      %789 = vst.msk [vmem:[%s199 + $0x10] sm:$0xf] %vm784, %v724
      %790 = vst.msk [vmem:[%s199 + $0x14] sm:$0xf] %vm784, %v725
      %791 = vst.msk [vmem:[%s199 + $0x18] sm:$0xf] %vm784, %v726
      %792 = vst.msk [vmem:[%s199 + $0x1c] sm:$0xf] %vm784, %v727
      %793 = vst.msk [vmem:[%s199 + $0x20] sm:$0xf] %vm784, %v728
      %794 = vst.msk [vmem:[%s199 + $0x24] sm:$0xf] %vm784, %v729
      %795 = vst.msk [vmem:[%s199 + $0x28] sm:$0xf] %vm784, %v730
      %796 = vst.msk [vmem:[%s199 + $0x2c] sm:$0xf] %vm784, %v731
      %797 = vst.msk [vmem:[%s199 + $0x30] sm:$0xf] %vm784, %v732
      %798 = vst.msk [vmem:[%s199 + $0x34] sm:$0xf] %vm784, %v733
      %799 = vst.msk [vmem:[%s199 + $0x38] sm:$0xf] %vm784, %v734
      %800 = vst.msk [vmem:[%s199 + $0x3c] sm:$0xf] %vm784, %v735
      %801 = vst.msk [vmem:[%s199 + $0x40] sm:$0xf] %vm784, %v736
      %802 = vst.msk [vmem:[%s199 + $0x44] sm:$0xf] %vm784, %v737
      %803 = vst.msk [vmem:[%s199 + $0x48] sm:$0xf] %vm784, %v738
      %804 = vst.msk [vmem:[%s199 + $0x4c] sm:$0xf] %vm784, %v739
      %805 = vst.msk [vmem:[%s199 + $0x50] sm:$0xf] %vm784, %v740
      %806 = vst.msk [vmem:[%s199 + $0x54] sm:$0xf] %vm784, %v741
      %807 = vst.msk [vmem:[%s199 + $0x58] sm:$0xf] %vm784, %v742
      %808 = vst.msk [vmem:[%s199 + $0x5c] sm:$0xf] %vm784, %v743
      %809 = vst.msk [vmem:[%s199 + $0x60] sm:$0xf] %vm784, %v744
      %810 = vst.msk [vmem:[%s199 + $0x64] sm:$0xf] %vm784, %v745
      %811 = vst.msk [vmem:[%s199 + $0x68] sm:$0xf] %vm784, %v746
      %812 = vst.msk [vmem:[%s199 + $0x6c] sm:$0xf] %vm784, %v747
      %813 = vst.msk [vmem:[%s199 + $0x70] sm:$0xf] %vm784, %v748
      %814 = vst.msk [vmem:[%s199 + $0x74] sm:$0xf] %vm784, %v749
      %815 = vst.msk [vmem:[%s199 + $0x78] sm:$0xf] %vm784, %v750
      %816 = vst.msk [vmem:[%s199 + $0x7c] sm:$0xf] %vm784, %v751
      %s817 = smul.u32 32, %s15
      %p818 = scmp.lt.s32.totalorder %s817, 63
      %s819 = scalar_select %p818, %s817, 63
      %s820 = smul.addr %s819, 4
      %s821 = scalar_lea.vmem %s4, %s820
      // Predicated region
      $region37: #{resnet50vd_small_forward.4} parent=35 // pred_check
        %p822 = pneg %p122
      $region38: #{resnet50vd_small_forward.4} parent=35 // pred_check_branch
        %824 = sbr.rel (%p822) target = $region40
      $region39: #{resnet50vd_small_forward.4} parent=35 // pred_region
        %s825 = smul.u32 32, %s15
      $region40: #{resnet50vd_small_forward.4} parent=35 // pred_fallthru
        _
    $region36: #{resnet50vd_small_forward.4} parent=5 // pred_fallthru
      _
    %p826 = scmp.le.s32.totalorder 2, %s10
    // Predicated region
    $region41: #{resnet50vd_small_forward.4} parent=5 // pred_check
      %p827 = pneg %p826
    $region42: #{resnet50vd_small_forward.4} parent=5 // pred_check_branch
      %829 = sbr.rel (%p827) target = $region44
    $region43: #{resnet50vd_small_forward.4} parent=5 // pred_region
      %s830 = ssub.s32 %s10, 2
      // Predicated region
      $region45: #{resnet50vd_small_forward.4} parent=43 // pred_check
        %p831 = pneg %p128
      $region46: #{resnet50vd_small_forward.4} parent=43 // pred_check_branch
        %833 = sbr.rel (%p831) target = $region48
      $region47: #{resnet50vd_small_forward.4} parent=43 // pred_region
        %s834 = smul.u32 32, %s16
        %p835 = scmp.lt.s32.totalorder %s834, 63
        %s836 = scalar_select %p835, %s834, 63
        %s837 = smul.addr %s836, 4
        %s838 = scalar_lea.vmem %s4, %s837
      $region48: #{resnet50vd_small_forward.4} parent=43 // pred_fallthru
        _
    $region44: #{resnet50vd_small_forward.4} parent=5 // pred_fallthru
      _
  $region6: #{resnet50vd_small_forward.4} parent=0 // loop_footer
    %s14 = sadd.s32 1, %s10
  $region7: #{resnet50vd_small_forward.4} parent=0 // loop_footer_branch
    %9 = sbr.rel target = $region3
  $region8: #{resnet50vd_small_forward.4} parent=0 // loop_exit
    _

// kernel: resnet50vd_small_forward.5
$region0: #{resnet50vd_small_forward.5}
  #allocation0 [shape = 'u32[]', space=smem, size = 0x4, offset = 0x4, fixed_abs, tag = 'smem constant byte address 0x4 - core index']
  #allocation1 [shape = 'u32[144,128]{1,0:T(1,128)}', space=vmem, size = 0x12000, scoped, tag = 'internal scratch']
  %s0 = inlined_call_operand.vmem [shape: bf16[512,288], index: 0, kind: input, shape index: {}]
  %s1 = inlined_call_operand.vmem [shape: bf16[288,32], index: 1, kind: input, shape index: {}]
  %s2 = inlined_call_operand.vmem [shape: f32[1,32], index: 2, kind: input, shape index: {}]
  %s3 = inlined_call_operand.vmem [shape: f32[1,32], index: 3, kind: input, shape index: {}]
  %s4 = inlined_call_operand.vmem [shape: bf16[512,32], index: 4, kind: output, shape index: {}]
  %s5 = sld [smem:[#allocation0]]
  $region49: #{resnet50vd_small_forward.5} parent=0
    _
  %s7 = ssub.s32 1, %s5
  %s8 = scalar_select 0, %s7, %s5
  loop: start=0, step=1, limit=4
  $region2: #{resnet50vd_small_forward.5} parent=0 // loop_pre_header
    _
  $region3: #{resnet50vd_small_forward.5} parent=0 // loop_header
    %s10 = sphi 0, %s14
    %p11 = scmp.ge.s32.totalorder %s10, 4
    %s20 = sphi 0, %s22
    %s23 = sphi 0, %s20
    %s24 = sphi 0, %s23
    %s40 = sphi 0, %s24
    %s44 = sphi 0, %s44
    %s46 = sphi 0, %s44
    %s47 = sphi 0, %s46
    %s61 = sphi 0, %s47
    %s65 = sphi 0, %s65
    %s67 = sphi 0, %s65
    %s68 = sphi 0, %s67
    %s82 = sphi 0, %s68
    %s86 = sphi 0, %s86
    %s88 = sphi 0, %s86
    %s89 = sphi 0, %s88
    %s103 = sphi 0, %s89
    %s109 = sphi 0, %s111
    %s112 = sphi 0, %s109
    %s113 = sphi 0, %s112
    %s129 = sphi 0, %s113
  $region4: #{resnet50vd_small_forward.5} parent=0 // loop_header_branch
    %13 = sbr.rel (%p11) target = $region8
  $region5: #{resnet50vd_small_forward.5} parent=0 // loop_body
    %s15 = ssub.s32 %s10, 1
    %s16 = ssub.s32 %s10, 2
    %s17 = sadd.s32 %s10, 1
    %s18 = ssub.s32 %s10, %s17
    %p19 = scmp.eq.s32.totalorder %s18, 0
    %s21 = sadd.s32 %s20, 1
    %s22 = scalar_select %p19, %s20, %s21
    %p25 = pneg %p19
    %p26 = scmp.eq.s32.totalorder %s10, 1
    %p27 = por %p25, %p26
    %p28 = scmp.ne.s32.totalorder %s20, %s23
    %p29 = scmp.eq.s32.totalorder %s10, 0
    %p30 = por %p28, %p29
    %p31 = scmp.ne.s32.totalorder %s20, %s23
    %p32 = scmp.eq.s32.totalorder %s15, 1
    %p33 = por %p31, %p32
    %p34 = scmp.ne.s32.totalorder %s23, %s24
    %p35 = scmp.eq.s32.totalorder %s15, 0
    %p36 = por %p34, %p35
    %p37 = scmp.ne.s32.totalorder %s23, %s24
    %p38 = scmp.eq.s32.totalorder %s16, 1
    %p39 = por %p37, %p38
    %p41 = scmp.ne.s32.totalorder %s24, %s40
    %p42 = scmp.eq.s32.totalorder %s16, 0
    %p43 = por %p41, %p42
    %s45 = sadd.s32 %s44, 1
    %p48 = scmp.eq.s32.totalorder %s10, 1
    %p49 = scmp.ne.s32.totalorder %s44, %s46
    %p50 = scmp.eq.s32.totalorder %s10, 0
    %p51 = por %p49, %p50
    %p52 = scmp.ne.s32.totalorder %s44, %s46
    %p53 = scmp.eq.s32.totalorder %s15, 1
    %p54 = por %p52, %p53
    %p55 = scmp.ne.s32.totalorder %s46, %s47
    %p56 = scmp.eq.s32.totalorder %s15, 0
    %p57 = por %p55, %p56
    %p58 = scmp.ne.s32.totalorder %s46, %s47
    %p59 = scmp.eq.s32.totalorder %s16, 1
    %p60 = por %p58, %p59
    %p62 = scmp.ne.s32.totalorder %s47, %s61
    %p63 = scmp.eq.s32.totalorder %s16, 0
    %p64 = por %p62, %p63
    %s66 = sadd.s32 %s65, 1
    %p69 = scmp.eq.s32.totalorder %s10, 1
    %p70 = scmp.ne.s32.totalorder %s65, %s67
    %p71 = scmp.eq.s32.totalorder %s10, 0
    %p72 = por %p70, %p71
    %p73 = scmp.ne.s32.totalorder %s65, %s67
    %p74 = scmp.eq.s32.totalorder %s15, 1
    %p75 = por %p73, %p74
    %p76 = scmp.ne.s32.totalorder %s67, %s68
    %p77 = scmp.eq.s32.totalorder %s15, 0
    %p78 = por %p76, %p77
    %p79 = scmp.ne.s32.totalorder %s67, %s68
    %p80 = scmp.eq.s32.totalorder %s16, 1
    %p81 = por %p79, %p80
    %p83 = scmp.ne.s32.totalorder %s68, %s82
    %p84 = scmp.eq.s32.totalorder %s16, 0
    %p85 = por %p83, %p84
    %s87 = sadd.s32 %s86, 1
    %p90 = scmp.eq.s32.totalorder %s10, 1
    %p91 = scmp.ne.s32.totalorder %s86, %s88
    %p92 = scmp.eq.s32.totalorder %s10, 0
    %p93 = por %p91, %p92
    %p94 = scmp.ne.s32.totalorder %s86, %s88
    %p95 = scmp.eq.s32.totalorder %s15, 1
    %p96 = por %p94, %p95
    %p97 = scmp.ne.s32.totalorder %s88, %s89
    %p98 = scmp.eq.s32.totalorder %s15, 0
    %p99 = por %p97, %p98
    %p100 = scmp.ne.s32.totalorder %s88, %s89
    %p101 = scmp.eq.s32.totalorder %s16, 1
    %p102 = por %p100, %p101
    %p104 = scmp.ne.s32.totalorder %s89, %s103
    %p105 = scmp.eq.s32.totalorder %s16, 0
    %p106 = por %p104, %p105
    %s107 = ssub.s32 %s10, %s17
    %p108 = scmp.eq.s32.totalorder %s107, 0
    %s110 = sadd.s32 %s109, 1
    %s111 = scalar_select %p108, %s109, %s110
    %p114 = pneg %p108
    %p115 = scmp.eq.s32.totalorder %s10, 1
    %p116 = por %p114, %p115
    %p117 = scmp.ne.s32.totalorder %s109, %s112
    %p118 = scmp.eq.s32.totalorder %s10, 0
    %p119 = por %p117, %p118
    %p120 = scmp.ne.s32.totalorder %s109, %s112
    %p121 = scmp.eq.s32.totalorder %s15, 1
    %p122 = por %p120, %p121
    %p123 = scmp.ne.s32.totalorder %s112, %s113
    %p124 = scmp.eq.s32.totalorder %s15, 0
    %p125 = por %p123, %p124
    %p126 = scmp.ne.s32.totalorder %s112, %s113
    %p127 = scmp.eq.s32.totalorder %s16, 1
    %p128 = por %p126, %p127
    %p130 = scmp.ne.s32.totalorder %s113, %s129
    %p131 = scmp.eq.s32.totalorder %s16, 0
    %p132 = por %p130, %p131
    %p133 = scmp.le.s32.totalorder 1, %s10
    %p134 = scmp.lt.s32.totalorder %s10, 3
    %p135 = pnand %p133, %p134
    %p136 = pneg %p135
    // Predicated region
    $region9: #{resnet50vd_small_forward.5} parent=5 // pred_check
      _
    $region10: #{resnet50vd_small_forward.5} parent=5 // pred_check_branch
      %138 = sbr.rel (%p135) target = $region12
    $region11: #{resnet50vd_small_forward.5} parent=5 // pred_region
      %s139 = ssub.s32 %s10, 1
      // Predicated region
      $region13: #{resnet50vd_small_forward.5} parent=11 // pred_check
        %p140 = pneg %p57
      $region14: #{resnet50vd_small_forward.5} parent=11 // pred_check_branch
        %142 = sbr.rel (%p140) target = $region16
      $region15: #{resnet50vd_small_forward.5} parent=11 // pred_region
        _
      $region16: #{resnet50vd_small_forward.5} parent=11 // pred_fallthru
        _
      // Predicated region
      $region17: #{resnet50vd_small_forward.5} parent=11 // pred_check
        %p143 = pneg %p78
      $region18: #{resnet50vd_small_forward.5} parent=11 // pred_check_branch
        %145 = sbr.rel (%p143) target = $region20
      $region19: #{resnet50vd_small_forward.5} parent=11 // pred_region
        _
      $region20: #{resnet50vd_small_forward.5} parent=11 // pred_fallthru
        _
      // Predicated region
      $region21: #{resnet50vd_small_forward.5} parent=11 // pred_check
        %p146 = pneg %p99
      $region22: #{resnet50vd_small_forward.5} parent=11 // pred_check_branch
        %148 = sbr.rel (%p146) target = $region24
      $region23: #{resnet50vd_small_forward.5} parent=11 // pred_region
        _
      $region24: #{resnet50vd_small_forward.5} parent=11 // pred_fallthru
        _
    $region12: #{resnet50vd_small_forward.5} parent=5 // pred_fallthru
      _
    %p149 = scmp.lt.s32.totalorder %s10, 2
    // Predicated region
    $region25: #{resnet50vd_small_forward.5} parent=5 // pred_check
      %p150 = pneg %p149
    $region26: #{resnet50vd_small_forward.5} parent=5 // pred_check_branch
      %152 = sbr.rel (%p150) target = $region28
    $region27: #{resnet50vd_small_forward.5} parent=5 // pred_region
      // Predicated region
      $region29: #{resnet50vd_small_forward.5} parent=27 // pred_check
        %p153 = pneg %p30
      $region30: #{resnet50vd_small_forward.5} parent=27 // pred_check_branch
        %155 = sbr.rel (%p153) target = $region32
      $region31: #{resnet50vd_small_forward.5} parent=27 // pred_region
        %s156 = smul.u32 32, %s10
        %p157 = scmp.lt.s32.totalorder %s156, 63
        %s158 = scalar_select %p157, %s156, 63
        %s159 = smul.addr %s158, 3
        %s160 = smul.addr %s159, 4
        %s161 = scalar_lea.vmem %s0, %s160
        %s162 = smul.u32 32, %s10
      $region32: #{resnet50vd_small_forward.5} parent=27 // pred_fallthru
        _
    $region28: #{resnet50vd_small_forward.5} parent=5 // pred_fallthru
      _
    %p163 = scmp.le.s32.totalorder 1, %s10
    %p164 = scmp.lt.s32.totalorder %s10, 3
    %p165 = pnand %p163, %p164
    %p166 = pneg %p165
    // Predicated region
    $region33: #{resnet50vd_small_forward.5} parent=5 // pred_check
      _
    $region34: #{resnet50vd_small_forward.5} parent=5 // pred_check_branch
      %168 = sbr.rel (%p165) target = $region36
    $region35: #{resnet50vd_small_forward.5} parent=5 // pred_region
      %s169 = ssub.s32 %s10, 1
      %s170 = smul.u32 32, %s15
      %p171 = scmp.lt.s32.totalorder %s170, 63
      %s172 = scalar_select %p171, %s170, 63
      %s173 = smul.addr %s172, 3
      %s174 = smul.addr %s173, 4
      %s175 = scalar_lea.vmem %s0, %s174
      %p176 = pneg %p36
      %p177 = pneg %p33
      %p178 = pneg %p57
      %p179 = pneg %p54
      %p180 = pneg %p78
      %p181 = pneg %p75
      %p182 = pneg %p99
      %p183 = pneg %p96
      %p184 = pneg %p125
      %p185 = pneg %p122
      %s186 = smul.u32 32, %s15
      %p187 = scmp.lt.s32.totalorder %s186, 63
      %s188 = scalar_select %p187, %s186, 63
      %s189 = smul.addr %s188, 4
      %s190 = scalar_lea.vmem %s4, %s189
      %s191 = smul.u32 32, %s15
      %p192 = scmp.lt.s32.totalorder %s191, 63
      %s193 = scalar_select %p192, %s191, 63
      %s194 = smul.addr %s193, 3
      %s195 = smul.addr %s194, 4
      %s196 = scalar_lea.vmem %s0, %s195
      %s197 = smul.u32 32, %s15
      %s198 = smul.u32 32, %s15
      %p199 = scmp.lt.s32.totalorder %s198, 63
      %s200 = scalar_select %p199, %s198, 63
      %s201 = smul.addr %s200, 4
      %s202 = scalar_lea.vmem %s4, %s201
      %s203 = smul.u32 32, %s15
      %v205 = vld [vmem:[%s196] sm:$0xff]
      %v206 = vld [vmem:[%s196 + $0x8] sm:$0xf]
      %v207 = vld [vmem:[%s196 + $0xc] sm:$0xff]
      %v208 = vld [vmem:[%s196 + $0x14] sm:$0xf]
      %v209 = vld [vmem:[%s196 + $0x18] sm:$0xff]
      %v210 = vld [vmem:[%s196 + $0x20] sm:$0xf]
      %v211 = vld [vmem:[%s196 + $0x24] sm:$0xff]
      %v212 = vld [vmem:[%s196 + $0x2c] sm:$0xf]
      %v213 = vld [vmem:[%s196 + $0x30] sm:$0xff]
      %v214 = vld [vmem:[%s196 + $0x38] sm:$0xf]
      %v215 = vld [vmem:[%s196 + $0x3c] sm:$0xff]
      %v216 = vld [vmem:[%s196 + $0x44] sm:$0xf]
      %v217 = vld [vmem:[%s196 + $0x48] sm:$0xff]
      %v218 = vld [vmem:[%s196 + $0x50] sm:$0xf]
      %v219 = vld [vmem:[%s196 + $0x54] sm:$0xff]
      %v220 = vld [vmem:[%s196 + $0x5c] sm:$0xf]
      %v221 = vld [vmem:[%s196 + $0x60] sm:$0xff]
      %v222 = vld [vmem:[%s196 + $0x68] sm:$0xf]
      %v223 = vld [vmem:[%s196 + $0x6c] sm:$0xff]
      %v224 = vld [vmem:[%s196 + $0x74] sm:$0xf]
      %v225 = vld [vmem:[%s196 + $0x78] sm:$0xff]
      %v226 = vld [vmem:[%s196 + $0x80] sm:$0xf]
      %v227 = vld [vmem:[%s196 + $0x84] sm:$0xff]
      %v228 = vld [vmem:[%s196 + $0x8c] sm:$0xf]
      %v229 = vld [vmem:[%s196 + $0x90] sm:$0xff]
      %v230 = vld [vmem:[%s196 + $0x98] sm:$0xf]
      %v231 = vld [vmem:[%s196 + $0x9c] sm:$0xff]
      %v232 = vld [vmem:[%s196 + $0xa4] sm:$0xf]
      %v233 = vld [vmem:[%s196 + $0xa8] sm:$0xff]
      %v234 = vld [vmem:[%s196 + $0xb0] sm:$0xf]
      %v235 = vld [vmem:[%s196 + $0xb4] sm:$0xff]
      %v236 = vld [vmem:[%s196 + $0xbc] sm:$0xf]
      %v237 = vld [vmem:[%s196 + $0xc0] sm:$0xff]
      %v238 = vld [vmem:[%s196 + $0xc8] sm:$0xf]
      %v239 = vld [vmem:[%s196 + $0xcc] sm:$0xff]
      %v240 = vld [vmem:[%s196 + $0xd4] sm:$0xf]
      %v241 = vld [vmem:[%s196 + $0xd8] sm:$0xff]
      %v242 = vld [vmem:[%s196 + $0xe0] sm:$0xf]
      %v243 = vld [vmem:[%s196 + $0xe4] sm:$0xff]
      %v244 = vld [vmem:[%s196 + $0xec] sm:$0xf]
      %v245 = vld [vmem:[%s196 + $0xf0] sm:$0xff]
      %v246 = vld [vmem:[%s196 + $0xf8] sm:$0xf]
      %v247 = vld [vmem:[%s196 + $0xfc] sm:$0xff]
      %v248 = vld [vmem:[%s196 + $0x104] sm:$0xf]
      %v249 = vld [vmem:[%s196 + $0x108] sm:$0xff]
      %v250 = vld [vmem:[%s196 + $0x110] sm:$0xf]
      %v251 = vld [vmem:[%s196 + $0x114] sm:$0xff]
      %v252 = vld [vmem:[%s196 + $0x11c] sm:$0xf]
      %v253 = vld [vmem:[%s196 + $0x120] sm:$0xff]
      %v254 = vld [vmem:[%s196 + $0x128] sm:$0xf]
      %v255 = vld [vmem:[%s196 + $0x12c] sm:$0xff]
      %v256 = vld [vmem:[%s196 + $0x134] sm:$0xf]
      %v257 = vld [vmem:[%s196 + $0x138] sm:$0xff]
      %v258 = vld [vmem:[%s196 + $0x140] sm:$0xf]
      %v259 = vld [vmem:[%s196 + $0x144] sm:$0xff]
      %v260 = vld [vmem:[%s196 + $0x14c] sm:$0xf]
      %v261 = vld [vmem:[%s196 + $0x150] sm:$0xff]
      %v262 = vld [vmem:[%s196 + $0x158] sm:$0xf]
      %v263 = vld [vmem:[%s196 + $0x15c] sm:$0xff]
      %v264 = vld [vmem:[%s196 + $0x164] sm:$0xf]
      %v265 = vld [vmem:[%s196 + $0x168] sm:$0xff]
      %v266 = vld [vmem:[%s196 + $0x170] sm:$0xf]
      %v267 = vld [vmem:[%s196 + $0x174] sm:$0xff]
      %v268 = vld [vmem:[%s196 + $0x17c] sm:$0xf]
      %v269 = vld [vmem:[%s1] sm:$0xf]
      %v270 = vld [vmem:[%s1 + $0x4] sm:$0xf]
      %v271 = vld [vmem:[%s1 + $0x8] sm:$0xf]
      %v272 = vld [vmem:[%s1 + $0xc] sm:$0xf]
      %v273 = vld [vmem:[%s1 + $0x10] sm:$0xf]
      %v274 = vld [vmem:[%s1 + $0x14] sm:$0xf]
      %v275 = vld [vmem:[%s1 + $0x18] sm:$0xf]
      %v276 = vld [vmem:[%s1 + $0x1c] sm:$0xf]
      %v277 = vld [vmem:[%s1 + $0x20] sm:$0xf]
      %v278 = vld [vmem:[%s1 + $0x24] sm:$0xf]
      %v279 = vld [vmem:[%s1 + $0x28] sm:$0xf]
      %v280 = vld [vmem:[%s1 + $0x2c] sm:$0xf]
      %v281 = vld [vmem:[%s1 + $0x30] sm:$0xf]
      %v282 = vld [vmem:[%s1 + $0x34] sm:$0xf]
      %v283 = vld [vmem:[%s1 + $0x38] sm:$0xf]
      %v284 = vld [vmem:[%s1 + $0x3c] sm:$0xf]
      %v285 = vld [vmem:[%s1 + $0x40] sm:$0xf]
      %v286 = vld [vmem:[%s1 + $0x44] sm:$0xf]
      %v287 = vld [vmem:[%s1 + $0x48] sm:$0xf]
      %v288 = vld [vmem:[%s1 + $0x4c] sm:$0xf]
      %v289 = vld [vmem:[%s1 + $0x50] sm:$0xf]
      %v290 = vld [vmem:[%s1 + $0x54] sm:$0xf]
      %v291 = vld [vmem:[%s1 + $0x58] sm:$0xf]
      %v292 = vld [vmem:[%s1 + $0x5c] sm:$0xf]
      %v293 = vld [vmem:[%s1 + $0x60] sm:$0xf]
      %v294 = vld [vmem:[%s1 + $0x64] sm:$0xf]
      %v295 = vld [vmem:[%s1 + $0x68] sm:$0xf]
      %v296 = vld [vmem:[%s1 + $0x6c] sm:$0xf]
      %v297 = vld [vmem:[%s1 + $0x70] sm:$0xf]
      %v298 = vld [vmem:[%s1 + $0x74] sm:$0xf]
      %v299 = vld [vmem:[%s1 + $0x78] sm:$0xf]
      %v300 = vld [vmem:[%s1 + $0x7c] sm:$0xf]
      %v301 = vld [vmem:[%s1 + $0x80] sm:$0xf]
      %v302 = vld [vmem:[%s1 + $0x84] sm:$0xf]
      %v303 = vld [vmem:[%s1 + $0x88] sm:$0xf]
      %v304 = vld [vmem:[%s1 + $0x8c] sm:$0xf]
      %v369 = vunpack.c.l.b16 %v205
      %v370 = vunpack.c.h.b16 %v205
      %v371 = vunpack.c.l.b16 %v206
      %v372 = vunpack.c.l.b16 %v207
      %v373 = vunpack.c.h.b16 %v207
      %v374 = vunpack.c.l.b16 %v208
      %v375 = vunpack.c.l.b16 %v209
      %v376 = vunpack.c.h.b16 %v209
      %v377 = vunpack.c.l.b16 %v210
      %v378 = vunpack.c.l.b16 %v211
      %v379 = vunpack.c.h.b16 %v211
      %v380 = vunpack.c.l.b16 %v212
      %v381 = vunpack.c.l.b16 %v213
      %v382 = vunpack.c.h.b16 %v213
      %v383 = vunpack.c.l.b16 %v214
      %v384 = vunpack.c.l.b16 %v215
      %v385 = vunpack.c.h.b16 %v215
      %v386 = vunpack.c.l.b16 %v216
      %v387 = vunpack.c.l.b16 %v217
      %v388 = vunpack.c.h.b16 %v217
      %v389 = vunpack.c.l.b16 %v218
      %v390 = vunpack.c.l.b16 %v219
      %v391 = vunpack.c.h.b16 %v219
      %v392 = vunpack.c.l.b16 %v220
      %v393 = vunpack.c.l.b16 %v221
      %v394 = vunpack.c.h.b16 %v221
      %v395 = vunpack.c.l.b16 %v222
      %v396 = vunpack.c.l.b16 %v223
      %v397 = vunpack.c.h.b16 %v223
      %v398 = vunpack.c.l.b16 %v224
      %v399 = vunpack.c.l.b16 %v225
      %v400 = vunpack.c.h.b16 %v225
      %v401 = vunpack.c.l.b16 %v226
      %v402 = vunpack.c.l.b16 %v227
      %v403 = vunpack.c.h.b16 %v227
      %v404 = vunpack.c.l.b16 %v228
      %v405 = vunpack.c.l.b16 %v229
      %v406 = vunpack.c.h.b16 %v229
      %v407 = vunpack.c.l.b16 %v230
      %v408 = vunpack.c.l.b16 %v231
      %v409 = vunpack.c.h.b16 %v231
      %v410 = vunpack.c.l.b16 %v232
      %v411 = vunpack.c.l.b16 %v233
      %v412 = vunpack.c.h.b16 %v233
      %v413 = vunpack.c.l.b16 %v234
      %v414 = vunpack.c.l.b16 %v235
      %v415 = vunpack.c.h.b16 %v235
      %v416 = vunpack.c.l.b16 %v236
      %v417 = vunpack.c.l.b16 %v237
      %v418 = vunpack.c.h.b16 %v237
      %v419 = vunpack.c.l.b16 %v238
      %v420 = vunpack.c.l.b16 %v239
      %v421 = vunpack.c.h.b16 %v239
      %v422 = vunpack.c.l.b16 %v240
      %v423 = vunpack.c.l.b16 %v241
      %v424 = vunpack.c.h.b16 %v241
      %v425 = vunpack.c.l.b16 %v242
      %v426 = vunpack.c.l.b16 %v243
      %v427 = vunpack.c.h.b16 %v243
      %v428 = vunpack.c.l.b16 %v244
      %v429 = vunpack.c.l.b16 %v245
      %v430 = vunpack.c.h.b16 %v245
      %v431 = vunpack.c.l.b16 %v246
      %v432 = vunpack.c.l.b16 %v247
      %v433 = vunpack.c.h.b16 %v247
      %v434 = vunpack.c.l.b16 %v248
      %v435 = vunpack.c.l.b16 %v249
      %v436 = vunpack.c.h.b16 %v249
      %v437 = vunpack.c.l.b16 %v250
      %v438 = vunpack.c.l.b16 %v251
      %v439 = vunpack.c.h.b16 %v251
      %v440 = vunpack.c.l.b16 %v252
      %v441 = vunpack.c.l.b16 %v253
      %v442 = vunpack.c.h.b16 %v253
      %v443 = vunpack.c.l.b16 %v254
      %v444 = vunpack.c.l.b16 %v255
      %v445 = vunpack.c.h.b16 %v255
      %v446 = vunpack.c.l.b16 %v256
      %v447 = vunpack.c.l.b16 %v257
      %v448 = vunpack.c.h.b16 %v257
      %v449 = vunpack.c.l.b16 %v258
      %v450 = vunpack.c.l.b16 %v259
      %v451 = vunpack.c.h.b16 %v259
      %v452 = vunpack.c.l.b16 %v260
      %v453 = vunpack.c.l.b16 %v261
      %v454 = vunpack.c.h.b16 %v261
      %v455 = vunpack.c.l.b16 %v262
      %v456 = vunpack.c.l.b16 %v263
      %v457 = vunpack.c.h.b16 %v263
      %v458 = vunpack.c.l.b16 %v264
      %v459 = vunpack.c.l.b16 %v265
      %v460 = vunpack.c.h.b16 %v265
      %v461 = vunpack.c.l.b16 %v266
      %v462 = vunpack.c.l.b16 %v267
      %v463 = vunpack.c.h.b16 %v267
      %v464 = vunpack.c.l.b16 %v268
      %v465 = vpack.c.b16 %v372, %v369
      %v466 = vpack.c.b16 %v373, %v370
      %v467 = vpack.c.b16 %v374, %v371
      %v468 = vpack.c.b16 %v378, %v375
      %v469 = vpack.c.b16 %v379, %v376
      %v470 = vpack.c.b16 %v380, %v377
      %v471 = vpack.c.b16 %v384, %v381
      %v472 = vpack.c.b16 %v385, %v382
      %v473 = vpack.c.b16 %v386, %v383
      %v474 = vpack.c.b16 %v390, %v387
      %v475 = vpack.c.b16 %v391, %v388
      %v476 = vpack.c.b16 %v392, %v389
      %v477 = vpack.c.b16 %v396, %v393
      %v478 = vpack.c.b16 %v397, %v394
      %v479 = vpack.c.b16 %v398, %v395
      %v480 = vpack.c.b16 %v402, %v399
      %v481 = vpack.c.b16 %v403, %v400
      %v482 = vpack.c.b16 %v404, %v401
      %v483 = vpack.c.b16 %v408, %v405
      %v484 = vpack.c.b16 %v409, %v406
      %v485 = vpack.c.b16 %v410, %v407
      %v486 = vpack.c.b16 %v414, %v411
      %v487 = vpack.c.b16 %v415, %v412
      %v488 = vpack.c.b16 %v416, %v413
      %v489 = vpack.c.b16 %v420, %v417
      %v490 = vpack.c.b16 %v421, %v418
      %v491 = vpack.c.b16 %v422, %v419
      %v492 = vpack.c.b16 %v426, %v423
      %v493 = vpack.c.b16 %v427, %v424
      %v494 = vpack.c.b16 %v428, %v425
      %v495 = vpack.c.b16 %v432, %v429
      %v496 = vpack.c.b16 %v433, %v430
      %v497 = vpack.c.b16 %v434, %v431
      %v498 = vpack.c.b16 %v438, %v435
      %v499 = vpack.c.b16 %v439, %v436
      %v500 = vpack.c.b16 %v440, %v437
      %v501 = vpack.c.b16 %v444, %v441
      %v502 = vpack.c.b16 %v445, %v442
      %v503 = vpack.c.b16 %v446, %v443
      %v504 = vpack.c.b16 %v450, %v447
      %v505 = vpack.c.b16 %v451, %v448
      %v506 = vpack.c.b16 %v452, %v449
      %v507 = vpack.c.b16 %v456, %v453
      %v508 = vpack.c.b16 %v457, %v454
      %v509 = vpack.c.b16 %v458, %v455
      %v510 = vpack.c.b16 %v462, %v459
      %v511 = vpack.c.b16 %v463, %v460
      %v512 = vpack.c.b16 %v464, %v461
      %v581 = vunpack.c.l.b16 %v269
      %v582 = vunpack.c.l.b16 %v270
      %v583 = vunpack.c.l.b16 %v271
      %v584 = vunpack.c.l.b16 %v272
      %v585 = vunpack.c.l.b16 %v273
      %v586 = vunpack.c.l.b16 %v274
      %v587 = vunpack.c.l.b16 %v275
      %v588 = vunpack.c.l.b16 %v276
      %v589 = vunpack.c.l.b16 %v277
      %v590 = vunpack.c.l.b16 %v278
      %v591 = vunpack.c.l.b16 %v279
      %v592 = vunpack.c.l.b16 %v280
      %v593 = vunpack.c.l.b16 %v281
      %v594 = vunpack.c.l.b16 %v282
      %v595 = vunpack.c.l.b16 %v283
      %v596 = vunpack.c.l.b16 %v284
      %v597 = vunpack.c.l.b16 %v285
      %v598 = vunpack.c.l.b16 %v286
      %v599 = vunpack.c.l.b16 %v287
      %v600 = vunpack.c.l.b16 %v288
      %v601 = vunpack.c.l.b16 %v289
      %v602 = vunpack.c.l.b16 %v290
      %v603 = vunpack.c.l.b16 %v291
      %v604 = vunpack.c.l.b16 %v292
      %v605 = vunpack.c.l.b16 %v293
      %v606 = vunpack.c.l.b16 %v294
      %v607 = vunpack.c.l.b16 %v295
      %v608 = vunpack.c.l.b16 %v296
      %v609 = vunpack.c.l.b16 %v297
      %v610 = vunpack.c.l.b16 %v298
      %v611 = vunpack.c.l.b16 %v299
      %v612 = vunpack.c.l.b16 %v300
      %v613 = vunpack.c.l.b16 %v301
      %v614 = vunpack.c.l.b16 %v302
      %v615 = vunpack.c.l.b16 %v303
      %v616 = vunpack.c.l.b16 %v304
      %v617 = vpack.c.b16 %v582, %v581
      %v618 = vpack.c.b16 %v584, %v583
      %v619 = vpack.c.b16 %v586, %v585
      %v620 = vpack.c.b16 %v588, %v587
      %v621 = vpack.c.b16 %v590, %v589
      %v622 = vpack.c.b16 %v592, %v591
      %v623 = vpack.c.b16 %v594, %v593
      %v624 = vpack.c.b16 %v596, %v595
      %v625 = vpack.c.b16 %v598, %v597
      %v626 = vpack.c.b16 %v600, %v599
      %v627 = vpack.c.b16 %v602, %v601
      %v628 = vpack.c.b16 %v604, %v603
      %v629 = vpack.c.b16 %v606, %v605
      %v630 = vpack.c.b16 %v608, %v607
      %v631 = vpack.c.b16 %v610, %v609
      %v632 = vpack.c.b16 %v612, %v611
      %v633 = vpack.c.b16 %v614, %v613
      %v634 = vpack.c.b16 %v616, %v615
      %vm653 = vcmask 261120
      %v655 = vsel %vm653, %v467, 0
      %v658 = vsel %vm653, %v470, 0
      %v661 = vsel %vm653, %v473, 0
      %v664 = vsel %vm653, %v476, 0
      %v667 = vsel %vm653, %v479, 0
      %v670 = vsel %vm653, %v482, 0
      %v673 = vsel %vm653, %v485, 0
      %v676 = vsel %vm653, %v488, 0
      %v679 = vsel %vm653, %v491, 0
      %v682 = vsel %vm653, %v494, 0
      %v685 = vsel %vm653, %v497, 0
      %v688 = vsel %vm653, %v500, 0
      %v691 = vsel %vm653, %v503, 0
      %v694 = vsel %vm653, %v506, 0
      %v697 = vsel %vm653, %v509, 0
      %v700 = vsel %vm653, %v512, 0
      %702 = vmatprep.subr.bf16.mxu0 0
      %703 = vmatpush1.bf16.msra.mxu0 %v617
      %704 = vmatprep.subr.bf16.mxu0 0
      %705 = vmatpush1.bf16.msra.mxu0 %v618
      %706 = vmatprep.subr.bf16.mxu0 0
      %707 = vmatpush1.bf16.msra.mxu0 %v619
      %708 = vmatprep.subr.bf16.mxu0 0
      %709 = vmatpush1.bf16.msra.mxu0 %v620
      %710 = vmatprep.subr.bf16.mxu0 0
      %711 = vmatpush1.bf16.msra.mxu0 %v621
      %712 = vmatprep.subr.bf16.mxu0 0
      %713 = vmatpush1.bf16.msra.mxu0 %v622
      %714 = vmatprep.subr.bf16.mxu0 0
      %715 = vmatpush1.bf16.msra.mxu0 %v623
      %716 = vmatprep.subr.bf16.mxu0 0
      %717 = vmatpush1.bf16.msra.mxu0 %v624
      %718 = vmatprep.subr.bf16.mxu0 0
      %719 = vmatpush1.bf16.msra.mxu0 %v625
      %720 = vmatprep.subr.bf16.mxu0 0
      %721 = vmatpush1.bf16.msra.mxu0 %v626
      %722 = vmatprep.subr.bf16.mxu0 0
      %723 = vmatpush1.bf16.msra.mxu0 %v627
      %724 = vmatprep.subr.bf16.mxu0 0
      %725 = vmatpush1.bf16.msra.mxu0 %v628
      %726 = vmatprep.subr.bf16.mxu0 0
      %727 = vmatpush1.bf16.msra.mxu0 %v629
      %728 = vmatprep.subr.bf16.mxu0 0
      %729 = vmatpush1.bf16.msra.mxu0 %v630
      %730 = vmatprep.subr.bf16.mxu0 0
      %731 = vmatpush1.bf16.msra.mxu0 %v631
      %732 = vmatprep.subr.bf16.mxu0 0
      %733 = vmatpush1.bf16.msra.mxu0 %v632
      %734 = vmatprep.mubr.bf16.mxu0 %v466
      %735 = vmatmul.mubr.bf16.gmra.mrb[0].mxu0 %v465
      %v736 = vpop.f32.mrb[0].mxu0
      %v737 = vadd.f32 0.0, %v736
      %v738 = vpop.f32.mrb[0].mxu0
      %v739 = vpop.f32.mrb[0].mxu0
      %v740 = vadd.f32 0.0, %v739
      %v741 = vpop.f32.mrb[0].mxu0
      %742 = vmatprep.mubr.bf16.mxu0 %v469
      %743 = vmatmul.mubr.bf16.gmra.mrb[0].mxu0 %v468
      %v744 = vpop.f32.mrb[0].mxu0
      %v745 = vadd.f32 0.0, %v744
      %v746 = vpop.f32.mrb[0].mxu0
      %v747 = vpop.f32.mrb[0].mxu0
      %v748 = vadd.f32 0.0, %v747
      %v749 = vpop.f32.mrb[0].mxu0
      %750 = vmatprep.mubr.bf16.mxu0 %v472
      %751 = vmatmul.mubr.bf16.gmra.mrb[0].mxu0 %v471
      %v752 = vpop.f32.mrb[0].mxu0
      %v753 = vadd.f32 0.0, %v752
      %v754 = vpop.f32.mrb[0].mxu0
      %v755 = vpop.f32.mrb[0].mxu0
      %v756 = vadd.f32 0.0, %v755
      %v757 = vpop.f32.mrb[0].mxu0
      %758 = vmatprep.mubr.bf16.mxu0 %v475
      %759 = vmatmul.mubr.bf16.gmra.mrb[0].mxu0 %v474
      %v760 = vpop.f32.mrb[0].mxu0
      %v761 = vadd.f32 0.0, %v760
      %v762 = vpop.f32.mrb[0].mxu0
      %v763 = vpop.f32.mrb[0].mxu0
      %v764 = vadd.f32 0.0, %v763
      %v765 = vpop.f32.mrb[0].mxu0
      %766 = vmatprep.mubr.bf16.mxu0 %v478
      %767 = vmatmul.mubr.bf16.gmra.mrb[0].mxu0 %v477
      %v768 = vpop.f32.mrb[0].mxu0
      %v769 = vadd.f32 0.0, %v768
      %v770 = vpop.f32.mrb[0].mxu0
      %v771 = vpop.f32.mrb[0].mxu0
      %v772 = vadd.f32 0.0, %v771
      %v773 = vpop.f32.mrb[0].mxu0
      %774 = vmatprep.mubr.bf16.mxu0 %v481
      %775 = vmatmul.mubr.bf16.gmra.mrb[0].mxu0 %v480
      %v776 = vpop.f32.mrb[0].mxu0
      %v777 = vadd.f32 0.0, %v776
      %v778 = vpop.f32.mrb[0].mxu0
      %v779 = vpop.f32.mrb[0].mxu0
      %v780 = vadd.f32 0.0, %v779
      %v781 = vpop.f32.mrb[0].mxu0
      %782 = vmatprep.mubr.bf16.mxu0 %v484
      %783 = vmatmul.mubr.bf16.gmra.mrb[0].mxu0 %v483
      %v784 = vpop.f32.mrb[0].mxu0
      %v785 = vadd.f32 0.0, %v784
      %v786 = vpop.f32.mrb[0].mxu0
      %v787 = vpop.f32.mrb[0].mxu0
      %v788 = vadd.f32 0.0, %v787
      %v789 = vpop.f32.mrb[0].mxu0
      %790 = vmatprep.mubr.bf16.mxu0 %v487
      %791 = vmatmul.mubr.bf16.gmra.mrb[0].mxu0 %v486
      %v792 = vpop.f32.mrb[0].mxu0
      %v793 = vadd.f32 0.0, %v792
      %v794 = vpop.f32.mrb[0].mxu0
      %v795 = vpop.f32.mrb[0].mxu0
      %v796 = vadd.f32 0.0, %v795
      %v797 = vpop.f32.mrb[0].mxu0
      %798 = vmatprep.mubr.bf16.mxu0 %v490
      %799 = vmatmul.mubr.bf16.gmra.mrb[0].mxu0 %v489
      %v800 = vpop.f32.mrb[0].mxu0
      %v801 = vadd.f32 0.0, %v800
      %v802 = vpop.f32.mrb[0].mxu0
      %v803 = vpop.f32.mrb[0].mxu0
      %v804 = vadd.f32 0.0, %v803
      %v805 = vpop.f32.mrb[0].mxu0
      %806 = vmatprep.mubr.bf16.mxu0 %v493
      %807 = vmatmul.mubr.bf16.gmra.mrb[0].mxu0 %v492
      %v808 = vpop.f32.mrb[0].mxu0
      %v809 = vadd.f32 0.0, %v808
      %v810 = vpop.f32.mrb[0].mxu0
      %v811 = vpop.f32.mrb[0].mxu0
      %v812 = vadd.f32 0.0, %v811
      %v813 = vpop.f32.mrb[0].mxu0
      %814 = vmatprep.mubr.bf16.mxu0 %v496
      %815 = vmatmul.mubr.bf16.gmra.mrb[0].mxu0 %v495
      %v816 = vpop.f32.mrb[0].mxu0
      %v817 = vadd.f32 0.0, %v816
      %v818 = vpop.f32.mrb[0].mxu0
      %v819 = vpop.f32.mrb[0].mxu0
      %v820 = vadd.f32 0.0, %v819
      %v821 = vpop.f32.mrb[0].mxu0
      %822 = vmatprep.mubr.bf16.mxu0 %v499
      %823 = vmatmul.mubr.bf16.gmra.mrb[0].mxu0 %v498
      %v824 = vpop.f32.mrb[0].mxu0
      %v825 = vadd.f32 0.0, %v824
      %v826 = vpop.f32.mrb[0].mxu0
      %v827 = vpop.f32.mrb[0].mxu0
      %v828 = vadd.f32 0.0, %v827
      %v829 = vpop.f32.mrb[0].mxu0
      %830 = vmatprep.mubr.bf16.mxu0 %v502
      %831 = vmatmul.mubr.bf16.gmra.mrb[0].mxu0 %v501
      %v832 = vpop.f32.mrb[0].mxu0
      %v833 = vadd.f32 0.0, %v832
      %v834 = vpop.f32.mrb[0].mxu0
      %v835 = vpop.f32.mrb[0].mxu0
      %v836 = vadd.f32 0.0, %v835
      %v837 = vpop.f32.mrb[0].mxu0
      %838 = vmatprep.mubr.bf16.mxu0 %v505
      %839 = vmatmul.mubr.bf16.gmra.mrb[0].mxu0 %v504
      %v840 = vpop.f32.mrb[0].mxu0
      %v841 = vadd.f32 0.0, %v840
      %v842 = vpop.f32.mrb[0].mxu0
      %v843 = vpop.f32.mrb[0].mxu0
      %v844 = vadd.f32 0.0, %v843
      %v845 = vpop.f32.mrb[0].mxu0
      %846 = vmatprep.mubr.bf16.mxu0 %v508
      %847 = vmatmul.mubr.bf16.gmra.mrb[0].mxu0 %v507
      %v848 = vpop.f32.mrb[0].mxu0
      %v849 = vadd.f32 0.0, %v848
      %v850 = vpop.f32.mrb[0].mxu0
      %v851 = vpop.f32.mrb[0].mxu0
      %v852 = vadd.f32 0.0, %v851
      %v853 = vpop.f32.mrb[0].mxu0
      %854 = vmatprep.mubr.bf16.mxu0 %v511
      %855 = vmatmul.mubr.bf16.gmra.mrb[0].mxu0 %v510
      %v856 = vpop.f32.mrb[0].mxu0
      %v857 = vadd.f32 0.0, %v856
      %v858 = vpop.f32.mrb[0].mxu0
      %v859 = vpop.f32.mrb[0].mxu0
      %v860 = vadd.f32 0.0, %v859
      %v861 = vpop.f32.mrb[0].mxu0
      %862 = vdwg.mxu0
      %863 = vmatprep.subr.bf16.mxu0 0
      %864 = vmatpush1.bf16.msra.mxu0 %v633
      %865 = vmatprep.subr.bf16.mxu0 0
      %866 = vmatpush1.bf16.msra.mxu0 %v634
      %867 = vmatprep.subr.bf16.mxu0 0
      %868 = vmatpush1.bf16.msra.mxu0 0
      %869 = vmatprep.subr.bf16.mxu0 0
      %870 = vmatpush1.bf16.msra.mxu0 0
      %871 = vmatprep.subr.bf16.mxu0 0
      %872 = vmatpush1.bf16.msra.mxu0 0
      %873 = vmatprep.subr.bf16.mxu0 0
      %874 = vmatpush1.bf16.msra.mxu0 0
      %875 = vmatprep.subr.bf16.mxu0 0
      %876 = vmatpush1.bf16.msra.mxu0 0
      %877 = vmatprep.subr.bf16.mxu0 0
      %878 = vmatpush1.bf16.msra.mxu0 0
      %879 = vmatprep.subr.bf16.mxu0 0
      %880 = vmatpush1.bf16.msra.mxu0 0
      %881 = vmatprep.subr.bf16.mxu0 0
      %882 = vmatpush1.bf16.msra.mxu0 0
      %883 = vmatprep.subr.bf16.mxu0 0
      %884 = vmatpush1.bf16.msra.mxu0 0
      %885 = vmatprep.subr.bf16.mxu0 0
      %886 = vmatpush1.bf16.msra.mxu0 0
      %887 = vmatprep.subr.bf16.mxu0 0
      %888 = vmatpush1.bf16.msra.mxu0 0
      %889 = vmatprep.subr.bf16.mxu0 0
      %890 = vmatpush1.bf16.msra.mxu0 0
      %891 = vmatprep.subr.bf16.mxu0 0
      %892 = vmatpush1.bf16.msra.mxu0 0
      %893 = vmatprep.subr.bf16.mxu0 0
      %894 = vmatpush1.bf16.msra.mxu0 0
      %895 = vmatprep.mubr.bf16.mxu0 0
      %896 = vmatmul.mubr.bf16.gmra.mrb[0].mxu0 %v655
      %v897 = vpop.f32.mrb[0].mxu0
      %v898 = vadd.f32 %v737, %v897
      %v899 = vpop.f32.mrb[0].mxu0
      %v900 = vpop.f32.mrb[0].mxu0
      %v901 = vadd.f32 %v740, %v900
      %v902 = vpop.f32.mrb[0].mxu0
      %903 = vmatprep.mubr.bf16.mxu0 0
      %904 = vmatmul.mubr.bf16.gmra.mrb[0].mxu0 %v658
      %v905 = vpop.f32.mrb[0].mxu0
      %v906 = vadd.f32 %v745, %v905
      %v907 = vpop.f32.mrb[0].mxu0
      %v908 = vpop.f32.mrb[0].mxu0
      %v909 = vadd.f32 %v748, %v908
      %v910 = vpop.f32.mrb[0].mxu0
      %911 = vmatprep.mubr.bf16.mxu0 0
      %912 = vmatmul.mubr.bf16.gmra.mrb[0].mxu0 %v661
      %v913 = vpop.f32.mrb[0].mxu0
      %v914 = vadd.f32 %v753, %v913
      %v915 = vpop.f32.mrb[0].mxu0
      %v916 = vpop.f32.mrb[0].mxu0
      %v917 = vadd.f32 %v756, %v916
      %v918 = vpop.f32.mrb[0].mxu0
      %919 = vmatprep.mubr.bf16.mxu0 0
      %920 = vmatmul.mubr.bf16.gmra.mrb[0].mxu0 %v664
      %v921 = vpop.f32.mrb[0].mxu0
      %v922 = vadd.f32 %v761, %v921
      %v923 = vpop.f32.mrb[0].mxu0
      %v924 = vpop.f32.mrb[0].mxu0
      %v925 = vadd.f32 %v764, %v924
      %v926 = vpop.f32.mrb[0].mxu0
      %927 = vmatprep.mubr.bf16.mxu0 0
      %928 = vmatmul.mubr.bf16.gmra.mrb[0].mxu0 %v667
      %v929 = vpop.f32.mrb[0].mxu0
      %v930 = vadd.f32 %v769, %v929
      %v931 = vpop.f32.mrb[0].mxu0
      %v932 = vpop.f32.mrb[0].mxu0
      %v933 = vadd.f32 %v772, %v932
      %v934 = vpop.f32.mrb[0].mxu0
      %935 = vmatprep.mubr.bf16.mxu0 0
      %936 = vmatmul.mubr.bf16.gmra.mrb[0].mxu0 %v670
      %v937 = vpop.f32.mrb[0].mxu0
      %v938 = vadd.f32 %v777, %v937
      %v939 = vpop.f32.mrb[0].mxu0
      %v940 = vpop.f32.mrb[0].mxu0
      %v941 = vadd.f32 %v780, %v940
      %v942 = vpop.f32.mrb[0].mxu0
      %943 = vmatprep.mubr.bf16.mxu0 0
      %944 = vmatmul.mubr.bf16.gmra.mrb[0].mxu0 %v673
      %v945 = vpop.f32.mrb[0].mxu0
      %v946 = vadd.f32 %v785, %v945
      %v947 = vpop.f32.mrb[0].mxu0
      %v948 = vpop.f32.mrb[0].mxu0
      %v949 = vadd.f32 %v788, %v948
      %v950 = vpop.f32.mrb[0].mxu0
      %951 = vmatprep.mubr.bf16.mxu0 0
      %952 = vmatmul.mubr.bf16.gmra.mrb[0].mxu0 %v676
      %v953 = vpop.f32.mrb[0].mxu0
      %v954 = vadd.f32 %v793, %v953
      %v955 = vpop.f32.mrb[0].mxu0
      %v956 = vpop.f32.mrb[0].mxu0
      %v957 = vadd.f32 %v796, %v956
      %v958 = vpop.f32.mrb[0].mxu0
      %959 = vmatprep.mubr.bf16.mxu0 0
      %960 = vmatmul.mubr.bf16.gmra.mrb[0].mxu0 %v679
      %v961 = vpop.f32.mrb[0].mxu0
      %v962 = vadd.f32 %v801, %v961
      %v963 = vpop.f32.mrb[0].mxu0
      %v964 = vpop.f32.mrb[0].mxu0
      %v965 = vadd.f32 %v804, %v964
      %v966 = vpop.f32.mrb[0].mxu0
      %967 = vmatprep.mubr.bf16.mxu0 0
      %968 = vmatmul.mubr.bf16.gmra.mrb[0].mxu0 %v682
      %v969 = vpop.f32.mrb[0].mxu0
      %v970 = vadd.f32 %v809, %v969
      %v971 = vpop.f32.mrb[0].mxu0
      %v972 = vpop.f32.mrb[0].mxu0
      %v973 = vadd.f32 %v812, %v972
      %v974 = vpop.f32.mrb[0].mxu0
      %975 = vmatprep.mubr.bf16.mxu0 0
      %976 = vmatmul.mubr.bf16.gmra.mrb[0].mxu0 %v685
      %v977 = vpop.f32.mrb[0].mxu0
      %v978 = vadd.f32 %v817, %v977
      %v979 = vpop.f32.mrb[0].mxu0
      %v980 = vpop.f32.mrb[0].mxu0
      %v981 = vadd.f32 %v820, %v980
      %v982 = vpop.f32.mrb[0].mxu0
      %983 = vmatprep.mubr.bf16.mxu0 0
      %984 = vmatmul.mubr.bf16.gmra.mrb[0].mxu0 %v688
      %v985 = vpop.f32.mrb[0].mxu0
      %v986 = vadd.f32 %v825, %v985
      %v987 = vpop.f32.mrb[0].mxu0
      %v988 = vpop.f32.mrb[0].mxu0
      %v989 = vadd.f32 %v828, %v988
      %v990 = vpop.f32.mrb[0].mxu0
      %991 = vmatprep.mubr.bf16.mxu0 0
      %992 = vmatmul.mubr.bf16.gmra.mrb[0].mxu0 %v691
      %v993 = vpop.f32.mrb[0].mxu0
      %v994 = vadd.f32 %v833, %v993
      %v995 = vpop.f32.mrb[0].mxu0
      %v996 = vpop.f32.mrb[0].mxu0
      %v997 = vadd.f32 %v836, %v996
      %v998 = vpop.f32.mrb[0].mxu0
      %999 = vmatprep.mubr.bf16.mxu0 0
      %1000 = vmatmul.mubr.bf16.gmra.mrb[0].mxu0 %v694
      %v1001 = vpop.f32.mrb[0].mxu0
      %v1002 = vadd.f32 %v841, %v1001
      %v1003 = vpop.f32.mrb[0].mxu0
      %v1004 = vpop.f32.mrb[0].mxu0
      %v1005 = vadd.f32 %v844, %v1004
      %v1006 = vpop.f32.mrb[0].mxu0
      %1007 = vmatprep.mubr.bf16.mxu0 0
      %1008 = vmatmul.mubr.bf16.gmra.mrb[0].mxu0 %v697
      %v1009 = vpop.f32.mrb[0].mxu0
      %v1010 = vadd.f32 %v849, %v1009
      %v1011 = vpop.f32.mrb[0].mxu0
      %v1012 = vpop.f32.mrb[0].mxu0
      %v1013 = vadd.f32 %v852, %v1012
      %v1014 = vpop.f32.mrb[0].mxu0
      %1015 = vmatprep.mubr.bf16.mxu0 0
      %1016 = vmatmul.mubr.bf16.gmra.mrb[0].mxu0 %v700
      %v1017 = vpop.f32.mrb[0].mxu0
      %v1018 = vadd.f32 %v857, %v1017
      %v1019 = vpop.f32.mrb[0].mxu0
      %v1020 = vpop.f32.mrb[0].mxu0
      %v1021 = vadd.f32 %v860, %v1020
      %v1022 = vpop.f32.mrb[0].mxu0
      %1023 = vdwg.mxu0
      %v1024 = vld [vmem:[%s2] sm:$0x1]
      %v1026 = vlaneseq
      %v1027 = vshrl.u32 %v1026, 7
      %v1028 = vsub.s32 0, %v1027
      %v1029 = vrot.slane %v1024, %v1028
      %v1031 = vmul.f32 %v898, %v1029
      %v1032 = vmul.f32 %v901, %v1029
      %v1033 = vmul.f32 %v906, %v1029
      %v1034 = vmul.f32 %v909, %v1029
      %v1035 = vmul.f32 %v914, %v1029
      %v1036 = vmul.f32 %v917, %v1029
      %v1037 = vmul.f32 %v922, %v1029
      %v1038 = vmul.f32 %v925, %v1029
      %v1039 = vmul.f32 %v930, %v1029
      %v1040 = vmul.f32 %v933, %v1029
      %v1041 = vmul.f32 %v938, %v1029
      %v1042 = vmul.f32 %v941, %v1029
      %v1043 = vmul.f32 %v946, %v1029
      %v1044 = vmul.f32 %v949, %v1029
      %v1045 = vmul.f32 %v954, %v1029
      %v1046 = vmul.f32 %v957, %v1029
      %v1047 = vmul.f32 %v962, %v1029
      %v1048 = vmul.f32 %v965, %v1029
      %v1049 = vmul.f32 %v970, %v1029
      %v1050 = vmul.f32 %v973, %v1029
      %v1051 = vmul.f32 %v978, %v1029
      %v1052 = vmul.f32 %v981, %v1029
      %v1053 = vmul.f32 %v986, %v1029
      %v1054 = vmul.f32 %v989, %v1029
      %v1055 = vmul.f32 %v994, %v1029
      %v1056 = vmul.f32 %v997, %v1029
      %v1057 = vmul.f32 %v1002, %v1029
      %v1058 = vmul.f32 %v1005, %v1029
      %v1059 = vmul.f32 %v1010, %v1029
      %v1060 = vmul.f32 %v1013, %v1029
      %v1061 = vmul.f32 %v1018, %v1029
      %v1062 = vmul.f32 %v1021, %v1029
      %v1063 = vld [vmem:[%s3] sm:$0x1]
      %v1065 = vlaneseq
      %v1066 = vshrl.u32 %v1065, 7
      %v1067 = vsub.s32 0, %v1066
      %v1068 = vrot.slane %v1063, %v1067
      %v1070 = vadd.f32 %v1031, %v1068
      %v1071 = vadd.f32 %v1032, %v1068
      %v1072 = vadd.f32 %v1033, %v1068
      %v1073 = vadd.f32 %v1034, %v1068
      %v1074 = vadd.f32 %v1035, %v1068
      %v1075 = vadd.f32 %v1036, %v1068
      %v1076 = vadd.f32 %v1037, %v1068
      %v1077 = vadd.f32 %v1038, %v1068
      %v1078 = vadd.f32 %v1039, %v1068
      %v1079 = vadd.f32 %v1040, %v1068
      %v1080 = vadd.f32 %v1041, %v1068
      %v1081 = vadd.f32 %v1042, %v1068
      %v1082 = vadd.f32 %v1043, %v1068
      %v1083 = vadd.f32 %v1044, %v1068
      %v1084 = vadd.f32 %v1045, %v1068
      %v1085 = vadd.f32 %v1046, %v1068
      %v1086 = vadd.f32 %v1047, %v1068
      %v1087 = vadd.f32 %v1048, %v1068
      %v1088 = vadd.f32 %v1049, %v1068
      %v1089 = vadd.f32 %v1050, %v1068
      %v1090 = vadd.f32 %v1051, %v1068
      %v1091 = vadd.f32 %v1052, %v1068
      %v1092 = vadd.f32 %v1053, %v1068
      %v1093 = vadd.f32 %v1054, %v1068
      %v1094 = vadd.f32 %v1055, %v1068
      %v1095 = vadd.f32 %v1056, %v1068
      %v1096 = vadd.f32 %v1057, %v1068
      %v1097 = vadd.f32 %v1058, %v1068
      %v1098 = vadd.f32 %v1059, %v1068
      %v1099 = vadd.f32 %v1060, %v1068
      %v1100 = vadd.f32 %v1061, %v1068
      %v1101 = vadd.f32 %v1062, %v1068
      %v1102 = vmax.f32 %v1070, 0.0
      %v1103 = vmax.f32 %v1071, 0.0
      %v1104 = vmax.f32 %v1072, 0.0
      %v1105 = vmax.f32 %v1073, 0.0
      %v1106 = vmax.f32 %v1074, 0.0
      %v1107 = vmax.f32 %v1075, 0.0
      %v1108 = vmax.f32 %v1076, 0.0
      %v1109 = vmax.f32 %v1077, 0.0
      %v1110 = vmax.f32 %v1078, 0.0
      %v1111 = vmax.f32 %v1079, 0.0
      %v1112 = vmax.f32 %v1080, 0.0
      %v1113 = vmax.f32 %v1081, 0.0
      %v1114 = vmax.f32 %v1082, 0.0
      %v1115 = vmax.f32 %v1083, 0.0
      %v1116 = vmax.f32 %v1084, 0.0
      %v1117 = vmax.f32 %v1085, 0.0
      %v1118 = vmax.f32 %v1086, 0.0
      %v1119 = vmax.f32 %v1087, 0.0
      %v1120 = vmax.f32 %v1088, 0.0
      %v1121 = vmax.f32 %v1089, 0.0
      %v1122 = vmax.f32 %v1090, 0.0
      %v1123 = vmax.f32 %v1091, 0.0
      %v1124 = vmax.f32 %v1092, 0.0
      %v1125 = vmax.f32 %v1093, 0.0
      %v1126 = vmax.f32 %v1094, 0.0
      %v1127 = vmax.f32 %v1095, 0.0
      %v1128 = vmax.f32 %v1096, 0.0
      %v1129 = vmax.f32 %v1097, 0.0
      %v1130 = vmax.f32 %v1098, 0.0
      %v1131 = vmax.f32 %v1099, 0.0
      %v1132 = vmax.f32 %v1100, 0.0
      %v1133 = vmax.f32 %v1101, 0.0
      %v1134 = vpack.c.bf16 %v1103, %v1102
      %v1135 = vpack.c.bf16 %v1105, %v1104
      %v1136 = vpack.c.bf16 %v1107, %v1106
      %v1137 = vpack.c.bf16 %v1109, %v1108
      %v1138 = vpack.c.bf16 %v1111, %v1110
      %v1139 = vpack.c.bf16 %v1113, %v1112
      %v1140 = vpack.c.bf16 %v1115, %v1114
      %v1141 = vpack.c.bf16 %v1117, %v1116
      %v1142 = vpack.c.bf16 %v1119, %v1118
      %v1143 = vpack.c.bf16 %v1121, %v1120
      %v1144 = vpack.c.bf16 %v1123, %v1122
      %v1145 = vpack.c.bf16 %v1125, %v1124
      %v1146 = vpack.c.bf16 %v1127, %v1126
      %v1147 = vpack.c.bf16 %v1129, %v1128
      %v1148 = vpack.c.bf16 %v1131, %v1130
      %v1149 = vpack.c.bf16 %v1133, %v1132
      %v1166 = vunpack.c.l.b16 %v1134
      %v1167 = vunpack.c.h.b16 %v1134
      %v1168 = vunpack.c.l.b16 %v1135
      %v1169 = vunpack.c.h.b16 %v1135
      %v1170 = vunpack.c.l.b16 %v1136
      %v1171 = vunpack.c.h.b16 %v1136
      %v1172 = vunpack.c.l.b16 %v1137
      %v1173 = vunpack.c.h.b16 %v1137
      %v1174 = vunpack.c.l.b16 %v1138
      %v1175 = vunpack.c.h.b16 %v1138
      %v1176 = vunpack.c.l.b16 %v1139
      %v1177 = vunpack.c.h.b16 %v1139
      %v1178 = vunpack.c.l.b16 %v1140
      %v1179 = vunpack.c.h.b16 %v1140
      %v1180 = vunpack.c.l.b16 %v1141
      %v1181 = vunpack.c.h.b16 %v1141
      %v1182 = vunpack.c.l.b16 %v1142
      %v1183 = vunpack.c.h.b16 %v1142
      %v1184 = vunpack.c.l.b16 %v1143
      %v1185 = vunpack.c.h.b16 %v1143
      %v1186 = vunpack.c.l.b16 %v1144
      %v1187 = vunpack.c.h.b16 %v1144
      %v1188 = vunpack.c.l.b16 %v1145
      %v1189 = vunpack.c.h.b16 %v1145
      %v1190 = vunpack.c.l.b16 %v1146
      %v1191 = vunpack.c.h.b16 %v1146
      %v1192 = vunpack.c.l.b16 %v1147
      %v1193 = vunpack.c.h.b16 %v1147
      %v1194 = vunpack.c.l.b16 %v1148
      %v1195 = vunpack.c.h.b16 %v1148
      %v1196 = vunpack.c.l.b16 %v1149
      %v1197 = vunpack.c.h.b16 %v1149
      %v1198 = vpack.c.b16 %v1166, %v1166
      %v1199 = vpack.c.b16 %v1167, %v1167
      %v1200 = vpack.c.b16 %v1168, %v1168
      %v1201 = vpack.c.b16 %v1169, %v1169
      %v1202 = vpack.c.b16 %v1170, %v1170
      %v1203 = vpack.c.b16 %v1171, %v1171
      %v1204 = vpack.c.b16 %v1172, %v1172
      %v1205 = vpack.c.b16 %v1173, %v1173
      %v1206 = vpack.c.b16 %v1174, %v1174
      %v1207 = vpack.c.b16 %v1175, %v1175
      %v1208 = vpack.c.b16 %v1176, %v1176
      %v1209 = vpack.c.b16 %v1177, %v1177
      %v1210 = vpack.c.b16 %v1178, %v1178
      %v1211 = vpack.c.b16 %v1179, %v1179
      %v1212 = vpack.c.b16 %v1180, %v1180
      %v1213 = vpack.c.b16 %v1181, %v1181
      %v1214 = vpack.c.b16 %v1182, %v1182
      %v1215 = vpack.c.b16 %v1183, %v1183
      %v1216 = vpack.c.b16 %v1184, %v1184
      %v1217 = vpack.c.b16 %v1185, %v1185
      %v1218 = vpack.c.b16 %v1186, %v1186
      %v1219 = vpack.c.b16 %v1187, %v1187
      %v1220 = vpack.c.b16 %v1188, %v1188
      %v1221 = vpack.c.b16 %v1189, %v1189
      %v1222 = vpack.c.b16 %v1190, %v1190
      %v1223 = vpack.c.b16 %v1191, %v1191
      %v1224 = vpack.c.b16 %v1192, %v1192
      %v1225 = vpack.c.b16 %v1193, %v1193
      %v1226 = vpack.c.b16 %v1194, %v1194
      %v1227 = vpack.c.b16 %v1195, %v1195
      %v1228 = vpack.c.b16 %v1196, %v1196
      %v1229 = vpack.c.b16 %v1197, %v1197
      %vm1262 = vcmask 257024
      %1263 = vst.msk [vmem:[%s202] sm:$0xf] %vm1262, %v1198
      %1264 = vst.msk [vmem:[%s202 + $0x4] sm:$0xf] %vm1262, %v1199
      %1265 = vst.msk [vmem:[%s202 + $0x8] sm:$0xf] %vm1262, %v1200
      %1266 = vst.msk [vmem:[%s202 + $0xc] sm:$0xf] %vm1262, %v1201
      %1267 = vst.msk [vmem:[%s202 + $0x10] sm:$0xf] %vm1262, %v1202
      %1268 = vst.msk [vmem:[%s202 + $0x14] sm:$0xf] %vm1262, %v1203
      %1269 = vst.msk [vmem:[%s202 + $0x18] sm:$0xf] %vm1262, %v1204
      %1270 = vst.msk [vmem:[%s202 + $0x1c] sm:$0xf] %vm1262, %v1205
      %1271 = vst.msk [vmem:[%s202 + $0x20] sm:$0xf] %vm1262, %v1206
      %1272 = vst.msk [vmem:[%s202 + $0x24] sm:$0xf] %vm1262, %v1207
      %1273 = vst.msk [vmem:[%s202 + $0x28] sm:$0xf] %vm1262, %v1208
      %1274 = vst.msk [vmem:[%s202 + $0x2c] sm:$0xf] %vm1262, %v1209
      %1275 = vst.msk [vmem:[%s202 + $0x30] sm:$0xf] %vm1262, %v1210
      %1276 = vst.msk [vmem:[%s202 + $0x34] sm:$0xf] %vm1262, %v1211
      %1277 = vst.msk [vmem:[%s202 + $0x38] sm:$0xf] %vm1262, %v1212
      %1278 = vst.msk [vmem:[%s202 + $0x3c] sm:$0xf] %vm1262, %v1213
      %1279 = vst.msk [vmem:[%s202 + $0x40] sm:$0xf] %vm1262, %v1214
      %1280 = vst.msk [vmem:[%s202 + $0x44] sm:$0xf] %vm1262, %v1215
      %1281 = vst.msk [vmem:[%s202 + $0x48] sm:$0xf] %vm1262, %v1216
      %1282 = vst.msk [vmem:[%s202 + $0x4c] sm:$0xf] %vm1262, %v1217
      %1283 = vst.msk [vmem:[%s202 + $0x50] sm:$0xf] %vm1262, %v1218
      %1284 = vst.msk [vmem:[%s202 + $0x54] sm:$0xf] %vm1262, %v1219
      %1285 = vst.msk [vmem:[%s202 + $0x58] sm:$0xf] %vm1262, %v1220
      %1286 = vst.msk [vmem:[%s202 + $0x5c] sm:$0xf] %vm1262, %v1221
      %1287 = vst.msk [vmem:[%s202 + $0x60] sm:$0xf] %vm1262, %v1222
      %1288 = vst.msk [vmem:[%s202 + $0x64] sm:$0xf] %vm1262, %v1223
      %1289 = vst.msk [vmem:[%s202 + $0x68] sm:$0xf] %vm1262, %v1224
      %1290 = vst.msk [vmem:[%s202 + $0x6c] sm:$0xf] %vm1262, %v1225
      %1291 = vst.msk [vmem:[%s202 + $0x70] sm:$0xf] %vm1262, %v1226
      %1292 = vst.msk [vmem:[%s202 + $0x74] sm:$0xf] %vm1262, %v1227
      %1293 = vst.msk [vmem:[%s202 + $0x78] sm:$0xf] %vm1262, %v1228
      %1294 = vst.msk [vmem:[%s202 + $0x7c] sm:$0xf] %vm1262, %v1229
      %s1295 = smul.u32 32, %s15
      %p1296 = scmp.lt.s32.totalorder %s1295, 63
      %s1297 = scalar_select %p1296, %s1295, 63
      %s1298 = smul.addr %s1297, 4
      %s1299 = scalar_lea.vmem %s4, %s1298
      // Predicated region
      $region37: #{resnet50vd_small_forward.5} parent=35 // pred_check
        %p1300 = pneg %p122
      $region38: #{resnet50vd_small_forward.5} parent=35 // pred_check_branch
        %1302 = sbr.rel (%p1300) target = $region40
      $region39: #{resnet50vd_small_forward.5} parent=35 // pred_region
        %s1303 = smul.u32 32, %s15
      $region40: #{resnet50vd_small_forward.5} parent=35 // pred_fallthru
        _
    $region36: #{resnet50vd_small_forward.5} parent=5 // pred_fallthru
      _
    %p1304 = scmp.le.s32.totalorder 2, %s10
    // Predicated region
    $region41: #{resnet50vd_small_forward.5} parent=5 // pred_check
      %p1305 = pneg %p1304
    $region42: #{resnet50vd_small_forward.5} parent=5 // pred_check_branch
      %1307 = sbr.rel (%p1305) target = $region44
    $region43: #{resnet50vd_small_forward.5} parent=5 // pred_region
      %s1308 = ssub.s32 %s10, 2
      // Predicated region
      $region45: #{resnet50vd_small_forward.5} parent=43 // pred_check
        %p1309 = pneg %p128
      $region46: #{resnet50vd_small_forward.5} parent=43 // pred_check_branch
        %1311 = sbr.rel (%p1309) target = $region48
      $region47: #{resnet50vd_small_forward.5} parent=43 // pred_region
        %s1312 = smul.u32 32, %s16
        %p1313 = scmp.lt.s32.totalorder %s1312, 63
        %s1314 = scalar_select %p1313, %s1312, 63
        %s1315 = smul.addr %s1314, 4
        %s1316 = scalar_lea.vmem %s4, %s1315
      $region48: #{resnet50vd_small_forward.5} parent=43 // pred_fallthru
        _
    $region44: #{resnet50vd_small_forward.5} parent=5 // pred_fallthru
      _
  $region6: #{resnet50vd_small_forward.5} parent=0 // loop_footer
    %s14 = sadd.s32 1, %s10
  $region7: #{resnet50vd_small_forward.5} parent=0 // loop_footer_branch
    %9 = sbr.rel target = $region3
  $region8: #{resnet50vd_small_forward.5} parent=0 // loop_exit
    _

// kernel: resnet50vd_small_forward.6
$region0: #{resnet50vd_small_forward.6}
  #allocation0 [shape = 'u32[]', space=smem, size = 0x4, offset = 0x4, fixed_abs, tag = 'smem constant byte address 0x4 - core index']
  #allocation1 [shape = 'u32[144,128]{1,0:T(1,128)}', space=vmem, size = 0x12000, scoped, tag = 'internal scratch']
  %s0 = inlined_call_operand.vmem [shape: bf16[512,288], index: 0, kind: input, shape index: {}]
  %s1 = inlined_call_operand.vmem [shape: bf16[288,64], index: 1, kind: input, shape index: {}]
  %s2 = inlined_call_operand.vmem [shape: f32[1,64], index: 2, kind: input, shape index: {}]
  %s3 = inlined_call_operand.vmem [shape: f32[1,64], index: 3, kind: input, shape index: {}]
  %s4 = inlined_call_operand.vmem [shape: bf16[512,64], index: 4, kind: output, shape index: {}]
  %s5 = sld [smem:[#allocation0]]
  $region49: #{resnet50vd_small_forward.6} parent=0
    _
  %s7 = ssub.s32 1, %s5
  %s8 = scalar_select 0, %s7, %s5
  loop: start=0, step=1, limit=4
  $region2: #{resnet50vd_small_forward.6} parent=0 // loop_pre_header
    _
  $region3: #{resnet50vd_small_forward.6} parent=0 // loop_header
    %s10 = sphi 0, %s14
    %p11 = scmp.ge.s32.totalorder %s10, 4
    %s20 = sphi 0, %s22
    %s23 = sphi 0, %s20
    %s24 = sphi 0, %s23
    %s40 = sphi 0, %s24
    %s44 = sphi 0, %s44
    %s46 = sphi 0, %s44
    %s47 = sphi 0, %s46
    %s61 = sphi 0, %s47
    %s65 = sphi 0, %s65
    %s67 = sphi 0, %s65
    %s68 = sphi 0, %s67
    %s82 = sphi 0, %s68
    %s86 = sphi 0, %s86
    %s88 = sphi 0, %s86
    %s89 = sphi 0, %s88
    %s103 = sphi 0, %s89
    %s109 = sphi 0, %s111
    %s112 = sphi 0, %s109
    %s113 = sphi 0, %s112
    %s129 = sphi 0, %s113
  $region4: #{resnet50vd_small_forward.6} parent=0 // loop_header_branch
    %13 = sbr.rel (%p11) target = $region8
  $region5: #{resnet50vd_small_forward.6} parent=0 // loop_body
    %s15 = ssub.s32 %s10, 1
    %s16 = ssub.s32 %s10, 2
    %s17 = sadd.s32 %s10, 1
    %s18 = ssub.s32 %s10, %s17
    %p19 = scmp.eq.s32.totalorder %s18, 0
    %s21 = sadd.s32 %s20, 1
    %s22 = scalar_select %p19, %s20, %s21
    %p25 = pneg %p19
    %p26 = scmp.eq.s32.totalorder %s10, 1
    %p27 = por %p25, %p26
    %p28 = scmp.ne.s32.totalorder %s20, %s23
    %p29 = scmp.eq.s32.totalorder %s10, 0
    %p30 = por %p28, %p29
    %p31 = scmp.ne.s32.totalorder %s20, %s23
    %p32 = scmp.eq.s32.totalorder %s15, 1
    %p33 = por %p31, %p32
    %p34 = scmp.ne.s32.totalorder %s23, %s24
    %p35 = scmp.eq.s32.totalorder %s15, 0
    %p36 = por %p34, %p35
    %p37 = scmp.ne.s32.totalorder %s23, %s24
    %p38 = scmp.eq.s32.totalorder %s16, 1
    %p39 = por %p37, %p38
    %p41 = scmp.ne.s32.totalorder %s24, %s40
    %p42 = scmp.eq.s32.totalorder %s16, 0
    %p43 = por %p41, %p42
    %s45 = sadd.s32 %s44, 1
    %p48 = scmp.eq.s32.totalorder %s10, 1
    %p49 = scmp.ne.s32.totalorder %s44, %s46
    %p50 = scmp.eq.s32.totalorder %s10, 0
    %p51 = por %p49, %p50
    %p52 = scmp.ne.s32.totalorder %s44, %s46
    %p53 = scmp.eq.s32.totalorder %s15, 1
    %p54 = por %p52, %p53
    %p55 = scmp.ne.s32.totalorder %s46, %s47
    %p56 = scmp.eq.s32.totalorder %s15, 0
    %p57 = por %p55, %p56
    %p58 = scmp.ne.s32.totalorder %s46, %s47
    %p59 = scmp.eq.s32.totalorder %s16, 1
    %p60 = por %p58, %p59
    %p62 = scmp.ne.s32.totalorder %s47, %s61
    %p63 = scmp.eq.s32.totalorder %s16, 0
    %p64 = por %p62, %p63
    %s66 = sadd.s32 %s65, 1
    %p69 = scmp.eq.s32.totalorder %s10, 1
    %p70 = scmp.ne.s32.totalorder %s65, %s67
    %p71 = scmp.eq.s32.totalorder %s10, 0
    %p72 = por %p70, %p71
    %p73 = scmp.ne.s32.totalorder %s65, %s67
    %p74 = scmp.eq.s32.totalorder %s15, 1
    %p75 = por %p73, %p74
    %p76 = scmp.ne.s32.totalorder %s67, %s68
    %p77 = scmp.eq.s32.totalorder %s15, 0
    %p78 = por %p76, %p77
    %p79 = scmp.ne.s32.totalorder %s67, %s68
    %p80 = scmp.eq.s32.totalorder %s16, 1
    %p81 = por %p79, %p80
    %p83 = scmp.ne.s32.totalorder %s68, %s82
    %p84 = scmp.eq.s32.totalorder %s16, 0
    %p85 = por %p83, %p84
    %s87 = sadd.s32 %s86, 1
    %p90 = scmp.eq.s32.totalorder %s10, 1
    %p91 = scmp.ne.s32.totalorder %s86, %s88
    %p92 = scmp.eq.s32.totalorder %s10, 0
    %p93 = por %p91, %p92
    %p94 = scmp.ne.s32.totalorder %s86, %s88
    %p95 = scmp.eq.s32.totalorder %s15, 1
    %p96 = por %p94, %p95
    %p97 = scmp.ne.s32.totalorder %s88, %s89
    %p98 = scmp.eq.s32.totalorder %s15, 0
    %p99 = por %p97, %p98
    %p100 = scmp.ne.s32.totalorder %s88, %s89
    %p101 = scmp.eq.s32.totalorder %s16, 1
    %p102 = por %p100, %p101
    %p104 = scmp.ne.s32.totalorder %s89, %s103
    %p105 = scmp.eq.s32.totalorder %s16, 0
    %p106 = por %p104, %p105
    %s107 = ssub.s32 %s10, %s17
    %p108 = scmp.eq.s32.totalorder %s107, 0
    %s110 = sadd.s32 %s109, 1
    %s111 = scalar_select %p108, %s109, %s110
    %p114 = pneg %p108
    %p115 = scmp.eq.s32.totalorder %s10, 1
    %p116 = por %p114, %p115
    %p117 = scmp.ne.s32.totalorder %s109, %s112
    %p118 = scmp.eq.s32.totalorder %s10, 0
    %p119 = por %p117, %p118
    %p120 = scmp.ne.s32.totalorder %s109, %s112
    %p121 = scmp.eq.s32.totalorder %s15, 1
    %p122 = por %p120, %p121
    %p123 = scmp.ne.s32.totalorder %s112, %s113
    %p124 = scmp.eq.s32.totalorder %s15, 0
    %p125 = por %p123, %p124
    %p126 = scmp.ne.s32.totalorder %s112, %s113
    %p127 = scmp.eq.s32.totalorder %s16, 1
    %p128 = por %p126, %p127
    %p130 = scmp.ne.s32.totalorder %s113, %s129
    %p131 = scmp.eq.s32.totalorder %s16, 0
    %p132 = por %p130, %p131
    %p133 = scmp.le.s32.totalorder 1, %s10
    %p134 = scmp.lt.s32.totalorder %s10, 3
    %p135 = pnand %p133, %p134
    %p136 = pneg %p135
    // Predicated region
    $region9: #{resnet50vd_small_forward.6} parent=5 // pred_check
      _
    $region10: #{resnet50vd_small_forward.6} parent=5 // pred_check_branch
      %138 = sbr.rel (%p135) target = $region12
    $region11: #{resnet50vd_small_forward.6} parent=5 // pred_region
      %s139 = ssub.s32 %s10, 1
      // Predicated region
      $region13: #{resnet50vd_small_forward.6} parent=11 // pred_check
        %p140 = pneg %p57
      $region14: #{resnet50vd_small_forward.6} parent=11 // pred_check_branch
        %142 = sbr.rel (%p140) target = $region16
      $region15: #{resnet50vd_small_forward.6} parent=11 // pred_region
        _
      $region16: #{resnet50vd_small_forward.6} parent=11 // pred_fallthru
        _
      // Predicated region
      $region17: #{resnet50vd_small_forward.6} parent=11 // pred_check
        %p143 = pneg %p78
      $region18: #{resnet50vd_small_forward.6} parent=11 // pred_check_branch
        %145 = sbr.rel (%p143) target = $region20
      $region19: #{resnet50vd_small_forward.6} parent=11 // pred_region
        _
      $region20: #{resnet50vd_small_forward.6} parent=11 // pred_fallthru
        _
      // Predicated region
      $region21: #{resnet50vd_small_forward.6} parent=11 // pred_check
        %p146 = pneg %p99
      $region22: #{resnet50vd_small_forward.6} parent=11 // pred_check_branch
        %148 = sbr.rel (%p146) target = $region24
      $region23: #{resnet50vd_small_forward.6} parent=11 // pred_region
        _
      $region24: #{resnet50vd_small_forward.6} parent=11 // pred_fallthru
        _
    $region12: #{resnet50vd_small_forward.6} parent=5 // pred_fallthru
      _
    %p149 = scmp.lt.s32.totalorder %s10, 2
    // Predicated region
    $region25: #{resnet50vd_small_forward.6} parent=5 // pred_check
      %p150 = pneg %p149
    $region26: #{resnet50vd_small_forward.6} parent=5 // pred_check_branch
      %152 = sbr.rel (%p150) target = $region28
    $region27: #{resnet50vd_small_forward.6} parent=5 // pred_region
      // Predicated region
      $region29: #{resnet50vd_small_forward.6} parent=27 // pred_check
        %p153 = pneg %p30
      $region30: #{resnet50vd_small_forward.6} parent=27 // pred_check_branch
        %155 = sbr.rel (%p153) target = $region32
      $region31: #{resnet50vd_small_forward.6} parent=27 // pred_region
        %s156 = smul.u32 32, %s10
        %p157 = scmp.lt.s32.totalorder %s156, 63
        %s158 = scalar_select %p157, %s156, 63
        %s159 = smul.addr %s158, 3
        %s160 = smul.addr %s159, 4
        %s161 = scalar_lea.vmem %s0, %s160
        %s162 = smul.u32 32, %s10
      $region32: #{resnet50vd_small_forward.6} parent=27 // pred_fallthru
        _
    $region28: #{resnet50vd_small_forward.6} parent=5 // pred_fallthru
      _
    %p163 = scmp.le.s32.totalorder 1, %s10
    %p164 = scmp.lt.s32.totalorder %s10, 3
    %p165 = pnand %p163, %p164
    %p166 = pneg %p165
    // Predicated region
    $region33: #{resnet50vd_small_forward.6} parent=5 // pred_check
      _
    $region34: #{resnet50vd_small_forward.6} parent=5 // pred_check_branch
      %168 = sbr.rel (%p165) target = $region36
    $region35: #{resnet50vd_small_forward.6} parent=5 // pred_region
      %s169 = ssub.s32 %s10, 1
      %s170 = smul.u32 32, %s15
      %p171 = scmp.lt.s32.totalorder %s170, 63
      %s172 = scalar_select %p171, %s170, 63
      %s173 = smul.addr %s172, 3
      %s174 = smul.addr %s173, 4
      %s175 = scalar_lea.vmem %s0, %s174
      %p176 = pneg %p36
      %p177 = pneg %p33
      %p178 = pneg %p57
      %p179 = pneg %p54
      %p180 = pneg %p78
      %p181 = pneg %p75
      %p182 = pneg %p99
      %p183 = pneg %p96
      %p184 = pneg %p125
      %p185 = pneg %p122
      %s186 = smul.u32 32, %s15
      %p187 = scmp.lt.s32.totalorder %s186, 63
      %s188 = scalar_select %p187, %s186, 63
      %s189 = smul.addr %s188, 4
      %s190 = scalar_lea.vmem %s4, %s189
      %s191 = smul.u32 32, %s15
      %p192 = scmp.lt.s32.totalorder %s191, 63
      %s193 = scalar_select %p192, %s191, 63
      %s194 = smul.addr %s193, 3
      %s195 = smul.addr %s194, 4
      %s196 = scalar_lea.vmem %s0, %s195
      %s197 = smul.u32 32, %s15
      %s198 = smul.u32 32, %s15
      %p199 = scmp.lt.s32.totalorder %s198, 63
      %s200 = scalar_select %p199, %s198, 63
      %s201 = smul.addr %s200, 4
      %s202 = scalar_lea.vmem %s4, %s201
      %s203 = smul.u32 32, %s15
      %v205 = vld [vmem:[%s196] sm:$0xff]
      %v206 = vld [vmem:[%s196 + $0x8] sm:$0xf]
      %v207 = vld [vmem:[%s196 + $0xc] sm:$0xff]
      %v208 = vld [vmem:[%s196 + $0x14] sm:$0xf]
      %v209 = vld [vmem:[%s196 + $0x18] sm:$0xff]
      %v210 = vld [vmem:[%s196 + $0x20] sm:$0xf]
      %v211 = vld [vmem:[%s196 + $0x24] sm:$0xff]
      %v212 = vld [vmem:[%s196 + $0x2c] sm:$0xf]
      %v213 = vld [vmem:[%s196 + $0x30] sm:$0xff]
      %v214 = vld [vmem:[%s196 + $0x38] sm:$0xf]
      %v215 = vld [vmem:[%s196 + $0x3c] sm:$0xff]
      %v216 = vld [vmem:[%s196 + $0x44] sm:$0xf]
      %v217 = vld [vmem:[%s196 + $0x48] sm:$0xff]
      %v218 = vld [vmem:[%s196 + $0x50] sm:$0xf]
      %v219 = vld [vmem:[%s196 + $0x54] sm:$0xff]
      %v220 = vld [vmem:[%s196 + $0x5c] sm:$0xf]
      %v221 = vld [vmem:[%s196 + $0x60] sm:$0xff]
      %v222 = vld [vmem:[%s196 + $0x68] sm:$0xf]
      %v223 = vld [vmem:[%s196 + $0x6c] sm:$0xff]
      %v224 = vld [vmem:[%s196 + $0x74] sm:$0xf]
      %v225 = vld [vmem:[%s196 + $0x78] sm:$0xff]
      %v226 = vld [vmem:[%s196 + $0x80] sm:$0xf]
      %v227 = vld [vmem:[%s196 + $0x84] sm:$0xff]
      %v228 = vld [vmem:[%s196 + $0x8c] sm:$0xf]
      %v229 = vld [vmem:[%s196 + $0x90] sm:$0xff]
      %v230 = vld [vmem:[%s196 + $0x98] sm:$0xf]
      %v231 = vld [vmem:[%s196 + $0x9c] sm:$0xff]
      %v232 = vld [vmem:[%s196 + $0xa4] sm:$0xf]
      %v233 = vld [vmem:[%s196 + $0xa8] sm:$0xff]
      %v234 = vld [vmem:[%s196 + $0xb0] sm:$0xf]
      %v235 = vld [vmem:[%s196 + $0xb4] sm:$0xff]
      %v236 = vld [vmem:[%s196 + $0xbc] sm:$0xf]
      %v237 = vld [vmem:[%s196 + $0xc0] sm:$0xff]
      %v238 = vld [vmem:[%s196 + $0xc8] sm:$0xf]
      %v239 = vld [vmem:[%s196 + $0xcc] sm:$0xff]
      %v240 = vld [vmem:[%s196 + $0xd4] sm:$0xf]
      %v241 = vld [vmem:[%s196 + $0xd8] sm:$0xff]
      %v242 = vld [vmem:[%s196 + $0xe0] sm:$0xf]
      %v243 = vld [vmem:[%s196 + $0xe4] sm:$0xff]
      %v244 = vld [vmem:[%s196 + $0xec] sm:$0xf]
      %v245 = vld [vmem:[%s196 + $0xf0] sm:$0xff]
      %v246 = vld [vmem:[%s196 + $0xf8] sm:$0xf]
      %v247 = vld [vmem:[%s196 + $0xfc] sm:$0xff]
      %v248 = vld [vmem:[%s196 + $0x104] sm:$0xf]
      %v249 = vld [vmem:[%s196 + $0x108] sm:$0xff]
      %v250 = vld [vmem:[%s196 + $0x110] sm:$0xf]
      %v251 = vld [vmem:[%s196 + $0x114] sm:$0xff]
      %v252 = vld [vmem:[%s196 + $0x11c] sm:$0xf]
      %v253 = vld [vmem:[%s196 + $0x120] sm:$0xff]
      %v254 = vld [vmem:[%s196 + $0x128] sm:$0xf]
      %v255 = vld [vmem:[%s196 + $0x12c] sm:$0xff]
      %v256 = vld [vmem:[%s196 + $0x134] sm:$0xf]
      %v257 = vld [vmem:[%s196 + $0x138] sm:$0xff]
      %v258 = vld [vmem:[%s196 + $0x140] sm:$0xf]
      %v259 = vld [vmem:[%s196 + $0x144] sm:$0xff]
      %v260 = vld [vmem:[%s196 + $0x14c] sm:$0xf]
      %v261 = vld [vmem:[%s196 + $0x150] sm:$0xff]
      %v262 = vld [vmem:[%s196 + $0x158] sm:$0xf]
      %v263 = vld [vmem:[%s196 + $0x15c] sm:$0xff]
      %v264 = vld [vmem:[%s196 + $0x164] sm:$0xf]
      %v265 = vld [vmem:[%s196 + $0x168] sm:$0xff]
      %v266 = vld [vmem:[%s196 + $0x170] sm:$0xf]
      %v267 = vld [vmem:[%s196 + $0x174] sm:$0xff]
      %v268 = vld [vmem:[%s196 + $0x17c] sm:$0xf]
      %v269 = vld [vmem:[%s1] sm:$0xf]
      %v270 = vld [vmem:[%s1 + $0x4] sm:$0xf]
      %v271 = vld [vmem:[%s1 + $0x8] sm:$0xf]
      %v272 = vld [vmem:[%s1 + $0xc] sm:$0xf]
      %v273 = vld [vmem:[%s1 + $0x10] sm:$0xf]
      %v274 = vld [vmem:[%s1 + $0x14] sm:$0xf]
      %v275 = vld [vmem:[%s1 + $0x18] sm:$0xf]
      %v276 = vld [vmem:[%s1 + $0x1c] sm:$0xf]
      %v277 = vld [vmem:[%s1 + $0x20] sm:$0xf]
      %v278 = vld [vmem:[%s1 + $0x24] sm:$0xf]
      %v279 = vld [vmem:[%s1 + $0x28] sm:$0xf]
      %v280 = vld [vmem:[%s1 + $0x2c] sm:$0xf]
      %v281 = vld [vmem:[%s1 + $0x30] sm:$0xf]
      %v282 = vld [vmem:[%s1 + $0x34] sm:$0xf]
      %v283 = vld [vmem:[%s1 + $0x38] sm:$0xf]
      %v284 = vld [vmem:[%s1 + $0x3c] sm:$0xf]
      %v285 = vld [vmem:[%s1 + $0x40] sm:$0xf]
      %v286 = vld [vmem:[%s1 + $0x44] sm:$0xf]
      %v287 = vld [vmem:[%s1 + $0x48] sm:$0xf]
      %v288 = vld [vmem:[%s1 + $0x4c] sm:$0xf]
      %v289 = vld [vmem:[%s1 + $0x50] sm:$0xf]
      %v290 = vld [vmem:[%s1 + $0x54] sm:$0xf]
      %v291 = vld [vmem:[%s1 + $0x58] sm:$0xf]
      %v292 = vld [vmem:[%s1 + $0x5c] sm:$0xf]
      %v293 = vld [vmem:[%s1 + $0x60] sm:$0xf]
      %v294 = vld [vmem:[%s1 + $0x64] sm:$0xf]
      %v295 = vld [vmem:[%s1 + $0x68] sm:$0xf]
      %v296 = vld [vmem:[%s1 + $0x6c] sm:$0xf]
      %v297 = vld [vmem:[%s1 + $0x70] sm:$0xf]
      %v298 = vld [vmem:[%s1 + $0x74] sm:$0xf]
      %v299 = vld [vmem:[%s1 + $0x78] sm:$0xf]
      %v300 = vld [vmem:[%s1 + $0x7c] sm:$0xf]
      %v301 = vld [vmem:[%s1 + $0x80] sm:$0xf]
      %v302 = vld [vmem:[%s1 + $0x84] sm:$0xf]
      %v303 = vld [vmem:[%s1 + $0x88] sm:$0xf]
      %v304 = vld [vmem:[%s1 + $0x8c] sm:$0xf]
      %v369 = vunpack.c.l.b16 %v205
      %v370 = vunpack.c.h.b16 %v205
      %v371 = vunpack.c.l.b16 %v206
      %v372 = vunpack.c.l.b16 %v207
      %v373 = vunpack.c.h.b16 %v207
      %v374 = vunpack.c.l.b16 %v208
      %v375 = vunpack.c.l.b16 %v209
      %v376 = vunpack.c.h.b16 %v209
      %v377 = vunpack.c.l.b16 %v210
      %v378 = vunpack.c.l.b16 %v211
      %v379 = vunpack.c.h.b16 %v211
      %v380 = vunpack.c.l.b16 %v212
      %v381 = vunpack.c.l.b16 %v213
      %v382 = vunpack.c.h.b16 %v213
      %v383 = vunpack.c.l.b16 %v214
      %v384 = vunpack.c.l.b16 %v215
      %v385 = vunpack.c.h.b16 %v215
      %v386 = vunpack.c.l.b16 %v216
      %v387 = vunpack.c.l.b16 %v217
      %v388 = vunpack.c.h.b16 %v217
      %v389 = vunpack.c.l.b16 %v218
      %v390 = vunpack.c.l.b16 %v219
      %v391 = vunpack.c.h.b16 %v219
      %v392 = vunpack.c.l.b16 %v220
      %v393 = vunpack.c.l.b16 %v221
      %v394 = vunpack.c.h.b16 %v221
      %v395 = vunpack.c.l.b16 %v222
      %v396 = vunpack.c.l.b16 %v223
      %v397 = vunpack.c.h.b16 %v223
      %v398 = vunpack.c.l.b16 %v224
      %v399 = vunpack.c.l.b16 %v225
      %v400 = vunpack.c.h.b16 %v225
      %v401 = vunpack.c.l.b16 %v226
      %v402 = vunpack.c.l.b16 %v227
      %v403 = vunpack.c.h.b16 %v227
      %v404 = vunpack.c.l.b16 %v228
      %v405 = vunpack.c.l.b16 %v229
      %v406 = vunpack.c.h.b16 %v229
      %v407 = vunpack.c.l.b16 %v230
      %v408 = vunpack.c.l.b16 %v231
      %v409 = vunpack.c.h.b16 %v231
      %v410 = vunpack.c.l.b16 %v232
      %v411 = vunpack.c.l.b16 %v233
      %v412 = vunpack.c.h.b16 %v233
      %v413 = vunpack.c.l.b16 %v234
      %v414 = vunpack.c.l.b16 %v235
      %v415 = vunpack.c.h.b16 %v235
      %v416 = vunpack.c.l.b16 %v236
      %v417 = vunpack.c.l.b16 %v237
      %v418 = vunpack.c.h.b16 %v237
      %v419 = vunpack.c.l.b16 %v238
      %v420 = vunpack.c.l.b16 %v239
      %v421 = vunpack.c.h.b16 %v239
      %v422 = vunpack.c.l.b16 %v240
      %v423 = vunpack.c.l.b16 %v241
      %v424 = vunpack.c.h.b16 %v241
      %v425 = vunpack.c.l.b16 %v242
      %v426 = vunpack.c.l.b16 %v243
      %v427 = vunpack.c.h.b16 %v243
      %v428 = vunpack.c.l.b16 %v244
      %v429 = vunpack.c.l.b16 %v245
      %v430 = vunpack.c.h.b16 %v245
      %v431 = vunpack.c.l.b16 %v246
      %v432 = vunpack.c.l.b16 %v247
      %v433 = vunpack.c.h.b16 %v247
      %v434 = vunpack.c.l.b16 %v248
      %v435 = vunpack.c.l.b16 %v249
      %v436 = vunpack.c.h.b16 %v249
      %v437 = vunpack.c.l.b16 %v250
      %v438 = vunpack.c.l.b16 %v251
      %v439 = vunpack.c.h.b16 %v251
      %v440 = vunpack.c.l.b16 %v252
      %v441 = vunpack.c.l.b16 %v253
      %v442 = vunpack.c.h.b16 %v253
      %v443 = vunpack.c.l.b16 %v254
      %v444 = vunpack.c.l.b16 %v255
      %v445 = vunpack.c.h.b16 %v255
      %v446 = vunpack.c.l.b16 %v256
      %v447 = vunpack.c.l.b16 %v257
      %v448 = vunpack.c.h.b16 %v257
      %v449 = vunpack.c.l.b16 %v258
      %v450 = vunpack.c.l.b16 %v259
      %v451 = vunpack.c.h.b16 %v259
      %v452 = vunpack.c.l.b16 %v260
      %v453 = vunpack.c.l.b16 %v261
      %v454 = vunpack.c.h.b16 %v261
      %v455 = vunpack.c.l.b16 %v262
      %v456 = vunpack.c.l.b16 %v263
      %v457 = vunpack.c.h.b16 %v263
      %v458 = vunpack.c.l.b16 %v264
      %v459 = vunpack.c.l.b16 %v265
      %v460 = vunpack.c.h.b16 %v265
      %v461 = vunpack.c.l.b16 %v266
      %v462 = vunpack.c.l.b16 %v267
      %v463 = vunpack.c.h.b16 %v267
      %v464 = vunpack.c.l.b16 %v268
      %v465 = vpack.c.b16 %v372, %v369
      %v466 = vpack.c.b16 %v373, %v370
      %v467 = vpack.c.b16 %v374, %v371
      %v468 = vpack.c.b16 %v378, %v375
      %v469 = vpack.c.b16 %v379, %v376
      %v470 = vpack.c.b16 %v380, %v377
      %v471 = vpack.c.b16 %v384, %v381
      %v472 = vpack.c.b16 %v385, %v382
      %v473 = vpack.c.b16 %v386, %v383
      %v474 = vpack.c.b16 %v390, %v387
      %v475 = vpack.c.b16 %v391, %v388
      %v476 = vpack.c.b16 %v392, %v389
      %v477 = vpack.c.b16 %v396, %v393
      %v478 = vpack.c.b16 %v397, %v394
      %v479 = vpack.c.b16 %v398, %v395
      %v480 = vpack.c.b16 %v402, %v399
      %v481 = vpack.c.b16 %v403, %v400
      %v482 = vpack.c.b16 %v404, %v401
      %v483 = vpack.c.b16 %v408, %v405
      %v484 = vpack.c.b16 %v409, %v406
      %v485 = vpack.c.b16 %v410, %v407
      %v486 = vpack.c.b16 %v414, %v411
      %v487 = vpack.c.b16 %v415, %v412
      %v488 = vpack.c.b16 %v416, %v413
      %v489 = vpack.c.b16 %v420, %v417
      %v490 = vpack.c.b16 %v421, %v418
      %v491 = vpack.c.b16 %v422, %v419
      %v492 = vpack.c.b16 %v426, %v423
      %v493 = vpack.c.b16 %v427, %v424
      %v494 = vpack.c.b16 %v428, %v425
      %v495 = vpack.c.b16 %v432, %v429
      %v496 = vpack.c.b16 %v433, %v430
      %v497 = vpack.c.b16 %v434, %v431
      %v498 = vpack.c.b16 %v438, %v435
      %v499 = vpack.c.b16 %v439, %v436
      %v500 = vpack.c.b16 %v440, %v437
      %v501 = vpack.c.b16 %v444, %v441
      %v502 = vpack.c.b16 %v445, %v442
      %v503 = vpack.c.b16 %v446, %v443
      %v504 = vpack.c.b16 %v450, %v447
      %v505 = vpack.c.b16 %v451, %v448
      %v506 = vpack.c.b16 %v452, %v449
      %v507 = vpack.c.b16 %v456, %v453
      %v508 = vpack.c.b16 %v457, %v454
      %v509 = vpack.c.b16 %v458, %v455
      %v510 = vpack.c.b16 %v462, %v459
      %v511 = vpack.c.b16 %v463, %v460
      %v512 = vpack.c.b16 %v464, %v461
      %v581 = vunpack.c.l.b16 %v269
      %v582 = vunpack.c.l.b16 %v270
      %v583 = vunpack.c.l.b16 %v271
      %v584 = vunpack.c.l.b16 %v272
      %v585 = vunpack.c.l.b16 %v273
      %v586 = vunpack.c.l.b16 %v274
      %v587 = vunpack.c.l.b16 %v275
      %v588 = vunpack.c.l.b16 %v276
      %v589 = vunpack.c.l.b16 %v277
      %v590 = vunpack.c.l.b16 %v278
      %v591 = vunpack.c.l.b16 %v279
      %v592 = vunpack.c.l.b16 %v280
      %v593 = vunpack.c.l.b16 %v281
      %v594 = vunpack.c.l.b16 %v282
      %v595 = vunpack.c.l.b16 %v283
      %v596 = vunpack.c.l.b16 %v284
      %v597 = vunpack.c.l.b16 %v285
      %v598 = vunpack.c.l.b16 %v286
      %v599 = vunpack.c.l.b16 %v287
      %v600 = vunpack.c.l.b16 %v288
      %v601 = vunpack.c.l.b16 %v289
      %v602 = vunpack.c.l.b16 %v290
      %v603 = vunpack.c.l.b16 %v291
      %v604 = vunpack.c.l.b16 %v292
      %v605 = vunpack.c.l.b16 %v293
      %v606 = vunpack.c.l.b16 %v294
      %v607 = vunpack.c.l.b16 %v295
      %v608 = vunpack.c.l.b16 %v296
      %v609 = vunpack.c.l.b16 %v297
      %v610 = vunpack.c.l.b16 %v298
      %v611 = vunpack.c.l.b16 %v299
      %v612 = vunpack.c.l.b16 %v300
      %v613 = vunpack.c.l.b16 %v301
      %v614 = vunpack.c.l.b16 %v302
      %v615 = vunpack.c.l.b16 %v303
      %v616 = vunpack.c.l.b16 %v304
      %v617 = vpack.c.b16 %v582, %v581
      %v618 = vpack.c.b16 %v584, %v583
      %v619 = vpack.c.b16 %v586, %v585
      %v620 = vpack.c.b16 %v588, %v587
      %v621 = vpack.c.b16 %v590, %v589
      %v622 = vpack.c.b16 %v592, %v591
      %v623 = vpack.c.b16 %v594, %v593
      %v624 = vpack.c.b16 %v596, %v595
      %v625 = vpack.c.b16 %v598, %v597
      %v626 = vpack.c.b16 %v600, %v599
      %v627 = vpack.c.b16 %v602, %v601
      %v628 = vpack.c.b16 %v604, %v603
      %v629 = vpack.c.b16 %v606, %v605
      %v630 = vpack.c.b16 %v608, %v607
      %v631 = vpack.c.b16 %v610, %v609
      %v632 = vpack.c.b16 %v612, %v611
      %v633 = vpack.c.b16 %v614, %v613
      %v634 = vpack.c.b16 %v616, %v615
      %vm653 = vcmask 261120
      %v655 = vsel %vm653, %v467, 0
      %v658 = vsel %vm653, %v470, 0
      %v661 = vsel %vm653, %v473, 0
      %v664 = vsel %vm653, %v476, 0
      %v667 = vsel %vm653, %v479, 0
      %v670 = vsel %vm653, %v482, 0
      %v673 = vsel %vm653, %v485, 0
      %v676 = vsel %vm653, %v488, 0
      %v679 = vsel %vm653, %v491, 0
      %v682 = vsel %vm653, %v494, 0
      %v685 = vsel %vm653, %v497, 0
      %v688 = vsel %vm653, %v500, 0
      %v691 = vsel %vm653, %v503, 0
      %v694 = vsel %vm653, %v506, 0
      %v697 = vsel %vm653, %v509, 0
      %v700 = vsel %vm653, %v512, 0
      %702 = vmatprep.subr.bf16.mxu0 0
      %703 = vmatpush1.bf16.msra.mxu0 %v617
      %704 = vmatprep.subr.bf16.mxu0 0
      %705 = vmatpush1.bf16.msra.mxu0 %v618
      %706 = vmatprep.subr.bf16.mxu0 0
      %707 = vmatpush1.bf16.msra.mxu0 %v619
      %708 = vmatprep.subr.bf16.mxu0 0
      %709 = vmatpush1.bf16.msra.mxu0 %v620
      %710 = vmatprep.subr.bf16.mxu0 0
      %711 = vmatpush1.bf16.msra.mxu0 %v621
      %712 = vmatprep.subr.bf16.mxu0 0
      %713 = vmatpush1.bf16.msra.mxu0 %v622
      %714 = vmatprep.subr.bf16.mxu0 0
      %715 = vmatpush1.bf16.msra.mxu0 %v623
      %716 = vmatprep.subr.bf16.mxu0 0
      %717 = vmatpush1.bf16.msra.mxu0 %v624
      %718 = vmatprep.subr.bf16.mxu0 0
      %719 = vmatpush1.bf16.msra.mxu0 %v625
      %720 = vmatprep.subr.bf16.mxu0 0
      %721 = vmatpush1.bf16.msra.mxu0 %v626
      %722 = vmatprep.subr.bf16.mxu0 0
      %723 = vmatpush1.bf16.msra.mxu0 %v627
      %724 = vmatprep.subr.bf16.mxu0 0
      %725 = vmatpush1.bf16.msra.mxu0 %v628
      %726 = vmatprep.subr.bf16.mxu0 0
      %727 = vmatpush1.bf16.msra.mxu0 %v629
      %728 = vmatprep.subr.bf16.mxu0 0
      %729 = vmatpush1.bf16.msra.mxu0 %v630
      %730 = vmatprep.subr.bf16.mxu0 0
      %731 = vmatpush1.bf16.msra.mxu0 %v631
      %732 = vmatprep.subr.bf16.mxu0 0
      %733 = vmatpush1.bf16.msra.mxu0 %v632
      %734 = vmatprep.mubr.bf16.mxu0 %v466
      %735 = vmatmul.mubr.bf16.gmra.mrb[0].mxu0 %v465
      %v736 = vpop.f32.mrb[0].mxu0
      %v737 = vadd.f32 0.0, %v736
      %v738 = vpop.f32.mrb[0].mxu0
      %v739 = vpop.f32.mrb[0].mxu0
      %v740 = vadd.f32 0.0, %v739
      %v741 = vpop.f32.mrb[0].mxu0
      %742 = vmatprep.mubr.bf16.mxu0 %v469
      %743 = vmatmul.mubr.bf16.gmra.mrb[0].mxu0 %v468
      %v744 = vpop.f32.mrb[0].mxu0
      %v745 = vadd.f32 0.0, %v744
      %v746 = vpop.f32.mrb[0].mxu0
      %v747 = vpop.f32.mrb[0].mxu0
      %v748 = vadd.f32 0.0, %v747
      %v749 = vpop.f32.mrb[0].mxu0
      %750 = vmatprep.mubr.bf16.mxu0 %v472
      %751 = vmatmul.mubr.bf16.gmra.mrb[0].mxu0 %v471
      %v752 = vpop.f32.mrb[0].mxu0
      %v753 = vadd.f32 0.0, %v752
      %v754 = vpop.f32.mrb[0].mxu0
      %v755 = vpop.f32.mrb[0].mxu0
      %v756 = vadd.f32 0.0, %v755
      %v757 = vpop.f32.mrb[0].mxu0
      %758 = vmatprep.mubr.bf16.mxu0 %v475
      %759 = vmatmul.mubr.bf16.gmra.mrb[0].mxu0 %v474
      %v760 = vpop.f32.mrb[0].mxu0
      %v761 = vadd.f32 0.0, %v760
      %v762 = vpop.f32.mrb[0].mxu0
      %v763 = vpop.f32.mrb[0].mxu0
      %v764 = vadd.f32 0.0, %v763
      %v765 = vpop.f32.mrb[0].mxu0
      %766 = vmatprep.mubr.bf16.mxu0 %v478
      %767 = vmatmul.mubr.bf16.gmra.mrb[0].mxu0 %v477
      %v768 = vpop.f32.mrb[0].mxu0
      %v769 = vadd.f32 0.0, %v768
      %v770 = vpop.f32.mrb[0].mxu0
      %v771 = vpop.f32.mrb[0].mxu0
      %v772 = vadd.f32 0.0, %v771
      %v773 = vpop.f32.mrb[0].mxu0
      %774 = vmatprep.mubr.bf16.mxu0 %v481
      %775 = vmatmul.mubr.bf16.gmra.mrb[0].mxu0 %v480
      %v776 = vpop.f32.mrb[0].mxu0
      %v777 = vadd.f32 0.0, %v776
      %v778 = vpop.f32.mrb[0].mxu0
      %v779 = vpop.f32.mrb[0].mxu0
      %v780 = vadd.f32 0.0, %v779
      %v781 = vpop.f32.mrb[0].mxu0
      %782 = vmatprep.mubr.bf16.mxu0 %v484
      %783 = vmatmul.mubr.bf16.gmra.mrb[0].mxu0 %v483
      %v784 = vpop.f32.mrb[0].mxu0
      %v785 = vadd.f32 0.0, %v784
      %v786 = vpop.f32.mrb[0].mxu0
      %v787 = vpop.f32.mrb[0].mxu0
      %v788 = vadd.f32 0.0, %v787
      %v789 = vpop.f32.mrb[0].mxu0
      %790 = vmatprep.mubr.bf16.mxu0 %v487
      %791 = vmatmul.mubr.bf16.gmra.mrb[0].mxu0 %v486
      %v792 = vpop.f32.mrb[0].mxu0
      %v793 = vadd.f32 0.0, %v792
      %v794 = vpop.f32.mrb[0].mxu0
      %v795 = vpop.f32.mrb[0].mxu0
      %v796 = vadd.f32 0.0, %v795
      %v797 = vpop.f32.mrb[0].mxu0
      %798 = vmatprep.mubr.bf16.mxu0 %v490
      %799 = vmatmul.mubr.bf16.gmra.mrb[0].mxu0 %v489
      %v800 = vpop.f32.mrb[0].mxu0
      %v801 = vadd.f32 0.0, %v800
      %v802 = vpop.f32.mrb[0].mxu0
      %v803 = vpop.f32.mrb[0].mxu0
      %v804 = vadd.f32 0.0, %v803
      %v805 = vpop.f32.mrb[0].mxu0
      %806 = vmatprep.mubr.bf16.mxu0 %v493
      %807 = vmatmul.mubr.bf16.gmra.mrb[0].mxu0 %v492
      %v808 = vpop.f32.mrb[0].mxu0
      %v809 = vadd.f32 0.0, %v808
      %v810 = vpop.f32.mrb[0].mxu0
      %v811 = vpop.f32.mrb[0].mxu0
      %v812 = vadd.f32 0.0, %v811
      %v813 = vpop.f32.mrb[0].mxu0
      %814 = vmatprep.mubr.bf16.mxu0 %v496
      %815 = vmatmul.mubr.bf16.gmra.mrb[0].mxu0 %v495
      %v816 = vpop.f32.mrb[0].mxu0
      %v817 = vadd.f32 0.0, %v816
      %v818 = vpop.f32.mrb[0].mxu0
      %v819 = vpop.f32.mrb[0].mxu0
      %v820 = vadd.f32 0.0, %v819
      %v821 = vpop.f32.mrb[0].mxu0
      %822 = vmatprep.mubr.bf16.mxu0 %v499
      %823 = vmatmul.mubr.bf16.gmra.mrb[0].mxu0 %v498
      %v824 = vpop.f32.mrb[0].mxu0
      %v825 = vadd.f32 0.0, %v824
      %v826 = vpop.f32.mrb[0].mxu0
      %v827 = vpop.f32.mrb[0].mxu0
      %v828 = vadd.f32 0.0, %v827
      %v829 = vpop.f32.mrb[0].mxu0
      %830 = vmatprep.mubr.bf16.mxu0 %v502
      %831 = vmatmul.mubr.bf16.gmra.mrb[0].mxu0 %v501
      %v832 = vpop.f32.mrb[0].mxu0
      %v833 = vadd.f32 0.0, %v832
      %v834 = vpop.f32.mrb[0].mxu0
      %v835 = vpop.f32.mrb[0].mxu0
      %v836 = vadd.f32 0.0, %v835
      %v837 = vpop.f32.mrb[0].mxu0
      %838 = vmatprep.mubr.bf16.mxu0 %v505
      %839 = vmatmul.mubr.bf16.gmra.mrb[0].mxu0 %v504
      %v840 = vpop.f32.mrb[0].mxu0
      %v841 = vadd.f32 0.0, %v840
      %v842 = vpop.f32.mrb[0].mxu0
      %v843 = vpop.f32.mrb[0].mxu0
      %v844 = vadd.f32 0.0, %v843
      %v845 = vpop.f32.mrb[0].mxu0
      %846 = vmatprep.mubr.bf16.mxu0 %v508
      %847 = vmatmul.mubr.bf16.gmra.mrb[0].mxu0 %v507
      %v848 = vpop.f32.mrb[0].mxu0
      %v849 = vadd.f32 0.0, %v848
      %v850 = vpop.f32.mrb[0].mxu0
      %v851 = vpop.f32.mrb[0].mxu0
      %v852 = vadd.f32 0.0, %v851
      %v853 = vpop.f32.mrb[0].mxu0
      %854 = vmatprep.mubr.bf16.mxu0 %v511
      %855 = vmatmul.mubr.bf16.gmra.mrb[0].mxu0 %v510
      %v856 = vpop.f32.mrb[0].mxu0
      %v857 = vadd.f32 0.0, %v856
      %v858 = vpop.f32.mrb[0].mxu0
      %v859 = vpop.f32.mrb[0].mxu0
      %v860 = vadd.f32 0.0, %v859
      %v861 = vpop.f32.mrb[0].mxu0
      %862 = vdwg.mxu0
      %863 = vmatprep.subr.bf16.mxu0 0
      %864 = vmatpush1.bf16.msra.mxu0 %v633
      %865 = vmatprep.subr.bf16.mxu0 0
      %866 = vmatpush1.bf16.msra.mxu0 %v634
      %867 = vmatprep.subr.bf16.mxu0 0
      %868 = vmatpush1.bf16.msra.mxu0 0
      %869 = vmatprep.subr.bf16.mxu0 0
      %870 = vmatpush1.bf16.msra.mxu0 0
      %871 = vmatprep.subr.bf16.mxu0 0
      %872 = vmatpush1.bf16.msra.mxu0 0
      %873 = vmatprep.subr.bf16.mxu0 0
      %874 = vmatpush1.bf16.msra.mxu0 0
      %875 = vmatprep.subr.bf16.mxu0 0
      %876 = vmatpush1.bf16.msra.mxu0 0
      %877 = vmatprep.subr.bf16.mxu0 0
      %878 = vmatpush1.bf16.msra.mxu0 0
      %879 = vmatprep.subr.bf16.mxu0 0
      %880 = vmatpush1.bf16.msra.mxu0 0
      %881 = vmatprep.subr.bf16.mxu0 0
      %882 = vmatpush1.bf16.msra.mxu0 0
      %883 = vmatprep.subr.bf16.mxu0 0
      %884 = vmatpush1.bf16.msra.mxu0 0
      %885 = vmatprep.subr.bf16.mxu0 0
      %886 = vmatpush1.bf16.msra.mxu0 0
      %887 = vmatprep.subr.bf16.mxu0 0
      %888 = vmatpush1.bf16.msra.mxu0 0
      %889 = vmatprep.subr.bf16.mxu0 0
      %890 = vmatpush1.bf16.msra.mxu0 0
      %891 = vmatprep.subr.bf16.mxu0 0
      %892 = vmatpush1.bf16.msra.mxu0 0
      %893 = vmatprep.subr.bf16.mxu0 0
      %894 = vmatpush1.bf16.msra.mxu0 0
      %895 = vmatprep.mubr.bf16.mxu0 0
      %896 = vmatmul.mubr.bf16.gmra.mrb[0].mxu0 %v655
      %v897 = vpop.f32.mrb[0].mxu0
      %v898 = vadd.f32 %v737, %v897
      %v899 = vpop.f32.mrb[0].mxu0
      %v900 = vpop.f32.mrb[0].mxu0
      %v901 = vadd.f32 %v740, %v900
      %v902 = vpop.f32.mrb[0].mxu0
      %903 = vmatprep.mubr.bf16.mxu0 0
      %904 = vmatmul.mubr.bf16.gmra.mrb[0].mxu0 %v658
      %v905 = vpop.f32.mrb[0].mxu0
      %v906 = vadd.f32 %v745, %v905
      %v907 = vpop.f32.mrb[0].mxu0
      %v908 = vpop.f32.mrb[0].mxu0
      %v909 = vadd.f32 %v748, %v908
      %v910 = vpop.f32.mrb[0].mxu0
      %911 = vmatprep.mubr.bf16.mxu0 0
      %912 = vmatmul.mubr.bf16.gmra.mrb[0].mxu0 %v661
      %v913 = vpop.f32.mrb[0].mxu0
      %v914 = vadd.f32 %v753, %v913
      %v915 = vpop.f32.mrb[0].mxu0
      %v916 = vpop.f32.mrb[0].mxu0
      %v917 = vadd.f32 %v756, %v916
      %v918 = vpop.f32.mrb[0].mxu0
      %919 = vmatprep.mubr.bf16.mxu0 0
      %920 = vmatmul.mubr.bf16.gmra.mrb[0].mxu0 %v664
      %v921 = vpop.f32.mrb[0].mxu0
      %v922 = vadd.f32 %v761, %v921
      %v923 = vpop.f32.mrb[0].mxu0
      %v924 = vpop.f32.mrb[0].mxu0
      %v925 = vadd.f32 %v764, %v924
      %v926 = vpop.f32.mrb[0].mxu0
      %927 = vmatprep.mubr.bf16.mxu0 0
      %928 = vmatmul.mubr.bf16.gmra.mrb[0].mxu0 %v667
      %v929 = vpop.f32.mrb[0].mxu0
      %v930 = vadd.f32 %v769, %v929
      %v931 = vpop.f32.mrb[0].mxu0
      %v932 = vpop.f32.mrb[0].mxu0
      %v933 = vadd.f32 %v772, %v932
      %v934 = vpop.f32.mrb[0].mxu0
      %935 = vmatprep.mubr.bf16.mxu0 0
      %936 = vmatmul.mubr.bf16.gmra.mrb[0].mxu0 %v670
      %v937 = vpop.f32.mrb[0].mxu0
      %v938 = vadd.f32 %v777, %v937
      %v939 = vpop.f32.mrb[0].mxu0
      %v940 = vpop.f32.mrb[0].mxu0
      %v941 = vadd.f32 %v780, %v940
      %v942 = vpop.f32.mrb[0].mxu0
      %943 = vmatprep.mubr.bf16.mxu0 0
      %944 = vmatmul.mubr.bf16.gmra.mrb[0].mxu0 %v673
      %v945 = vpop.f32.mrb[0].mxu0
      %v946 = vadd.f32 %v785, %v945
      %v947 = vpop.f32.mrb[0].mxu0
      %v948 = vpop.f32.mrb[0].mxu0
      %v949 = vadd.f32 %v788, %v948
      %v950 = vpop.f32.mrb[0].mxu0
      %951 = vmatprep.mubr.bf16.mxu0 0
      %952 = vmatmul.mubr.bf16.gmra.mrb[0].mxu0 %v676
      %v953 = vpop.f32.mrb[0].mxu0
      %v954 = vadd.f32 %v793, %v953
      %v955 = vpop.f32.mrb[0].mxu0
      %v956 = vpop.f32.mrb[0].mxu0
      %v957 = vadd.f32 %v796, %v956
      %v958 = vpop.f32.mrb[0].mxu0
      %959 = vmatprep.mubr.bf16.mxu0 0
      %960 = vmatmul.mubr.bf16.gmra.mrb[0].mxu0 %v679
      %v961 = vpop.f32.mrb[0].mxu0
      %v962 = vadd.f32 %v801, %v961
      %v963 = vpop.f32.mrb[0].mxu0
      %v964 = vpop.f32.mrb[0].mxu0
      %v965 = vadd.f32 %v804, %v964
      %v966 = vpop.f32.mrb[0].mxu0
      %967 = vmatprep.mubr.bf16.mxu0 0
      %968 = vmatmul.mubr.bf16.gmra.mrb[0].mxu0 %v682
      %v969 = vpop.f32.mrb[0].mxu0
      %v970 = vadd.f32 %v809, %v969
      %v971 = vpop.f32.mrb[0].mxu0
      %v972 = vpop.f32.mrb[0].mxu0
      %v973 = vadd.f32 %v812, %v972
      %v974 = vpop.f32.mrb[0].mxu0
      %975 = vmatprep.mubr.bf16.mxu0 0
      %976 = vmatmul.mubr.bf16.gmra.mrb[0].mxu0 %v685
      %v977 = vpop.f32.mrb[0].mxu0
      %v978 = vadd.f32 %v817, %v977
      %v979 = vpop.f32.mrb[0].mxu0
      %v980 = vpop.f32.mrb[0].mxu0
      %v981 = vadd.f32 %v820, %v980
      %v982 = vpop.f32.mrb[0].mxu0
      %983 = vmatprep.mubr.bf16.mxu0 0
      %984 = vmatmul.mubr.bf16.gmra.mrb[0].mxu0 %v688
      %v985 = vpop.f32.mrb[0].mxu0
      %v986 = vadd.f32 %v825, %v985
      %v987 = vpop.f32.mrb[0].mxu0
      %v988 = vpop.f32.mrb[0].mxu0
      %v989 = vadd.f32 %v828, %v988
      %v990 = vpop.f32.mrb[0].mxu0
      %991 = vmatprep.mubr.bf16.mxu0 0
      %992 = vmatmul.mubr.bf16.gmra.mrb[0].mxu0 %v691
      %v993 = vpop.f32.mrb[0].mxu0
      %v994 = vadd.f32 %v833, %v993
      %v995 = vpop.f32.mrb[0].mxu0
      %v996 = vpop.f32.mrb[0].mxu0
      %v997 = vadd.f32 %v836, %v996
      %v998 = vpop.f32.mrb[0].mxu0
      %999 = vmatprep.mubr.bf16.mxu0 0
      %1000 = vmatmul.mubr.bf16.gmra.mrb[0].mxu0 %v694
      %v1001 = vpop.f32.mrb[0].mxu0
      %v1002 = vadd.f32 %v841, %v1001
      %v1003 = vpop.f32.mrb[0].mxu0
      %v1004 = vpop.f32.mrb[0].mxu0
      %v1005 = vadd.f32 %v844, %v1004
      %v1006 = vpop.f32.mrb[0].mxu0
      %1007 = vmatprep.mubr.bf16.mxu0 0
      %1008 = vmatmul.mubr.bf16.gmra.mrb[0].mxu0 %v697
      %v1009 = vpop.f32.mrb[0].mxu0
      %v1010 = vadd.f32 %v849, %v1009
      %v1011 = vpop.f32.mrb[0].mxu0
      %v1012 = vpop.f32.mrb[0].mxu0
      %v1013 = vadd.f32 %v852, %v1012
      %v1014 = vpop.f32.mrb[0].mxu0
      %1015 = vmatprep.mubr.bf16.mxu0 0
      %1016 = vmatmul.mubr.bf16.gmra.mrb[0].mxu0 %v700
      %v1017 = vpop.f32.mrb[0].mxu0
      %v1018 = vadd.f32 %v857, %v1017
      %v1019 = vpop.f32.mrb[0].mxu0
      %v1020 = vpop.f32.mrb[0].mxu0
      %v1021 = vadd.f32 %v860, %v1020
      %v1022 = vpop.f32.mrb[0].mxu0
      %1023 = vdwg.mxu0
      %v1024 = vld [vmem:[%s2] sm:$0x1]
      %v1026 = vlaneseq
      %v1027 = vshrl.u32 %v1026, 7
      %v1028 = vsub.s32 0, %v1027
      %v1029 = vrot.slane %v1024, %v1028
      %v1031 = vmul.f32 %v898, %v1029
      %v1032 = vmul.f32 %v901, %v1029
      %v1033 = vmul.f32 %v906, %v1029
      %v1034 = vmul.f32 %v909, %v1029
      %v1035 = vmul.f32 %v914, %v1029
      %v1036 = vmul.f32 %v917, %v1029
      %v1037 = vmul.f32 %v922, %v1029
      %v1038 = vmul.f32 %v925, %v1029
      %v1039 = vmul.f32 %v930, %v1029
      %v1040 = vmul.f32 %v933, %v1029
      %v1041 = vmul.f32 %v938, %v1029
      %v1042 = vmul.f32 %v941, %v1029
      %v1043 = vmul.f32 %v946, %v1029
      %v1044 = vmul.f32 %v949, %v1029
      %v1045 = vmul.f32 %v954, %v1029
      %v1046 = vmul.f32 %v957, %v1029
      %v1047 = vmul.f32 %v962, %v1029
      %v1048 = vmul.f32 %v965, %v1029
      %v1049 = vmul.f32 %v970, %v1029
      %v1050 = vmul.f32 %v973, %v1029
      %v1051 = vmul.f32 %v978, %v1029
      %v1052 = vmul.f32 %v981, %v1029
      %v1053 = vmul.f32 %v986, %v1029
      %v1054 = vmul.f32 %v989, %v1029
      %v1055 = vmul.f32 %v994, %v1029
      %v1056 = vmul.f32 %v997, %v1029
      %v1057 = vmul.f32 %v1002, %v1029
      %v1058 = vmul.f32 %v1005, %v1029
      %v1059 = vmul.f32 %v1010, %v1029
      %v1060 = vmul.f32 %v1013, %v1029
      %v1061 = vmul.f32 %v1018, %v1029
      %v1062 = vmul.f32 %v1021, %v1029
      %v1063 = vld [vmem:[%s3] sm:$0x1]
      %v1065 = vlaneseq
      %v1066 = vshrl.u32 %v1065, 7
      %v1067 = vsub.s32 0, %v1066
      %v1068 = vrot.slane %v1063, %v1067
      %v1070 = vadd.f32 %v1031, %v1068
      %v1071 = vadd.f32 %v1032, %v1068
      %v1072 = vadd.f32 %v1033, %v1068
      %v1073 = vadd.f32 %v1034, %v1068
      %v1074 = vadd.f32 %v1035, %v1068
      %v1075 = vadd.f32 %v1036, %v1068
      %v1076 = vadd.f32 %v1037, %v1068
      %v1077 = vadd.f32 %v1038, %v1068
      %v1078 = vadd.f32 %v1039, %v1068
      %v1079 = vadd.f32 %v1040, %v1068
      %v1080 = vadd.f32 %v1041, %v1068
      %v1081 = vadd.f32 %v1042, %v1068
      %v1082 = vadd.f32 %v1043, %v1068
      %v1083 = vadd.f32 %v1044, %v1068
      %v1084 = vadd.f32 %v1045, %v1068
      %v1085 = vadd.f32 %v1046, %v1068
      %v1086 = vadd.f32 %v1047, %v1068
      %v1087 = vadd.f32 %v1048, %v1068
      %v1088 = vadd.f32 %v1049, %v1068
      %v1089 = vadd.f32 %v1050, %v1068
      %v1090 = vadd.f32 %v1051, %v1068
      %v1091 = vadd.f32 %v1052, %v1068
      %v1092 = vadd.f32 %v1053, %v1068
      %v1093 = vadd.f32 %v1054, %v1068
      %v1094 = vadd.f32 %v1055, %v1068
      %v1095 = vadd.f32 %v1056, %v1068
      %v1096 = vadd.f32 %v1057, %v1068
      %v1097 = vadd.f32 %v1058, %v1068
      %v1098 = vadd.f32 %v1059, %v1068
      %v1099 = vadd.f32 %v1060, %v1068
      %v1100 = vadd.f32 %v1061, %v1068
      %v1101 = vadd.f32 %v1062, %v1068
      %v1102 = vmax.f32 %v1070, 0.0
      %v1103 = vmax.f32 %v1071, 0.0
      %v1104 = vmax.f32 %v1072, 0.0
      %v1105 = vmax.f32 %v1073, 0.0
      %v1106 = vmax.f32 %v1074, 0.0
      %v1107 = vmax.f32 %v1075, 0.0
      %v1108 = vmax.f32 %v1076, 0.0
      %v1109 = vmax.f32 %v1077, 0.0
      %v1110 = vmax.f32 %v1078, 0.0
      %v1111 = vmax.f32 %v1079, 0.0
      %v1112 = vmax.f32 %v1080, 0.0
      %v1113 = vmax.f32 %v1081, 0.0
      %v1114 = vmax.f32 %v1082, 0.0
      %v1115 = vmax.f32 %v1083, 0.0
      %v1116 = vmax.f32 %v1084, 0.0
      %v1117 = vmax.f32 %v1085, 0.0
      %v1118 = vmax.f32 %v1086, 0.0
      %v1119 = vmax.f32 %v1087, 0.0
      %v1120 = vmax.f32 %v1088, 0.0
      %v1121 = vmax.f32 %v1089, 0.0
      %v1122 = vmax.f32 %v1090, 0.0
      %v1123 = vmax.f32 %v1091, 0.0
      %v1124 = vmax.f32 %v1092, 0.0
      %v1125 = vmax.f32 %v1093, 0.0
      %v1126 = vmax.f32 %v1094, 0.0
      %v1127 = vmax.f32 %v1095, 0.0
      %v1128 = vmax.f32 %v1096, 0.0
      %v1129 = vmax.f32 %v1097, 0.0
      %v1130 = vmax.f32 %v1098, 0.0
      %v1131 = vmax.f32 %v1099, 0.0
      %v1132 = vmax.f32 %v1100, 0.0
      %v1133 = vmax.f32 %v1101, 0.0
      %v1134 = vpack.c.bf16 %v1103, %v1102
      %v1135 = vpack.c.bf16 %v1105, %v1104
      %v1136 = vpack.c.bf16 %v1107, %v1106
      %v1137 = vpack.c.bf16 %v1109, %v1108
      %v1138 = vpack.c.bf16 %v1111, %v1110
      %v1139 = vpack.c.bf16 %v1113, %v1112
      %v1140 = vpack.c.bf16 %v1115, %v1114
      %v1141 = vpack.c.bf16 %v1117, %v1116
      %v1142 = vpack.c.bf16 %v1119, %v1118
      %v1143 = vpack.c.bf16 %v1121, %v1120
      %v1144 = vpack.c.bf16 %v1123, %v1122
      %v1145 = vpack.c.bf16 %v1125, %v1124
      %v1146 = vpack.c.bf16 %v1127, %v1126
      %v1147 = vpack.c.bf16 %v1129, %v1128
      %v1148 = vpack.c.bf16 %v1131, %v1130
      %v1149 = vpack.c.bf16 %v1133, %v1132
      %v1166 = vunpack.c.l.b16 %v1134
      %v1167 = vunpack.c.h.b16 %v1134
      %v1168 = vunpack.c.l.b16 %v1135
      %v1169 = vunpack.c.h.b16 %v1135
      %v1170 = vunpack.c.l.b16 %v1136
      %v1171 = vunpack.c.h.b16 %v1136
      %v1172 = vunpack.c.l.b16 %v1137
      %v1173 = vunpack.c.h.b16 %v1137
      %v1174 = vunpack.c.l.b16 %v1138
      %v1175 = vunpack.c.h.b16 %v1138
      %v1176 = vunpack.c.l.b16 %v1139
      %v1177 = vunpack.c.h.b16 %v1139
      %v1178 = vunpack.c.l.b16 %v1140
      %v1179 = vunpack.c.h.b16 %v1140
      %v1180 = vunpack.c.l.b16 %v1141
      %v1181 = vunpack.c.h.b16 %v1141
      %v1182 = vunpack.c.l.b16 %v1142
      %v1183 = vunpack.c.h.b16 %v1142
      %v1184 = vunpack.c.l.b16 %v1143
      %v1185 = vunpack.c.h.b16 %v1143
      %v1186 = vunpack.c.l.b16 %v1144
      %v1187 = vunpack.c.h.b16 %v1144
      %v1188 = vunpack.c.l.b16 %v1145
      %v1189 = vunpack.c.h.b16 %v1145
      %v1190 = vunpack.c.l.b16 %v1146
      %v1191 = vunpack.c.h.b16 %v1146
      %v1192 = vunpack.c.l.b16 %v1147
      %v1193 = vunpack.c.h.b16 %v1147
      %v1194 = vunpack.c.l.b16 %v1148
      %v1195 = vunpack.c.h.b16 %v1148
      %v1196 = vunpack.c.l.b16 %v1149
      %v1197 = vunpack.c.h.b16 %v1149
      %v1198 = vpack.c.b16 %v1166, %v1166
      %v1199 = vpack.c.b16 %v1167, %v1167
      %v1200 = vpack.c.b16 %v1168, %v1168
      %v1201 = vpack.c.b16 %v1169, %v1169
      %v1202 = vpack.c.b16 %v1170, %v1170
      %v1203 = vpack.c.b16 %v1171, %v1171
      %v1204 = vpack.c.b16 %v1172, %v1172
      %v1205 = vpack.c.b16 %v1173, %v1173
      %v1206 = vpack.c.b16 %v1174, %v1174
      %v1207 = vpack.c.b16 %v1175, %v1175
      %v1208 = vpack.c.b16 %v1176, %v1176
      %v1209 = vpack.c.b16 %v1177, %v1177
      %v1210 = vpack.c.b16 %v1178, %v1178
      %v1211 = vpack.c.b16 %v1179, %v1179
      %v1212 = vpack.c.b16 %v1180, %v1180
      %v1213 = vpack.c.b16 %v1181, %v1181
      %v1214 = vpack.c.b16 %v1182, %v1182
      %v1215 = vpack.c.b16 %v1183, %v1183
      %v1216 = vpack.c.b16 %v1184, %v1184
      %v1217 = vpack.c.b16 %v1185, %v1185
      %v1218 = vpack.c.b16 %v1186, %v1186
      %v1219 = vpack.c.b16 %v1187, %v1187
      %v1220 = vpack.c.b16 %v1188, %v1188
      %v1221 = vpack.c.b16 %v1189, %v1189
      %v1222 = vpack.c.b16 %v1190, %v1190
      %v1223 = vpack.c.b16 %v1191, %v1191
      %v1224 = vpack.c.b16 %v1192, %v1192
      %v1225 = vpack.c.b16 %v1193, %v1193
      %v1226 = vpack.c.b16 %v1194, %v1194
      %v1227 = vpack.c.b16 %v1195, %v1195
      %v1228 = vpack.c.b16 %v1196, %v1196
      %v1229 = vpack.c.b16 %v1197, %v1197
      %vm1262 = vcmask 519168
      %1263 = vst.msk [vmem:[%s202] sm:$0xf] %vm1262, %v1198
      %1264 = vst.msk [vmem:[%s202 + $0x4] sm:$0xf] %vm1262, %v1199
      %1265 = vst.msk [vmem:[%s202 + $0x8] sm:$0xf] %vm1262, %v1200
      %1266 = vst.msk [vmem:[%s202 + $0xc] sm:$0xf] %vm1262, %v1201
      %1267 = vst.msk [vmem:[%s202 + $0x10] sm:$0xf] %vm1262, %v1202
      %1268 = vst.msk [vmem:[%s202 + $0x14] sm:$0xf] %vm1262, %v1203
      %1269 = vst.msk [vmem:[%s202 + $0x18] sm:$0xf] %vm1262, %v1204
      %1270 = vst.msk [vmem:[%s202 + $0x1c] sm:$0xf] %vm1262, %v1205
      %1271 = vst.msk [vmem:[%s202 + $0x20] sm:$0xf] %vm1262, %v1206
      %1272 = vst.msk [vmem:[%s202 + $0x24] sm:$0xf] %vm1262, %v1207
      %1273 = vst.msk [vmem:[%s202 + $0x28] sm:$0xf] %vm1262, %v1208
      %1274 = vst.msk [vmem:[%s202 + $0x2c] sm:$0xf] %vm1262, %v1209
      %1275 = vst.msk [vmem:[%s202 + $0x30] sm:$0xf] %vm1262, %v1210
      %1276 = vst.msk [vmem:[%s202 + $0x34] sm:$0xf] %vm1262, %v1211
      %1277 = vst.msk [vmem:[%s202 + $0x38] sm:$0xf] %vm1262, %v1212
      %1278 = vst.msk [vmem:[%s202 + $0x3c] sm:$0xf] %vm1262, %v1213
      %1279 = vst.msk [vmem:[%s202 + $0x40] sm:$0xf] %vm1262, %v1214
      %1280 = vst.msk [vmem:[%s202 + $0x44] sm:$0xf] %vm1262, %v1215
      %1281 = vst.msk [vmem:[%s202 + $0x48] sm:$0xf] %vm1262, %v1216
      %1282 = vst.msk [vmem:[%s202 + $0x4c] sm:$0xf] %vm1262, %v1217
      %1283 = vst.msk [vmem:[%s202 + $0x50] sm:$0xf] %vm1262, %v1218
      %1284 = vst.msk [vmem:[%s202 + $0x54] sm:$0xf] %vm1262, %v1219
      %1285 = vst.msk [vmem:[%s202 + $0x58] sm:$0xf] %vm1262, %v1220
      %1286 = vst.msk [vmem:[%s202 + $0x5c] sm:$0xf] %vm1262, %v1221
      %1287 = vst.msk [vmem:[%s202 + $0x60] sm:$0xf] %vm1262, %v1222
      %1288 = vst.msk [vmem:[%s202 + $0x64] sm:$0xf] %vm1262, %v1223
      %1289 = vst.msk [vmem:[%s202 + $0x68] sm:$0xf] %vm1262, %v1224
      %1290 = vst.msk [vmem:[%s202 + $0x6c] sm:$0xf] %vm1262, %v1225
      %1291 = vst.msk [vmem:[%s202 + $0x70] sm:$0xf] %vm1262, %v1226
      %1292 = vst.msk [vmem:[%s202 + $0x74] sm:$0xf] %vm1262, %v1227
      %1293 = vst.msk [vmem:[%s202 + $0x78] sm:$0xf] %vm1262, %v1228
      %1294 = vst.msk [vmem:[%s202 + $0x7c] sm:$0xf] %vm1262, %v1229
      %s1295 = smul.u32 32, %s15
      %p1296 = scmp.lt.s32.totalorder %s1295, 63
      %s1297 = scalar_select %p1296, %s1295, 63
      %s1298 = smul.addr %s1297, 4
      %s1299 = scalar_lea.vmem %s4, %s1298
      // Predicated region
      $region37: #{resnet50vd_small_forward.6} parent=35 // pred_check
        %p1300 = pneg %p122
      $region38: #{resnet50vd_small_forward.6} parent=35 // pred_check_branch
        %1302 = sbr.rel (%p1300) target = $region40
      $region39: #{resnet50vd_small_forward.6} parent=35 // pred_region
        %s1303 = smul.u32 32, %s15
      $region40: #{resnet50vd_small_forward.6} parent=35 // pred_fallthru
        _
    $region36: #{resnet50vd_small_forward.6} parent=5 // pred_fallthru
      _
    %p1304 = scmp.le.s32.totalorder 2, %s10
    // Predicated region
    $region41: #{resnet50vd_small_forward.6} parent=5 // pred_check
      %p1305 = pneg %p1304
    $region42: #{resnet50vd_small_forward.6} parent=5 // pred_check_branch
      %1307 = sbr.rel (%p1305) target = $region44
    $region43: #{resnet50vd_small_forward.6} parent=5 // pred_region
      %s1308 = ssub.s32 %s10, 2
      // Predicated region
      $region45: #{resnet50vd_small_forward.6} parent=43 // pred_check
        %p1309 = pneg %p128
      $region46: #{resnet50vd_small_forward.6} parent=43 // pred_check_branch
        %1311 = sbr.rel (%p1309) target = $region48
      $region47: #{resnet50vd_small_forward.6} parent=43 // pred_region
        %s1312 = smul.u32 32, %s16
        %p1313 = scmp.lt.s32.totalorder %s1312, 63
        %s1314 = scalar_select %p1313, %s1312, 63
        %s1315 = smul.addr %s1314, 4
        %s1316 = scalar_lea.vmem %s4, %s1315
      $region48: #{resnet50vd_small_forward.6} parent=43 // pred_fallthru
        _
    $region44: #{resnet50vd_small_forward.6} parent=5 // pred_fallthru
      _
  $region6: #{resnet50vd_small_forward.6} parent=0 // loop_footer
    %s14 = sadd.s32 1, %s10
  $region7: #{resnet50vd_small_forward.6} parent=0 // loop_footer_branch
    %9 = sbr.rel target = $region3
  $region8: #{resnet50vd_small_forward.6} parent=0 // loop_exit
    _

// kernel: resnet50vd_small_forward.7
$region0: #{resnet50vd_small_forward.7}
  #allocation0 [shape = 'u32[]', space=smem, size = 0x4, offset = 0x4, fixed_abs, tag = 'smem constant byte address 0x4 - core index']
  #allocation1 [shape = 'u32[144,128]{1,0:T(1,128)}', space=vmem, size = 0x12000, scoped, tag = 'internal scratch']
  %s0 = inlined_call_operand.vmem [shape: bf16[2,18,18,64], index: 0, kind: input, shape index: {}]
  %s1 = inlined_call_operand.vmem [shape: f32[2,16,16,64], index: 1, kind: output, shape index: {}]
  %s2 = sld [smem:[#allocation0]]
  $region37: #{resnet50vd_small_forward.7} parent=0
    _
  %s4 = ssub.s32 1, %s2
  %s5 = scalar_select 0, %s4, %s2
  loop: start=0, step=1, limit=4
  $region2: #{resnet50vd_small_forward.7} parent=0 // loop_pre_header
    _
  $region3: #{resnet50vd_small_forward.7} parent=0 // loop_header
    %s7 = sphi 0, %s11
    %p8 = scmp.ge.s32.totalorder %s7, 4
    %s17 = sphi 0, %s19
    %s20 = sphi 0, %s17
    %s21 = sphi 0, %s20
    %s37 = sphi 0, %s21
    %s43 = sphi 0, %s45
    %s46 = sphi 0, %s43
    %s47 = sphi 0, %s46
    %s63 = sphi 0, %s47
  $region4: #{resnet50vd_small_forward.7} parent=0 // loop_header_branch
    %10 = sbr.rel (%p8) target = $region8
  $region5: #{resnet50vd_small_forward.7} parent=0 // loop_body
    %s12 = ssub.s32 %s7, 1
    %s13 = ssub.s32 %s7, 2
    %s14 = sadd.s32 %s7, 1
    %s15 = ssub.s32 %s7, %s14
    %p16 = scmp.eq.s32.totalorder %s15, 0
    %s18 = sadd.s32 %s17, 1
    %s19 = scalar_select %p16, %s17, %s18
    %p22 = pneg %p16
    %p23 = scmp.eq.s32.totalorder %s7, 1
    %p24 = por %p22, %p23
    %p25 = scmp.ne.s32.totalorder %s17, %s20
    %p26 = scmp.eq.s32.totalorder %s7, 0
    %p27 = por %p25, %p26
    %p28 = scmp.ne.s32.totalorder %s17, %s20
    %p29 = scmp.eq.s32.totalorder %s12, 1
    %p30 = por %p28, %p29
    %p31 = scmp.ne.s32.totalorder %s20, %s21
    %p32 = scmp.eq.s32.totalorder %s12, 0
    %p33 = por %p31, %p32
    %p34 = scmp.ne.s32.totalorder %s20, %s21
    %p35 = scmp.eq.s32.totalorder %s13, 1
    %p36 = por %p34, %p35
    %p38 = scmp.ne.s32.totalorder %s21, %s37
    %p39 = scmp.eq.s32.totalorder %s13, 0
    %p40 = por %p38, %p39
    %s41 = ssub.s32 %s7, %s14
    %p42 = scmp.eq.s32.totalorder %s41, 0
    %s44 = sadd.s32 %s43, 1
    %s45 = scalar_select %p42, %s43, %s44
    %p48 = pneg %p42
    %p49 = scmp.eq.s32.totalorder %s7, 1
    %p50 = por %p48, %p49
    %p51 = scmp.ne.s32.totalorder %s43, %s46
    %p52 = scmp.eq.s32.totalorder %s7, 0
    %p53 = por %p51, %p52
    %p54 = scmp.ne.s32.totalorder %s43, %s46
    %p55 = scmp.eq.s32.totalorder %s12, 1
    %p56 = por %p54, %p55
    %p57 = scmp.ne.s32.totalorder %s46, %s47
    %p58 = scmp.eq.s32.totalorder %s12, 0
    %p59 = por %p57, %p58
    %p60 = scmp.ne.s32.totalorder %s46, %s47
    %p61 = scmp.eq.s32.totalorder %s13, 1
    %p62 = por %p60, %p61
    %p64 = scmp.ne.s32.totalorder %s47, %s63
    %p65 = scmp.eq.s32.totalorder %s13, 0
    %p66 = por %p64, %p65
    %p67 = scmp.le.s32.totalorder 1, %s7
    %p68 = scmp.lt.s32.totalorder %s7, 3
    %p69 = pnand %p67, %p68
    %p70 = pneg %p69
    // Predicated region
    $region9: #{resnet50vd_small_forward.7} parent=5 // pred_check
      _
    $region10: #{resnet50vd_small_forward.7} parent=5 // pred_check_branch
      %72 = sbr.rel (%p69) target = $region12
    $region11: #{resnet50vd_small_forward.7} parent=5 // pred_region
      %s73 = ssub.s32 %s7, 1
    $region12: #{resnet50vd_small_forward.7} parent=5 // pred_fallthru
      _
    %p74 = scmp.lt.s32.totalorder %s7, 2
    // Predicated region
    $region13: #{resnet50vd_small_forward.7} parent=5 // pred_check
      %p75 = pneg %p74
    $region14: #{resnet50vd_small_forward.7} parent=5 // pred_check_branch
      %77 = sbr.rel (%p75) target = $region16
    $region15: #{resnet50vd_small_forward.7} parent=5 // pred_region
      // Predicated region
      $region17: #{resnet50vd_small_forward.7} parent=15 // pred_check
        %p78 = pneg %p27
      $region18: #{resnet50vd_small_forward.7} parent=15 // pred_check_branch
        %80 = sbr.rel (%p78) target = $region20
      $region19: #{resnet50vd_small_forward.7} parent=15 // pred_region
        %p81 = scmp.lt.s32.totalorder %s7, 1
        %s82 = scalar_select %p81, %s7, 1
        %s83 = smul.addr %s82, 54
        %s84 = smul.addr %s83, 4
        %s85 = scalar_lea.vmem %s0, %s84
      $region20: #{resnet50vd_small_forward.7} parent=15 // pred_fallthru
        _
    $region16: #{resnet50vd_small_forward.7} parent=5 // pred_fallthru
      _
    %p86 = scmp.le.s32.totalorder 1, %s7
    %p87 = scmp.lt.s32.totalorder %s7, 3
    %p88 = pnand %p86, %p87
    %p89 = pneg %p88
    // Predicated region
    $region21: #{resnet50vd_small_forward.7} parent=5 // pred_check
      _
    $region22: #{resnet50vd_small_forward.7} parent=5 // pred_check_branch
      %91 = sbr.rel (%p88) target = $region24
    $region23: #{resnet50vd_small_forward.7} parent=5 // pred_region
      %s92 = ssub.s32 %s7, 1
      %p93 = scmp.lt.s32.totalorder %s12, 1
      %s94 = scalar_select %p93, %s12, 1
      %s95 = smul.addr %s94, 54
      %s96 = smul.addr %s95, 4
      %s97 = scalar_lea.vmem %s0, %s96
      %p98 = pneg %p33
      %p99 = pneg %p30
      %p100 = pneg %p59
      %p101 = pneg %p56
      %p102 = scmp.lt.s32.totalorder %s12, 1
      %s103 = scalar_select %p102, %s12, 1
      %s104 = smul.addr %s103, 32
      %s105 = smul.addr %s104, 8
      %s106 = scalar_lea.vmem %s1, %s105
      %p107 = scmp.lt.s32.totalorder %s12, 1
      %s108 = scalar_select %p107, %s12, 1
      %s109 = smul.addr %s108, 54
      %s110 = smul.addr %s109, 4
      %s111 = scalar_lea.vmem %s0, %s110
      %p112 = scmp.lt.s32.totalorder %s12, 1
      %s113 = scalar_select %p112, %s12, 1
      %s114 = smul.addr %s113, 32
      %s115 = smul.addr %s114, 8
      %s116 = scalar_lea.vmem %s1, %s115
      %v117 = vld [vmem:[%s111] sm:$0xf]
      %v118 = vld [vmem:[%s111 + $0x4] sm:$0xf]
      %v119 = vld [vmem:[%s111 + $0x8] sm:$0x1]
      %v120 = vld [vmem:[%s111 + $0xc] sm:$0xf]
      %v121 = vld [vmem:[%s111 + $0x10] sm:$0xf]
      %v122 = vld [vmem:[%s111 + $0x14] sm:$0x1]
      %v123 = vld [vmem:[%s111 + $0x18] sm:$0xf]
      %v124 = vld [vmem:[%s111 + $0x1c] sm:$0xf]
      %v125 = vld [vmem:[%s111 + $0x20] sm:$0x1]
      %v126 = vld [vmem:[%s111 + $0x24] sm:$0xf]
      %v127 = vld [vmem:[%s111 + $0x28] sm:$0xf]
      %v128 = vld [vmem:[%s111 + $0x2c] sm:$0x1]
      %v129 = vld [vmem:[%s111 + $0x30] sm:$0xf]
      %v130 = vld [vmem:[%s111 + $0x34] sm:$0xf]
      %v131 = vld [vmem:[%s111 + $0x38] sm:$0x1]
      %v132 = vld [vmem:[%s111 + $0x3c] sm:$0xf]
      %v133 = vld [vmem:[%s111 + $0x40] sm:$0xf]
      %v134 = vld [vmem:[%s111 + $0x44] sm:$0x1]
      %v135 = vld [vmem:[%s111 + $0x48] sm:$0xf]
      %v136 = vld [vmem:[%s111 + $0x4c] sm:$0xf]
      %v137 = vld [vmem:[%s111 + $0x50] sm:$0x1]
      %v138 = vld [vmem:[%s111 + $0x54] sm:$0xf]
      %v139 = vld [vmem:[%s111 + $0x58] sm:$0xf]
      %v140 = vld [vmem:[%s111 + $0x5c] sm:$0x1]
      %v141 = vld [vmem:[%s111 + $0x60] sm:$0xf]
      %v142 = vld [vmem:[%s111 + $0x64] sm:$0xf]
      %v143 = vld [vmem:[%s111 + $0x68] sm:$0x1]
      %v144 = vld [vmem:[%s111 + $0x6c] sm:$0xf]
      %v145 = vld [vmem:[%s111 + $0x70] sm:$0xf]
      %v146 = vld [vmem:[%s111 + $0x74] sm:$0x1]
      %v147 = vld [vmem:[%s111 + $0x78] sm:$0xf]
      %v148 = vld [vmem:[%s111 + $0x7c] sm:$0xf]
      %v149 = vld [vmem:[%s111 + $0x80] sm:$0x1]
      %v150 = vld [vmem:[%s111 + $0x84] sm:$0xf]
      %v151 = vld [vmem:[%s111 + $0x88] sm:$0xf]
      %v152 = vld [vmem:[%s111 + $0x8c] sm:$0x1]
      %v153 = vld [vmem:[%s111 + $0x90] sm:$0xf]
      %v154 = vld [vmem:[%s111 + $0x94] sm:$0xf]
      %v155 = vld [vmem:[%s111 + $0x98] sm:$0x1]
      %v156 = vld [vmem:[%s111 + $0x9c] sm:$0xf]
      %v157 = vld [vmem:[%s111 + $0xa0] sm:$0xf]
      %v158 = vld [vmem:[%s111 + $0xa4] sm:$0x1]
      %v159 = vld [vmem:[%s111 + $0xa8] sm:$0xf]
      %v160 = vld [vmem:[%s111 + $0xac] sm:$0xf]
      %v161 = vld [vmem:[%s111 + $0xb0] sm:$0x1]
      %v162 = vld [vmem:[%s111 + $0xb4] sm:$0xf]
      %v163 = vld [vmem:[%s111 + $0xb8] sm:$0xf]
      %v164 = vld [vmem:[%s111 + $0xbc] sm:$0x1]
      %v165 = vld [vmem:[%s111 + $0xc0] sm:$0xf]
      %v166 = vld [vmem:[%s111 + $0xc4] sm:$0xf]
      %v167 = vld [vmem:[%s111 + $0xc8] sm:$0x1]
      %v168 = vld [vmem:[%s111 + $0xcc] sm:$0xf]
      %v169 = vld [vmem:[%s111 + $0xd0] sm:$0xf]
      %v170 = vld [vmem:[%s111 + $0xd4] sm:$0x1]
      %vm171 = vsmask.f32 3328
      %vm172 = vsmask.f32 7440
      %vm173 = vmor %vm171, %vm172
      %v175 = vshrl.u32 %v117, 16
      %v177 = vrot.slane %v175, 4
      %v178 = vshll.u32 %v117, 16
      %v180 = vrot.slane %v178, 5
      %v181 = vor.u32 %v177, %v180
      %v182 = vrot.slane %v181, 4
      %v184 = vshll.u32 %v118, 16
      %v186 = vrot.slane %v184, 5
      %v187 = vsel %vm173, %v182, %v186
      %v188 = vshrl.u32 %v118, 16
      %v190 = vrot.slane %v188, 4
      %v191 = vor.u32 %v190, %v186
      %v192 = vrot.slane %v191, 4
      %v194 = vshll.u32 %v119, 16
      %v196 = vrot.slane %v194, 5
      %v197 = vsel %vm173, %v192, %v196
      %v199 = vshrl.u32 %v120, 16
      %v201 = vrot.slane %v199, 4
      %v202 = vshll.u32 %v120, 16
      %v204 = vrot.slane %v202, 5
      %v205 = vor.u32 %v201, %v204
      %v206 = vrot.slane %v205, 4
      %v208 = vshll.u32 %v121, 16
      %v210 = vrot.slane %v208, 5
      %v211 = vsel %vm173, %v206, %v210
      %v212 = vshrl.u32 %v121, 16
      %v214 = vrot.slane %v212, 4
      %v215 = vor.u32 %v214, %v210
      %v216 = vrot.slane %v215, 4
      %v218 = vshll.u32 %v122, 16
      %v220 = vrot.slane %v218, 5
      %v221 = vsel %vm173, %v216, %v220
      %v223 = vshrl.u32 %v123, 16
      %v225 = vrot.slane %v223, 4
      %v226 = vshll.u32 %v123, 16
      %v228 = vrot.slane %v226, 5
      %v229 = vor.u32 %v225, %v228
      %v230 = vrot.slane %v229, 4
      %v232 = vshll.u32 %v124, 16
      %v234 = vrot.slane %v232, 5
      %v235 = vsel %vm173, %v230, %v234
      %v236 = vshrl.u32 %v124, 16
      %v238 = vrot.slane %v236, 4
      %v239 = vor.u32 %v238, %v234
      %v240 = vrot.slane %v239, 4
      %v242 = vshll.u32 %v125, 16
      %v244 = vrot.slane %v242, 5
      %v245 = vsel %vm173, %v240, %v244
      %v247 = vshrl.u32 %v126, 16
      %v249 = vrot.slane %v247, 4
      %v250 = vshll.u32 %v126, 16
      %v252 = vrot.slane %v250, 5
      %v253 = vor.u32 %v249, %v252
      %v254 = vrot.slane %v253, 4
      %v256 = vshll.u32 %v127, 16
      %v258 = vrot.slane %v256, 5
      %v259 = vsel %vm173, %v254, %v258
      %v260 = vshrl.u32 %v127, 16
      %v262 = vrot.slane %v260, 4
      %v263 = vor.u32 %v262, %v258
      %v264 = vrot.slane %v263, 4
      %v266 = vshll.u32 %v128, 16
      %v268 = vrot.slane %v266, 5
      %v269 = vsel %vm173, %v264, %v268
      %v271 = vshrl.u32 %v129, 16
      %v273 = vrot.slane %v271, 4
      %v274 = vshll.u32 %v129, 16
      %v276 = vrot.slane %v274, 5
      %v277 = vor.u32 %v273, %v276
      %v278 = vrot.slane %v277, 4
      %v280 = vshll.u32 %v130, 16
      %v282 = vrot.slane %v280, 5
      %v283 = vsel %vm173, %v278, %v282
      %v284 = vshrl.u32 %v130, 16
      %v286 = vrot.slane %v284, 4
      %v287 = vor.u32 %v286, %v282
      %v288 = vrot.slane %v287, 4
      %v290 = vshll.u32 %v131, 16
      %v292 = vrot.slane %v290, 5
      %v293 = vsel %vm173, %v288, %v292
      %v295 = vshrl.u32 %v132, 16
      %v297 = vrot.slane %v295, 4
      %v298 = vshll.u32 %v132, 16
      %v300 = vrot.slane %v298, 5
      %v301 = vor.u32 %v297, %v300
      %v302 = vrot.slane %v301, 4
      %v304 = vshll.u32 %v133, 16
      %v306 = vrot.slane %v304, 5
      %v307 = vsel %vm173, %v302, %v306
      %v308 = vshrl.u32 %v133, 16
      %v310 = vrot.slane %v308, 4
      %v311 = vor.u32 %v310, %v306
      %v312 = vrot.slane %v311, 4
      %v314 = vshll.u32 %v134, 16
      %v316 = vrot.slane %v314, 5
      %v317 = vsel %vm173, %v312, %v316
      %v319 = vshrl.u32 %v135, 16
      %v321 = vrot.slane %v319, 4
      %v322 = vshll.u32 %v135, 16
      %v324 = vrot.slane %v322, 5
      %v325 = vor.u32 %v321, %v324
      %v326 = vrot.slane %v325, 4
      %v328 = vshll.u32 %v136, 16
      %v330 = vrot.slane %v328, 5
      %v331 = vsel %vm173, %v326, %v330
      %v332 = vshrl.u32 %v136, 16
      %v334 = vrot.slane %v332, 4
      %v335 = vor.u32 %v334, %v330
      %v336 = vrot.slane %v335, 4
      %v338 = vshll.u32 %v137, 16
      %v340 = vrot.slane %v338, 5
      %v341 = vsel %vm173, %v336, %v340
      %v343 = vshrl.u32 %v138, 16
      %v345 = vrot.slane %v343, 4
      %v346 = vshll.u32 %v138, 16
      %v348 = vrot.slane %v346, 5
      %v349 = vor.u32 %v345, %v348
      %v350 = vrot.slane %v349, 4
      %v352 = vshll.u32 %v139, 16
      %v354 = vrot.slane %v352, 5
      %v355 = vsel %vm173, %v350, %v354
      %v356 = vshrl.u32 %v139, 16
      %v358 = vrot.slane %v356, 4
      %v359 = vor.u32 %v358, %v354
      %v360 = vrot.slane %v359, 4
      %v362 = vshll.u32 %v140, 16
      %v364 = vrot.slane %v362, 5
      %v365 = vsel %vm173, %v360, %v364
      %v367 = vshrl.u32 %v141, 16
      %v369 = vrot.slane %v367, 4
      %v370 = vshll.u32 %v141, 16
      %v372 = vrot.slane %v370, 5
      %v373 = vor.u32 %v369, %v372
      %v374 = vrot.slane %v373, 4
      %v376 = vshll.u32 %v142, 16
      %v378 = vrot.slane %v376, 5
      %v379 = vsel %vm173, %v374, %v378
      %v380 = vshrl.u32 %v142, 16
      %v382 = vrot.slane %v380, 4
      %v383 = vor.u32 %v382, %v378
      %v384 = vrot.slane %v383, 4
      %v386 = vshll.u32 %v143, 16
      %v388 = vrot.slane %v386, 5
      %v389 = vsel %vm173, %v384, %v388
      %v391 = vshrl.u32 %v144, 16
      %v393 = vrot.slane %v391, 4
      %v394 = vshll.u32 %v144, 16
      %v396 = vrot.slane %v394, 5
      %v397 = vor.u32 %v393, %v396
      %v398 = vrot.slane %v397, 4
      %v400 = vshll.u32 %v145, 16
      %v402 = vrot.slane %v400, 5
      %v403 = vsel %vm173, %v398, %v402
      %v404 = vshrl.u32 %v145, 16
      %v406 = vrot.slane %v404, 4
      %v407 = vor.u32 %v406, %v402
      %v408 = vrot.slane %v407, 4
      %v410 = vshll.u32 %v146, 16
      %v412 = vrot.slane %v410, 5
      %v413 = vsel %vm173, %v408, %v412
      %v415 = vshrl.u32 %v147, 16
      %v417 = vrot.slane %v415, 4
      %v418 = vshll.u32 %v147, 16
      %v420 = vrot.slane %v418, 5
      %v421 = vor.u32 %v417, %v420
      %v422 = vrot.slane %v421, 4
      %v424 = vshll.u32 %v148, 16
      %v426 = vrot.slane %v424, 5
      %v427 = vsel %vm173, %v422, %v426
      %v428 = vshrl.u32 %v148, 16
      %v430 = vrot.slane %v428, 4
      %v431 = vor.u32 %v430, %v426
      %v432 = vrot.slane %v431, 4
      %v434 = vshll.u32 %v149, 16
      %v436 = vrot.slane %v434, 5
      %v437 = vsel %vm173, %v432, %v436
      %v439 = vshrl.u32 %v150, 16
      %v441 = vrot.slane %v439, 4
      %v442 = vshll.u32 %v150, 16
      %v444 = vrot.slane %v442, 5
      %v445 = vor.u32 %v441, %v444
      %v446 = vrot.slane %v445, 4
      %v448 = vshll.u32 %v151, 16
      %v450 = vrot.slane %v448, 5
      %v451 = vsel %vm173, %v446, %v450
      %v452 = vshrl.u32 %v151, 16
      %v454 = vrot.slane %v452, 4
      %v455 = vor.u32 %v454, %v450
      %v456 = vrot.slane %v455, 4
      %v458 = vshll.u32 %v152, 16
      %v460 = vrot.slane %v458, 5
      %v461 = vsel %vm173, %v456, %v460
      %v463 = vshrl.u32 %v153, 16
      %v465 = vrot.slane %v463, 4
      %v466 = vshll.u32 %v153, 16
      %v468 = vrot.slane %v466, 5
      %v469 = vor.u32 %v465, %v468
      %v470 = vrot.slane %v469, 4
      %v472 = vshll.u32 %v154, 16
      %v474 = vrot.slane %v472, 5
      %v475 = vsel %vm173, %v470, %v474
      %v476 = vshrl.u32 %v154, 16
      %v478 = vrot.slane %v476, 4
      %v479 = vor.u32 %v478, %v474
      %v480 = vrot.slane %v479, 4
      %v482 = vshll.u32 %v155, 16
      %v484 = vrot.slane %v482, 5
      %v485 = vsel %vm173, %v480, %v484
      %v487 = vshrl.u32 %v156, 16
      %v489 = vrot.slane %v487, 4
      %v490 = vshll.u32 %v156, 16
      %v492 = vrot.slane %v490, 5
      %v493 = vor.u32 %v489, %v492
      %v494 = vrot.slane %v493, 4
      %v496 = vshll.u32 %v157, 16
      %v498 = vrot.slane %v496, 5
      %v499 = vsel %vm173, %v494, %v498
      %v500 = vshrl.u32 %v157, 16
      %v502 = vrot.slane %v500, 4
      %v503 = vor.u32 %v502, %v498
      %v504 = vrot.slane %v503, 4
      %v506 = vshll.u32 %v158, 16
      %v508 = vrot.slane %v506, 5
      %v509 = vsel %vm173, %v504, %v508
      %v511 = vshrl.u32 %v159, 16
      %v513 = vrot.slane %v511, 4
      %v514 = vshll.u32 %v159, 16
      %v516 = vrot.slane %v514, 5
      %v517 = vor.u32 %v513, %v516
      %v518 = vrot.slane %v517, 4
      %v520 = vshll.u32 %v160, 16
      %v522 = vrot.slane %v520, 5
      %v523 = vsel %vm173, %v518, %v522
      %v524 = vshrl.u32 %v160, 16
      %v526 = vrot.slane %v524, 4
      %v527 = vor.u32 %v526, %v522
      %v528 = vrot.slane %v527, 4
      %v530 = vshll.u32 %v161, 16
      %v532 = vrot.slane %v530, 5
      %v533 = vsel %vm173, %v528, %v532
      %v535 = vshrl.u32 %v162, 16
      %v537 = vrot.slane %v535, 4
      %v538 = vshll.u32 %v162, 16
      %v540 = vrot.slane %v538, 5
      %v541 = vor.u32 %v537, %v540
      %v542 = vrot.slane %v541, 4
      %v544 = vshll.u32 %v163, 16
      %v546 = vrot.slane %v544, 5
      %v547 = vsel %vm173, %v542, %v546
      %v548 = vshrl.u32 %v163, 16
      %v550 = vrot.slane %v548, 4
      %v551 = vor.u32 %v550, %v546
      %v552 = vrot.slane %v551, 4
      %v554 = vshll.u32 %v164, 16
      %v556 = vrot.slane %v554, 5
      %v557 = vsel %vm173, %v552, %v556
      %v590 = vmax.bf16 %v117, %v187
      %v591 = vmax.bf16 %v118, %v197
      %v592 = vmax.bf16 %v120, %v211
      %v593 = vmax.bf16 %v121, %v221
      %v594 = vmax.bf16 %v123, %v235
      %v595 = vmax.bf16 %v124, %v245
      %v596 = vmax.bf16 %v126, %v259
      %v597 = vmax.bf16 %v127, %v269
      %v598 = vmax.bf16 %v129, %v283
      %v599 = vmax.bf16 %v130, %v293
      %v600 = vmax.bf16 %v132, %v307
      %v601 = vmax.bf16 %v133, %v317
      %v602 = vmax.bf16 %v135, %v331
      %v603 = vmax.bf16 %v136, %v341
      %v604 = vmax.bf16 %v138, %v355
      %v605 = vmax.bf16 %v139, %v365
      %v606 = vmax.bf16 %v141, %v379
      %v607 = vmax.bf16 %v142, %v389
      %v608 = vmax.bf16 %v144, %v403
      %v609 = vmax.bf16 %v145, %v413
      %v610 = vmax.bf16 %v147, %v427
      %v611 = vmax.bf16 %v148, %v437
      %v612 = vmax.bf16 %v150, %v451
      %v613 = vmax.bf16 %v151, %v461
      %v614 = vmax.bf16 %v153, %v475
      %v615 = vmax.bf16 %v154, %v485
      %v616 = vmax.bf16 %v156, %v499
      %v617 = vmax.bf16 %v157, %v509
      %v618 = vmax.bf16 %v159, %v523
      %v619 = vmax.bf16 %v160, %v533
      %v620 = vmax.bf16 %v162, %v547
      %v621 = vmax.bf16 %v163, %v557
      %vm670 = vcmask 1042432
      %vm671 = vcmask 1046532
      %vm672 = vmor %vm670, %vm671
      %v673 = vrot.slane %v117, 5
      %v674 = vrot.slane %v673, 4
      %v675 = vrot.slane %v118, 5
      %v676 = vsel %vm672, %v674, %v675
      %v677 = vrot.slane %v675, 4
      %v678 = vrot.slane %v119, 5
      %v679 = vsel %vm672, %v677, %v678
      %v680 = vrot.slane %v120, 5
      %v681 = vrot.slane %v680, 4
      %v682 = vrot.slane %v121, 5
      %v683 = vsel %vm672, %v681, %v682
      %v684 = vrot.slane %v682, 4
      %v685 = vrot.slane %v122, 5
      %v686 = vsel %vm672, %v684, %v685
      %v687 = vrot.slane %v123, 5
      %v688 = vrot.slane %v687, 4
      %v689 = vrot.slane %v124, 5
      %v690 = vsel %vm672, %v688, %v689
      %v691 = vrot.slane %v689, 4
      %v692 = vrot.slane %v125, 5
      %v693 = vsel %vm672, %v691, %v692
      %v694 = vrot.slane %v126, 5
      %v695 = vrot.slane %v694, 4
      %v696 = vrot.slane %v127, 5
      %v697 = vsel %vm672, %v695, %v696
      %v698 = vrot.slane %v696, 4
      %v699 = vrot.slane %v128, 5
      %v700 = vsel %vm672, %v698, %v699
      %v701 = vrot.slane %v129, 5
      %v702 = vrot.slane %v701, 4
      %v703 = vrot.slane %v130, 5
      %v704 = vsel %vm672, %v702, %v703
      %v705 = vrot.slane %v703, 4
      %v706 = vrot.slane %v131, 5
      %v707 = vsel %vm672, %v705, %v706
      %v708 = vrot.slane %v132, 5
      %v709 = vrot.slane %v708, 4
      %v710 = vrot.slane %v133, 5
      %v711 = vsel %vm672, %v709, %v710
      %v712 = vrot.slane %v710, 4
      %v713 = vrot.slane %v134, 5
      %v714 = vsel %vm672, %v712, %v713
      %v715 = vrot.slane %v135, 5
      %v716 = vrot.slane %v715, 4
      %v717 = vrot.slane %v136, 5
      %v718 = vsel %vm672, %v716, %v717
      %v719 = vrot.slane %v717, 4
      %v720 = vrot.slane %v137, 5
      %v721 = vsel %vm672, %v719, %v720
      %v722 = vrot.slane %v138, 5
      %v723 = vrot.slane %v722, 4
      %v724 = vrot.slane %v139, 5
      %v725 = vsel %vm672, %v723, %v724
      %v726 = vrot.slane %v724, 4
      %v727 = vrot.slane %v140, 5
      %v728 = vsel %vm672, %v726, %v727
      %v729 = vrot.slane %v141, 5
      %v730 = vrot.slane %v729, 4
      %v731 = vrot.slane %v142, 5
      %v732 = vsel %vm672, %v730, %v731
      %v733 = vrot.slane %v731, 4
      %v734 = vrot.slane %v143, 5
      %v735 = vsel %vm672, %v733, %v734
      %v736 = vrot.slane %v144, 5
      %v737 = vrot.slane %v736, 4
      %v738 = vrot.slane %v145, 5
      %v739 = vsel %vm672, %v737, %v738
      %v740 = vrot.slane %v738, 4
      %v741 = vrot.slane %v146, 5
      %v742 = vsel %vm672, %v740, %v741
      %v743 = vrot.slane %v147, 5
      %v744 = vrot.slane %v743, 4
      %v745 = vrot.slane %v148, 5
      %v746 = vsel %vm672, %v744, %v745
      %v747 = vrot.slane %v745, 4
      %v748 = vrot.slane %v149, 5
      %v749 = vsel %vm672, %v747, %v748
      %v750 = vrot.slane %v150, 5
      %v751 = vrot.slane %v750, 4
      %v752 = vrot.slane %v151, 5
      %v753 = vsel %vm672, %v751, %v752
      %v754 = vrot.slane %v752, 4
      %v755 = vrot.slane %v152, 5
      %v756 = vsel %vm672, %v754, %v755
      %v757 = vrot.slane %v153, 5
      %v758 = vrot.slane %v757, 4
      %v759 = vrot.slane %v154, 5
      %v760 = vsel %vm672, %v758, %v759
      %v761 = vrot.slane %v759, 4
      %v762 = vrot.slane %v155, 5
      %v763 = vsel %vm672, %v761, %v762
      %v764 = vrot.slane %v156, 5
      %v765 = vrot.slane %v764, 4
      %v766 = vrot.slane %v157, 5
      %v767 = vsel %vm672, %v765, %v766
      %v768 = vrot.slane %v766, 4
      %v769 = vrot.slane %v158, 5
      %v770 = vsel %vm672, %v768, %v769
      %v771 = vrot.slane %v159, 5
      %v772 = vrot.slane %v771, 4
      %v773 = vrot.slane %v160, 5
      %v774 = vsel %vm672, %v772, %v773
      %v775 = vrot.slane %v773, 4
      %v776 = vrot.slane %v161, 5
      %v777 = vsel %vm672, %v775, %v776
      %v778 = vrot.slane %v162, 5
      %v779 = vrot.slane %v778, 4
      %v780 = vrot.slane %v163, 5
      %v781 = vsel %vm672, %v779, %v780
      %v782 = vrot.slane %v780, 4
      %v783 = vrot.slane %v164, 5
      %v784 = vsel %vm672, %v782, %v783
      %v817 = vmax.bf16 %v590, %v676
      %v818 = vmax.bf16 %v591, %v679
      %v819 = vmax.bf16 %v592, %v683
      %v820 = vmax.bf16 %v593, %v686
      %v821 = vmax.bf16 %v594, %v690
      %v822 = vmax.bf16 %v595, %v693
      %v823 = vmax.bf16 %v596, %v697
      %v824 = vmax.bf16 %v597, %v700
      %v825 = vmax.bf16 %v598, %v704
      %v826 = vmax.bf16 %v599, %v707
      %v827 = vmax.bf16 %v600, %v711
      %v828 = vmax.bf16 %v601, %v714
      %v829 = vmax.bf16 %v602, %v718
      %v830 = vmax.bf16 %v603, %v721
      %v831 = vmax.bf16 %v604, %v725
      %v832 = vmax.bf16 %v605, %v728
      %v833 = vmax.bf16 %v606, %v732
      %v834 = vmax.bf16 %v607, %v735
      %v835 = vmax.bf16 %v608, %v739
      %v836 = vmax.bf16 %v609, %v742
      %v837 = vmax.bf16 %v610, %v746
      %v838 = vmax.bf16 %v611, %v749
      %v839 = vmax.bf16 %v612, %v753
      %v840 = vmax.bf16 %v613, %v756
      %v841 = vmax.bf16 %v614, %v760
      %v842 = vmax.bf16 %v615, %v763
      %v843 = vmax.bf16 %v616, %v767
      %v844 = vmax.bf16 %v617, %v770
      %v845 = vmax.bf16 %v618, %v774
      %v846 = vmax.bf16 %v619, %v777
      %v847 = vmax.bf16 %v620, %v781
      %v848 = vmax.bf16 %v621, %v784
      %v849 = vmax.bf16 %v817, %v120
      %v850 = vmax.bf16 %v818, %v121
      %v851 = vmax.bf16 %v819, %v123
      %v852 = vmax.bf16 %v820, %v124
      %v853 = vmax.bf16 %v821, %v126
      %v854 = vmax.bf16 %v822, %v127
      %v855 = vmax.bf16 %v823, %v129
      %v856 = vmax.bf16 %v824, %v130
      %v857 = vmax.bf16 %v825, %v132
      %v858 = vmax.bf16 %v826, %v133
      %v859 = vmax.bf16 %v827, %v135
      %v860 = vmax.bf16 %v828, %v136
      %v861 = vmax.bf16 %v829, %v138
      %v862 = vmax.bf16 %v830, %v139
      %v863 = vmax.bf16 %v831, %v141
      %v864 = vmax.bf16 %v832, %v142
      %v865 = vmax.bf16 %v833, %v144
      %v866 = vmax.bf16 %v834, %v145
      %v867 = vmax.bf16 %v835, %v147
      %v868 = vmax.bf16 %v836, %v148
      %v869 = vmax.bf16 %v837, %v150
      %v870 = vmax.bf16 %v838, %v151
      %v871 = vmax.bf16 %v839, %v153
      %v872 = vmax.bf16 %v840, %v154
      %v873 = vmax.bf16 %v841, %v156
      %v874 = vmax.bf16 %v842, %v157
      %v875 = vmax.bf16 %v843, %v159
      %v876 = vmax.bf16 %v844, %v160
      %v877 = vmax.bf16 %v845, %v162
      %v878 = vmax.bf16 %v846, %v163
      %v879 = vmax.bf16 %v847, %v165
      %v880 = vmax.bf16 %v848, %v166
      %v882 = vshrl.u32 %v165, 16
      %v884 = vrot.slane %v882, 4
      %v885 = vshll.u32 %v165, 16
      %v887 = vrot.slane %v885, 5
      %v888 = vor.u32 %v884, %v887
      %v889 = vrot.slane %v888, 4
      %v891 = vshll.u32 %v166, 16
      %v893 = vrot.slane %v891, 5
      %v894 = vsel %vm173, %v889, %v893
      %v895 = vshrl.u32 %v166, 16
      %v897 = vrot.slane %v895, 4
      %v898 = vor.u32 %v897, %v893
      %v899 = vrot.slane %v898, 4
      %v901 = vshll.u32 %v167, 16
      %v903 = vrot.slane %v901, 5
      %v904 = vsel %vm173, %v899, %v903
      %v907 = vmax.bf16 %v849, %v211
      %v908 = vmax.bf16 %v850, %v221
      %v909 = vmax.bf16 %v851, %v235
      %v910 = vmax.bf16 %v852, %v245
      %v911 = vmax.bf16 %v853, %v259
      %v912 = vmax.bf16 %v854, %v269
      %v913 = vmax.bf16 %v855, %v283
      %v914 = vmax.bf16 %v856, %v293
      %v915 = vmax.bf16 %v857, %v307
      %v916 = vmax.bf16 %v858, %v317
      %v917 = vmax.bf16 %v859, %v331
      %v918 = vmax.bf16 %v860, %v341
      %v919 = vmax.bf16 %v861, %v355
      %v920 = vmax.bf16 %v862, %v365
      %v921 = vmax.bf16 %v863, %v379
      %v922 = vmax.bf16 %v864, %v389
      %v923 = vmax.bf16 %v865, %v403
      %v924 = vmax.bf16 %v866, %v413
      %v925 = vmax.bf16 %v867, %v427
      %v926 = vmax.bf16 %v868, %v437
      %v927 = vmax.bf16 %v869, %v451
      %v928 = vmax.bf16 %v870, %v461
      %v929 = vmax.bf16 %v871, %v475
      %v930 = vmax.bf16 %v872, %v485
      %v931 = vmax.bf16 %v873, %v499
      %v932 = vmax.bf16 %v874, %v509
      %v933 = vmax.bf16 %v875, %v523
      %v934 = vmax.bf16 %v876, %v533
      %v935 = vmax.bf16 %v877, %v547
      %v936 = vmax.bf16 %v878, %v557
      %v937 = vmax.bf16 %v879, %v894
      %v938 = vmax.bf16 %v880, %v904
      %v942 = vrot.slane %v165, 5
      %v943 = vrot.slane %v942, 4
      %v944 = vrot.slane %v166, 5
      %v945 = vsel %vm672, %v943, %v944
      %v946 = vrot.slane %v944, 4
      %v947 = vrot.slane %v167, 5
      %v948 = vsel %vm672, %v946, %v947
      %v951 = vmax.bf16 %v907, %v683
      %v952 = vmax.bf16 %v908, %v686
      %v953 = vmax.bf16 %v909, %v690
      %v954 = vmax.bf16 %v910, %v693
      %v955 = vmax.bf16 %v911, %v697
      %v956 = vmax.bf16 %v912, %v700
      %v957 = vmax.bf16 %v913, %v704
      %v958 = vmax.bf16 %v914, %v707
      %v959 = vmax.bf16 %v915, %v711
      %v960 = vmax.bf16 %v916, %v714
      %v961 = vmax.bf16 %v917, %v718
      %v962 = vmax.bf16 %v918, %v721
      %v963 = vmax.bf16 %v919, %v725
      %v964 = vmax.bf16 %v920, %v728
      %v965 = vmax.bf16 %v921, %v732
      %v966 = vmax.bf16 %v922, %v735
      %v967 = vmax.bf16 %v923, %v739
      %v968 = vmax.bf16 %v924, %v742
      %v969 = vmax.bf16 %v925, %v746
      %v970 = vmax.bf16 %v926, %v749
      %v971 = vmax.bf16 %v927, %v753
      %v972 = vmax.bf16 %v928, %v756
      %v973 = vmax.bf16 %v929, %v760
      %v974 = vmax.bf16 %v930, %v763
      %v975 = vmax.bf16 %v931, %v767
      %v976 = vmax.bf16 %v932, %v770
      %v977 = vmax.bf16 %v933, %v774
      %v978 = vmax.bf16 %v934, %v777
      %v979 = vmax.bf16 %v935, %v781
      %v980 = vmax.bf16 %v936, %v784
      %v981 = vmax.bf16 %v937, %v945
      %v982 = vmax.bf16 %v938, %v948
      %v983 = vmax.bf16 %v951, %v123
      %v984 = vmax.bf16 %v952, %v124
      %v985 = vmax.bf16 %v953, %v126
      %v986 = vmax.bf16 %v954, %v127
      %v987 = vmax.bf16 %v955, %v129
      %v988 = vmax.bf16 %v956, %v130
      %v989 = vmax.bf16 %v957, %v132
      %v990 = vmax.bf16 %v958, %v133
      %v991 = vmax.bf16 %v959, %v135
      %v992 = vmax.bf16 %v960, %v136
      %v993 = vmax.bf16 %v961, %v138
      %v994 = vmax.bf16 %v962, %v139
      %v995 = vmax.bf16 %v963, %v141
      %v996 = vmax.bf16 %v964, %v142
      %v997 = vmax.bf16 %v965, %v144
      %v998 = vmax.bf16 %v966, %v145
      %v999 = vmax.bf16 %v967, %v147
      %v1000 = vmax.bf16 %v968, %v148
      %v1001 = vmax.bf16 %v969, %v150
      %v1002 = vmax.bf16 %v970, %v151
      %v1003 = vmax.bf16 %v971, %v153
      %v1004 = vmax.bf16 %v972, %v154
      %v1005 = vmax.bf16 %v973, %v156
      %v1006 = vmax.bf16 %v974, %v157
      %v1007 = vmax.bf16 %v975, %v159
      %v1008 = vmax.bf16 %v976, %v160
      %v1009 = vmax.bf16 %v977, %v162
      %v1010 = vmax.bf16 %v978, %v163
      %v1011 = vmax.bf16 %v979, %v165
      %v1012 = vmax.bf16 %v980, %v166
      %v1013 = vmax.bf16 %v981, %v168
      %v1014 = vmax.bf16 %v982, %v169
      %v1016 = vshrl.u32 %v168, 16
      %v1018 = vrot.slane %v1016, 4
      %v1019 = vshll.u32 %v168, 16
      %v1021 = vrot.slane %v1019, 5
      %v1022 = vor.u32 %v1018, %v1021
      %v1023 = vrot.slane %v1022, 4
      %v1025 = vshll.u32 %v169, 16
      %v1027 = vrot.slane %v1025, 5
      %v1028 = vsel %vm173, %v1023, %v1027
      %v1029 = vshrl.u32 %v169, 16
      %v1031 = vrot.slane %v1029, 4
      %v1032 = vor.u32 %v1031, %v1027
      %v1033 = vrot.slane %v1032, 4
      %v1035 = vshll.u32 %v170, 16
      %v1037 = vrot.slane %v1035, 5
      %v1038 = vsel %vm173, %v1033, %v1037
      %v1041 = vmax.bf16 %v983, %v235
      %v1042 = vmax.bf16 %v984, %v245
      %v1043 = vmax.bf16 %v985, %v259
      %v1044 = vmax.bf16 %v986, %v269
      %v1045 = vmax.bf16 %v987, %v283
      %v1046 = vmax.bf16 %v988, %v293
      %v1047 = vmax.bf16 %v989, %v307
      %v1048 = vmax.bf16 %v990, %v317
      %v1049 = vmax.bf16 %v991, %v331
      %v1050 = vmax.bf16 %v992, %v341
      %v1051 = vmax.bf16 %v993, %v355
      %v1052 = vmax.bf16 %v994, %v365
      %v1053 = vmax.bf16 %v995, %v379
      %v1054 = vmax.bf16 %v996, %v389
      %v1055 = vmax.bf16 %v997, %v403
      %v1056 = vmax.bf16 %v998, %v413
      %v1057 = vmax.bf16 %v999, %v427
      %v1058 = vmax.bf16 %v1000, %v437
      %v1059 = vmax.bf16 %v1001, %v451
      %v1060 = vmax.bf16 %v1002, %v461
      %v1061 = vmax.bf16 %v1003, %v475
      %v1062 = vmax.bf16 %v1004, %v485
      %v1063 = vmax.bf16 %v1005, %v499
      %v1064 = vmax.bf16 %v1006, %v509
      %v1065 = vmax.bf16 %v1007, %v523
      %v1066 = vmax.bf16 %v1008, %v533
      %v1067 = vmax.bf16 %v1009, %v547
      %v1068 = vmax.bf16 %v1010, %v557
      %v1069 = vmax.bf16 %v1011, %v894
      %v1070 = vmax.bf16 %v1012, %v904
      %v1071 = vmax.bf16 %v1013, %v1028
      %v1072 = vmax.bf16 %v1014, %v1038
      %v1076 = vrot.slane %v168, 5
      %v1077 = vrot.slane %v1076, 4
      %v1078 = vrot.slane %v169, 5
      %v1079 = vsel %vm672, %v1077, %v1078
      %v1080 = vrot.slane %v1078, 4
      %v1081 = vrot.slane %v170, 5
      %v1082 = vsel %vm672, %v1080, %v1081
      %v1085 = vmax.bf16 %v1041, %v690
      %v1086 = vmax.bf16 %v1042, %v693
      %v1087 = vmax.bf16 %v1043, %v697
      %v1088 = vmax.bf16 %v1044, %v700
      %v1089 = vmax.bf16 %v1045, %v704
      %v1090 = vmax.bf16 %v1046, %v707
      %v1091 = vmax.bf16 %v1047, %v711
      %v1092 = vmax.bf16 %v1048, %v714
      %v1093 = vmax.bf16 %v1049, %v718
      %v1094 = vmax.bf16 %v1050, %v721
      %v1095 = vmax.bf16 %v1051, %v725
      %v1096 = vmax.bf16 %v1052, %v728
      %v1097 = vmax.bf16 %v1053, %v732
      %v1098 = vmax.bf16 %v1054, %v735
      %v1099 = vmax.bf16 %v1055, %v739
      %v1100 = vmax.bf16 %v1056, %v742
      %v1101 = vmax.bf16 %v1057, %v746
      %v1102 = vmax.bf16 %v1058, %v749
      %v1103 = vmax.bf16 %v1059, %v753
      %v1104 = vmax.bf16 %v1060, %v756
      %v1105 = vmax.bf16 %v1061, %v760
      %v1106 = vmax.bf16 %v1062, %v763
      %v1107 = vmax.bf16 %v1063, %v767
      %v1108 = vmax.bf16 %v1064, %v770
      %v1109 = vmax.bf16 %v1065, %v774
      %v1110 = vmax.bf16 %v1066, %v777
      %v1111 = vmax.bf16 %v1067, %v781
      %v1112 = vmax.bf16 %v1068, %v784
      %v1113 = vmax.bf16 %v1069, %v945
      %v1114 = vmax.bf16 %v1070, %v948
      %v1115 = vmax.bf16 %v1071, %v1079
      %v1116 = vmax.bf16 %v1072, %v1082
      %v1117 = vunpack.c.l.bf16 %v1085
      %v1118 = vunpack.c.l.bf16 %v1086
      %v1119 = vunpack.c.l.bf16 %v1087
      %v1120 = vunpack.c.l.bf16 %v1088
      %v1121 = vunpack.c.l.bf16 %v1089
      %v1122 = vunpack.c.l.bf16 %v1090
      %v1123 = vunpack.c.l.bf16 %v1091
      %v1124 = vunpack.c.l.bf16 %v1092
      %v1125 = vunpack.c.l.bf16 %v1093
      %v1126 = vunpack.c.l.bf16 %v1094
      %v1127 = vunpack.c.l.bf16 %v1095
      %v1128 = vunpack.c.l.bf16 %v1096
      %v1129 = vunpack.c.l.bf16 %v1097
      %v1130 = vunpack.c.l.bf16 %v1098
      %v1131 = vunpack.c.l.bf16 %v1099
      %v1132 = vunpack.c.l.bf16 %v1100
      %v1133 = vunpack.c.l.bf16 %v1101
      %v1134 = vunpack.c.l.bf16 %v1102
      %v1135 = vunpack.c.l.bf16 %v1103
      %v1136 = vunpack.c.l.bf16 %v1104
      %v1137 = vunpack.c.l.bf16 %v1105
      %v1138 = vunpack.c.l.bf16 %v1106
      %v1139 = vunpack.c.l.bf16 %v1107
      %v1140 = vunpack.c.l.bf16 %v1108
      %v1141 = vunpack.c.l.bf16 %v1109
      %v1142 = vunpack.c.l.bf16 %v1110
      %v1143 = vunpack.c.l.bf16 %v1111
      %v1144 = vunpack.c.l.bf16 %v1112
      %v1145 = vunpack.c.l.bf16 %v1113
      %v1146 = vunpack.c.l.bf16 %v1114
      %v1147 = vunpack.c.l.bf16 %v1115
      %v1148 = vunpack.c.l.bf16 %v1116
      %vm1149 = vcmask 523264
      %1150 = vst.msk [vmem:[%s116] sm:$0xff] %vm1149, %v1117
      %1151 = vst.msk [vmem:[%s116 + $0x8] sm:$0xff] %vm1149, %v1118
      %1152 = vst.msk [vmem:[%s116 + $0x10] sm:$0xff] %vm1149, %v1119
      %1153 = vst.msk [vmem:[%s116 + $0x18] sm:$0xff] %vm1149, %v1120
      %1154 = vst.msk [vmem:[%s116 + $0x20] sm:$0xff] %vm1149, %v1121
      %1155 = vst.msk [vmem:[%s116 + $0x28] sm:$0xff] %vm1149, %v1122
      %1156 = vst.msk [vmem:[%s116 + $0x30] sm:$0xff] %vm1149, %v1123
      %1157 = vst.msk [vmem:[%s116 + $0x38] sm:$0xff] %vm1149, %v1124
      %1158 = vst.msk [vmem:[%s116 + $0x40] sm:$0xff] %vm1149, %v1125
      %1159 = vst.msk [vmem:[%s116 + $0x48] sm:$0xff] %vm1149, %v1126
      %1160 = vst.msk [vmem:[%s116 + $0x50] sm:$0xff] %vm1149, %v1127
      %1161 = vst.msk [vmem:[%s116 + $0x58] sm:$0xff] %vm1149, %v1128
      %1162 = vst.msk [vmem:[%s116 + $0x60] sm:$0xff] %vm1149, %v1129
      %1163 = vst.msk [vmem:[%s116 + $0x68] sm:$0xff] %vm1149, %v1130
      %1164 = vst.msk [vmem:[%s116 + $0x70] sm:$0xff] %vm1149, %v1131
      %1165 = vst.msk [vmem:[%s116 + $0x78] sm:$0xff] %vm1149, %v1132
      %1166 = vst.msk [vmem:[%s116 + $0x80] sm:$0xff] %vm1149, %v1133
      %1167 = vst.msk [vmem:[%s116 + $0x88] sm:$0xff] %vm1149, %v1134
      %1168 = vst.msk [vmem:[%s116 + $0x90] sm:$0xff] %vm1149, %v1135
      %1169 = vst.msk [vmem:[%s116 + $0x98] sm:$0xff] %vm1149, %v1136
      %1170 = vst.msk [vmem:[%s116 + $0xa0] sm:$0xff] %vm1149, %v1137
      %1171 = vst.msk [vmem:[%s116 + $0xa8] sm:$0xff] %vm1149, %v1138
      %1172 = vst.msk [vmem:[%s116 + $0xb0] sm:$0xff] %vm1149, %v1139
      %1173 = vst.msk [vmem:[%s116 + $0xb8] sm:$0xff] %vm1149, %v1140
      %1174 = vst.msk [vmem:[%s116 + $0xc0] sm:$0xff] %vm1149, %v1141
      %1175 = vst.msk [vmem:[%s116 + $0xc8] sm:$0xff] %vm1149, %v1142
      %1176 = vst.msk [vmem:[%s116 + $0xd0] sm:$0xff] %vm1149, %v1143
      %1177 = vst.msk [vmem:[%s116 + $0xd8] sm:$0xff] %vm1149, %v1144
      %1178 = vst.msk [vmem:[%s116 + $0xe0] sm:$0xff] %vm1149, %v1145
      %1179 = vst.msk [vmem:[%s116 + $0xe8] sm:$0xff] %vm1149, %v1146
      %1180 = vst.msk [vmem:[%s116 + $0xf0] sm:$0xff] %vm1149, %v1147
      %1181 = vst.msk [vmem:[%s116 + $0xf8] sm:$0xff] %vm1149, %v1148
      %p1182 = scmp.lt.s32.totalorder %s12, 1
      %s1183 = scalar_select %p1182, %s12, 1
      %s1184 = smul.addr %s1183, 32
      %s1185 = smul.addr %s1184, 8
      %s1186 = scalar_lea.vmem %s1, %s1185
      // Predicated region
      $region25: #{resnet50vd_small_forward.7} parent=23 // pred_check
        %p1187 = pneg %p56
      $region26: #{resnet50vd_small_forward.7} parent=23 // pred_check_branch
        %1189 = sbr.rel (%p1187) target = $region28
      $region27: #{resnet50vd_small_forward.7} parent=23 // pred_region
        _
      $region28: #{resnet50vd_small_forward.7} parent=23 // pred_fallthru
        _
    $region24: #{resnet50vd_small_forward.7} parent=5 // pred_fallthru
      _
    %p1190 = scmp.le.s32.totalorder 2, %s7
    // Predicated region
    $region29: #{resnet50vd_small_forward.7} parent=5 // pred_check
      %p1191 = pneg %p1190
    $region30: #{resnet50vd_small_forward.7} parent=5 // pred_check_branch
      %1193 = sbr.rel (%p1191) target = $region32
    $region31: #{resnet50vd_small_forward.7} parent=5 // pred_region
      %s1194 = ssub.s32 %s7, 2
      // Predicated region
      $region33: #{resnet50vd_small_forward.7} parent=31 // pred_check
        %p1195 = pneg %p62
      $region34: #{resnet50vd_small_forward.7} parent=31 // pred_check_branch
        %1197 = sbr.rel (%p1195) target = $region36
      $region35: #{resnet50vd_small_forward.7} parent=31 // pred_region
        %p1198 = scmp.lt.s32.totalorder %s13, 1
        %s1199 = scalar_select %p1198, %s13, 1
        %s1200 = smul.addr %s1199, 32
        %s1201 = smul.addr %s1200, 8
        %s1202 = scalar_lea.vmem %s1, %s1201
      $region36: #{resnet50vd_small_forward.7} parent=31 // pred_fallthru
        _
    $region32: #{resnet50vd_small_forward.7} parent=5 // pred_fallthru
      _
  $region6: #{resnet50vd_small_forward.7} parent=0 // loop_footer
    %s11 = sadd.s32 1, %s7
  $region7: #{resnet50vd_small_forward.7} parent=0 // loop_footer_branch
    %6 = sbr.rel target = $region3
  $region8: #{resnet50vd_small_forward.7} parent=0 // loop_exit
    _

</llo_original>
